<compile_context>
chip_gen: v5e
topology: v5e:2x2
jax: 0.10.0
libtpu: 0.0.40
codegen_flags: <defaults>
</compile_context>

<pallas_src>
import numpy as np
import jax
import jax.numpy as jnp
from jax import lax
from jax.experimental import pallas as pl
from jax.experimental.pallas import tpu as pltpu


# ----------------------------------------------------------------------------
# Pallas kernel
# ----------------------------------------------------------------------------
def make_inception_kernel(H, W, C_in, C_hid, C_out, n_br, groups, K_max, n_img):
    WCh = W * C_hid
    Cot = n_br * C_out
    WCot = W * Cot
    P = K_max // 2
    Hp = H + 16                     # per-image padded slab (8-row halos, aligned)
    eps = 1e-5
    assert P <= 8, "8-row halo assumes kernel size <= 17"
    assert H % 8 == 0

    def kernel(x_ref, w1_ref, b1_ref, wk_ref, bk_ref, m3_ref,
               gamma_ref, beta_ref, s_ref, out_ref, i2r_ref):
        # ---- conv1 (1x1): block-diagonal matmul, bf16 operands, f32 accumulate ----
        h = jnp.dot(x_ref[...].astype(jnp.bfloat16), w1_ref[...],
                    preferred_element_type=jnp.float32) + b1_ref[...]

        # ---- aligned im2row over the H taps (per image, halo'd with zeros) --------
        # Sublane rolls (XLU) + aligned (16,128) bf16 stores; no unaligned slices.
        zpad = jnp.zeros((8, WCh), jnp.float32)
        for i in range(n_img):
            hp = jnp.concatenate([zpad, h[i * H:(i + 1) * H, :], zpad], axis=0)
            for kh in range(K_max):
                slab = pltpu.roll(hp, shift=(P - kh) % Hp, axis=0)[8:8 + H, :]
                i2r_ref[i * H:(i + 1) * H, kh * WCh:(kh + 1) * WCh] = (
                    slab.astype(jnp.bfloat16))

        # ---- all branches x all taps: ONE wide bf16 matmul (K = K_max*W*C_hid) ----
        acc = jnp.dot(i2r_ref[...], wk_ref[...],
                      preferred_element_type=jnp.float32) + bk_ref[...]

        # ---- GroupNorm (per image) + LeakyReLU(0.2), all branches at once ---------
        # H-reduction first, then one fused membership+broadcast matmul per stat.
        gamma = gamma_ref[...]
        beta = beta_ref[...]
        z_blocks = []
        for i in range(n_img):
            a = acc[i * H:(i + 1) * H, :]                       # (H, W*Cot), aligned
            rsum = jnp.sum(a, axis=0, keepdims=True)            # (1, W*Cot)
            mean = jnp.dot(rsum, m3_ref[...],
                           preferred_element_type=jnp.float32)  # group mean per lane
            cen = a - mean                                      # two-pass variance
            ssum = jnp.sum(cen * cen, axis=0, keepdims=True)
            var = jnp.dot(ssum, m3_ref[...],
                          preferred_element_type=jnp.float32)
            zi = cen * lax.rsqrt(var + eps)
            zi = zi * gamma + beta
            z_blocks.append(jnp.where(zi >= 0, zi, 0.2 * zi))
        z = jnp.concatenate(z_blocks, axis=0) if n_img > 1 else z_blocks[0]

        # ---- sum over branches (0/1 matmul) -> lane-dense (M, W*C_out) slab --------
        y = jnp.dot(z, s_ref[...], preferred_element_type=jnp.float32)
        out_ref[...] = y.astype(out_ref.dtype)

    return kernel


# ----------------------------------------------------------------------------
# Host-side weight packing for the (rows, W*C) layout
# ----------------------------------------------------------------------------
def pack_params(params, kers, groups, H, W):
    w1 = np.asarray(params['w1'])                       # (C_in, C_hid)
    b1 = np.asarray(params['b1']).reshape(-1)           # (C_hid,)
    C_in, C_hid = w1.shape
    branches = params['branches']
    n_br = len(branches)
    C_out = int(np.asarray(branches[0][0]).shape[-1])
    Cot = n_br * C_out
    K_max = max(kers)
    P = K_max // 2
    cpg = C_out // groups
    WCh = W * C_hid
    WCot = W * Cot

    # block-diagonal 1x1-conv weight: (W*C_in, W*C_hid)
    w1big = np.zeros((W * C_in, WCh), np.float32)
    for j in range(W):
        w1big[j * C_in:(j + 1) * C_in, j * C_hid:(j + 1) * C_hid] = w1
    b1_lane = np.tile(b1, W)[None, :]

    # merged W-banded, H-tap-stacked conv weight: (K_max*W*C_hid, W*Cot)
    bigw = np.zeros((K_max, WCh, WCot), np.float32)
    bias = np.zeros(Cot, np.float32)
    gamma = np.zeros(Cot, np.float32)
    beta = np.zeros(Cot, np.float32)
    for b, (wd, bk, gk, bek) in enumerate(branches):
        wd = np.asarray(wd)                              # (k, k, C_hid, C_out) HWIO
        k = wd.shape[0]
        pad = (K_max - k) // 2
        wpad = np.zeros((K_max, K_max, C_hid, C_out), np.float32)
        wpad[pad:pad + k, pad:pad + k] = wd              # center into the K_max frame
        bias[b * C_out:(b + 1) * C_out] = np.asarray(bk).reshape(-1)
        gamma[b * C_out:(b + 1) * C_out] = np.asarray(gk).reshape(-1)
        beta[b * C_out:(b + 1) * C_out] = np.asarray(bek).reshape(-1)
        for j in range(W):                               # fold W 'same' padding in
            for kw in range(K_max):
                jin = j + kw - P
                if 0 <= jin < W:
                    bigw[:, jin * C_hid:(jin + 1) * C_hid,
                         j * Cot + b * C_out:j * Cot + (b + 1) * C_out] = wpad[:, kw]
    bigw = bigw.reshape(K_max * WCh, WCot)
    bias_lane = np.tile(bias, W)[None, :]
    gamma_lane = np.tile(gamma, W)[None, :]
    beta_lane = np.tile(beta, W)[None, :]

    # fused GroupNorm membership + broadcast matrix (scaled by 1/count):
    # (rowsum @ M3)[lane] = mean of that lane's (branch, group)
    gid = np.array([(bo // C_out) * groups + (bo % C_out) // cpg for bo in range(Cot)])
    lane_g = np.tile(gid, W)                             # (W*Cot,)
    inv_cnt = 1.0 / float(H * W * cpg)
    M3 = (lane_g[:, None] == lane_g[None, :]).astype(np.float32) * inv_cnt

    # branch-sum matrix: lane (j, branch, o) -> lane (j, o)
    S = np.zeros((WCot, W * C_out), np.float32)
    for l in range(WCot):
        j = l // Cot
        o = (l % Cot) % C_out
        S[l, j * C_out + o] = 1.0

    return dict(
        w1big=jnp.asarray(w1big, jnp.bfloat16),     # bf16 conv-matmul operands
        bigw=jnp.asarray(bigw, jnp.bfloat16),
        b1_lane=jnp.asarray(b1_lane, jnp.float32),
        bias_lane=jnp.asarray(bias_lane, jnp.float32),
        M3=jnp.asarray(M3, jnp.float32),            # GN stats stay f32
        gamma_lane=jnp.asarray(gamma_lane, jnp.float32),
        beta_lane=jnp.asarray(beta_lane, jnp.float32),
        S=jnp.asarray(S, jnp.float32))


# ----------------------------------------------------------------------------
# Wrapper
# ----------------------------------------------------------------------------
def inception_forward(x_nhwc, params, *, kers, groups, images_per_step=None):
    N, H, W, C_in = x_nhwc.shape
    C_hid = params['w1'].shape[1]
    C_out = int(params['branches'][0][0].shape[-1])
    n_br = len(kers)
    Cot = n_br * C_out
    K_max = max(kers)
    WCi, WCh, WCo, WCot = W * C_in, W * C_hid, W * C_out, W * Cot

    if images_per_step is None:
        # Fold enough images into M to feed the MXU (target >=128 rows per step).
        # NOTE(v7x): pass images_per_step = N // 2 to keep a 2-step "parallel" grid
        # so both TensorCores get work.
        target = max(1, 128 // H)
        images_per_step = max(d for d in range(1, min(N, target) + 1) if N % d == 0)
    n_img = images_per_step
    assert N % n_img == 0
    Ms = n_img * H
    steps = N // n_img

    packed = pack_params(params, kers, groups, H, W)
    x2 = x_nhwc.reshape(N * H, WCi)               # lane-packed (rows, W*C_in)

    kernel = make_inception_kernel(H, W, C_in, C_hid, C_out, n_br, groups,
                                   K_max, n_img)

    # Constant index_maps -> Pallas does not re-DMA the weight/constant blocks
    # across grid steps (only the x / out row-slabs move per step).
    in_specs = [
        pl.BlockSpec((Ms, WCi), lambda n: (n, 0)),            # x rows (batch folded)
        pl.BlockSpec((WCi, WCh), lambda n: (0, 0)),           # w1 (block-diag, bf16)
        pl.BlockSpec((1, WCh), lambda n: (0, 0)),             # b1 lanes
        pl.BlockSpec((K_max * WCh, WCot), lambda n: (0, 0)),  # merged conv W (bf16)
        pl.BlockSpec((1, WCot), lambda n: (0, 0)),            # conv bias lanes
        pl.BlockSpec((WCot, WCot), lambda n: (0, 0)),         # GN membership (fused)
        pl.BlockSpec((1, WCot), lambda n: (0, 0)),            # gamma lanes
        pl.BlockSpec((1, WCot), lambda n: (0, 0)),            # beta lanes
        pl.BlockSpec((WCot, WCo), lambda n: (0, 0)),          # branch-sum
    ]
    out_spec = pl.BlockSpec((Ms, WCo), lambda n: (n, 0))      # lane-dense output

    out = pl.pallas_call(
        kernel,
        out_shape=jax.ShapeDtypeStruct((N * H, WCo), jnp.float32),
        grid_spec=pltpu.PrefetchScalarGridSpec(
            num_scalar_prefetch=0,
            grid=(steps,),
            in_specs=in_specs,
            out_specs=out_spec,
            scratch_shapes=[pltpu.VMEM((Ms, K_max * WCh), jnp.bfloat16)],  # im2row
        ),
        compiler_params=pltpu.CompilerParams(dimension_semantics=("parallel",)),
    )(x2, packed['w1big'], packed['b1_lane'], packed['bigw'], packed['bias_lane'],
      packed['M3'], packed['gamma_lane'], packed['beta_lane'], packed['S'])

    return out.reshape(N, H, W, C_out)


# ----------------------------------------------------------------------------
# Deterministic parameter construction (shapes per the PyTorch module __init__)
# ----------------------------------------------------------------------------
def init_params(key, C_in, C_hid, C_out, groups, kers):
    keys = jax.random.split(key, 2 + 4 * len(kers))
    w1 = jax.random.normal(keys[0], (C_in, C_hid), jnp.float32) * 0.5
    b1 = jax.random.normal(keys[1], (1, C_hid), jnp.float32) * 0.1

    in_pg = C_hid // groups
    out_pg = C_out // groups
    branches = []
    for bi, k in enumerate(kers):
        kw_, kb_, kg_, kbe_ = keys[2 + 4 * bi: 6 + 4 * bi]
        # PyTorch grouped-conv weight shape: (C_out, C_hid // groups, k, k)
        wg = jax.random.normal(kw_, (C_out, in_pg, k, k), jnp.float32) * (0.3 / k)
        bk = jax.random.normal(kb_, (1, C_out), jnp.float32) * 0.1
        gamma = 1.0 + 0.1 * jax.random.normal(kg_, (1, C_out), jnp.float32)
        beta = 0.1 * jax.random.normal(kbe_, (1, C_out), jnp.float32)
        # densify grouped weight into HWIO with block-diagonal group structure
        dense = jnp.zeros((k, k, C_hid, C_out), jnp.float32)
        for gi in range(groups):
            blk = wg[gi * out_pg:(gi + 1) * out_pg]           # (out_pg, in_pg, k, k)
            blk = jnp.transpose(blk, (2, 3, 1, 0))            # (k, k, in_pg, out_pg)
            dense = dense.at[:, :,
                             gi * in_pg:(gi + 1) * in_pg,
                             gi * out_pg:(gi + 1) * out_pg].set(blk)
        branches.append((dense, bk, gamma, beta))
    return {'w1': w1, 'b1': b1, 'branches': branches}


# ----------------------------------------------------------------------------
# Pure-JAX reference (for correctness check)
# ----------------------------------------------------------------------------
def ref_forward(x, params, groups, kers):
    h = jnp.einsum('nhwc,cd->nhwd', x, params['w1']) + params['b1'][0]
    y = 0.0
    for bi, k in enumerate(kers):
        wd, bk, gk, bek = params['branches'][bi]
        z = lax.conv_general_dilated(
            h, wd, window_strides=(1, 1),
            padding=[(k // 2, k // 2), (k // 2, k // 2)],
            dimension_numbers=('NHWC', 'HWIO', 'NHWC')) + bk[0]
        Nn, Hh, Ww, Cc = z.shape
        cpg = Cc // groups
        zg = z.reshape(Nn, Hh, Ww, groups, cpg)
        mean = zg.mean(axis=(1, 2, 4), keepdims=True)
        var = zg.var(axis=(1, 2, 4), keepdims=True)
        zn = (zg - mean) / jnp.sqrt(var + 1e-5)
        zn = zn.reshape(Nn, Hh, Ww, Cc) * gk[0] + bek[0]
        zn = jnp.where(zn >= 0, zn, 0.2 * zn)
        y = y + zn
    return y


if __name__ == "__main__":
    # Shapes consistent with Inception(C_in=4, C_hid=8, C_out=8, incep_ker=[3,5,7,11],
    # groups=8) on a (2, 4, 16, 16) NCHW input (handled here in NHWC layout).
    N, C_in, C_hid, C_out = 2, 4, 8, 8
    H = W = 16
    groups = 8
    kers = [3, 5, 7, 11]

    # GroupConv2d sets groups to 1 if C_hid % groups != 0 (here it stays 8)
    conv_groups = groups if C_hid % groups == 0 else 1

    key = jax.random.PRNGKey(0)
    kx, kp = jax.random.split(key)
    x = jax.random.normal(kx, (N, H, W, C_in), jnp.float32)   # NHWC representation
    params = init_params(kp, C_in, C_hid, C_out, conv_groups, kers)

    out = inception_forward(x, params, kers=kers, groups=conv_groups)
    out = jax.block_until_ready(out)
    assert out.shape == (N, H, W, C_out)

    ref = ref_forward(x, params, conv_groups, kers)
    # bf16 MXU operands for the conv matmuls (per perf review) -> ~1e-2 level error;
    # GroupNorm statistics and the branch sum are kept in f32.
    np.testing.assert_allclose(np.asarray(out), np.asarray(ref), rtol=2e-2, atol=2e-2)
    print("KERNEL_OK")
</pallas_src>

<mosaic_0001>
module attributes {stable_mosaic.version = 11 : i64} {
  func.func @kernel(%arg0: i32, %arg1: memref<32x64xf32, #tpu.memory_space<vmem>>, %arg2: memref<64x128xbf16, #tpu.memory_space<vmem>>, %arg3: memref<1x128xf32, #tpu.memory_space<vmem>>, %arg4: memref<1408x512xbf16, #tpu.memory_space<vmem>>, %arg5: memref<1x512xf32, #tpu.memory_space<vmem>>, %arg6: memref<512x512xf32, #tpu.memory_space<vmem>>, %arg7: memref<1x512xf32, #tpu.memory_space<vmem>>, %arg8: memref<1x512xf32, #tpu.memory_space<vmem>>, %arg9: memref<512x128xf32, #tpu.memory_space<vmem>>, %arg10: memref<32x128xf32, #tpu.memory_space<vmem>>, %arg11: memref<32x1408xbf16, #tpu.memory_space<vmem>>) attributes {dimension_semantics = [#tpu.dimension_semantics<parallel>], iteration_bounds = array<i64: 1>, scalar_prefetch = 0 : i64, scratch_operands = 1 : i64, tpu.core_type = #tpu.core_type<tc>, window_params = [{transform_indices = @transform_0, window_bounds = array<i64: 32, 64>}, {pipeline_mode = #tpu.pipeline_mode<synchronous>, transform_indices = @transform_1, window_bounds = array<i64: 64, 128>}, {pipeline_mode = #tpu.pipeline_mode<synchronous>, transform_indices = @transform_2, window_bounds = array<i64: 1, 128>}, {pipeline_mode = #tpu.pipeline_mode<synchronous>, transform_indices = @transform_3, window_bounds = array<i64: 1408, 512>}, {pipeline_mode = #tpu.pipeline_mode<synchronous>, transform_indices = @transform_4, window_bounds = array<i64: 1, 512>}, {pipeline_mode = #tpu.pipeline_mode<synchronous>, transform_indices = @transform_5, window_bounds = array<i64: 512, 512>}, {pipeline_mode = #tpu.pipeline_mode<synchronous>, transform_indices = @transform_6, window_bounds = array<i64: 1, 512>}, {pipeline_mode = #tpu.pipeline_mode<synchronous>, transform_indices = @transform_7, window_bounds = array<i64: 1, 512>}, {pipeline_mode = #tpu.pipeline_mode<synchronous>, transform_indices = @transform_8, window_bounds = array<i64: 512, 128>}, {transform_indices = @transform_9, window_bounds = array<i64: 32, 128>}]} {
    %c0 = arith.constant 0 : index
    %c0_0 = arith.constant 0 : index
    %0 = vector.load %arg1[%c0, %c0_0] : memref<32x64xf32, #tpu.memory_space<vmem>>, vector<32x64xf32>
    %1 = arith.truncf %0 : vector<32x64xf32> to vector<32x64xbf16>
    %c0_1 = arith.constant 0 : index
    %c0_2 = arith.constant 0 : index
    %2 = vector.load %arg2[%c0_1, %c0_2] : memref<64x128xbf16, #tpu.memory_space<vmem>>, vector<64x128xbf16>
    %cst = arith.constant dense<0.000000e+00> : vector<32x128xf32>
    %3 = tpu.matmul %1, %2, %cst {dimension_numbers = #tpu.dot_dimension_numbers<[1], [0], [0], [1], [0, 0, 1, 1], [], []>} : vector<32x64xbf16>, vector<64x128xbf16>, vector<32x128xf32> -> vector<32x128xf32>
    %c0_3 = arith.constant 0 : index
    %c0_4 = arith.constant 0 : index
    %4 = vector.load %arg3[%c0_3, %c0_4] : memref<1x128xf32, #tpu.memory_space<vmem>>, vector<1x128xf32>
    %5 = vector.broadcast %4 : vector<1x128xf32> to vector<32x128xf32>
    %6 = arith.addf %3, %5 : vector<32x128xf32>
    %cst_5 = arith.constant 0.000000e+00 : f32
    %7 = vector.broadcast %cst_5 : f32 to vector<8x128xf32>
    %8 = vector.extract_strided_slice %6 {offsets = [0, 0], sizes = [16, 128], strides = [1, 1]} : vector<32x128xf32> to vector<16x128xf32>
    %9 = tpu.concatenate %7, %8, %7 in 0 : vector<8x128xf32>, vector<16x128xf32>, vector<8x128xf32> -> vector<32x128xf32>
    %c5_i32 = arith.constant 5 : i32
    %10 = tpu.dynamic_rotate %9 by %c5_i32 dim 0 : vector<32x128xf32>, i32 -> vector<32x128xf32>
    %11 = vector.extract_strided_slice %10 {offsets = [8, 0], sizes = [16, 128], strides = [1, 1]} : vector<32x128xf32> to vector<16x128xf32>
    %12 = arith.truncf %11 : vector<16x128xf32> to vector<16x128xbf16>
    %c0_6 = arith.constant 0 : index
    %c0_7 = arith.constant 0 : index
    %13 = vector.load %arg11[%c0_6, %c0_7] : memref<32x1408xbf16, #tpu.memory_space<vmem>>, vector<16x128xbf16>
    tpu.vector_store %arg11[%c0_6, %c0_7], %12 {strides = array<i32>} : memref<32x1408xbf16, #tpu.memory_space<vmem>>, vector<16x128xbf16>,
    %c4_i32 = arith.constant 4 : i32
    %14 = tpu.dynamic_rotate %9 by %c4_i32 dim 0 : vector<32x128xf32>, i32 -> vector<32x128xf32>
    %15 = vector.extract_strided_slice %14 {offsets = [8, 0], sizes = [16, 128], strides = [1, 1]} : vector<32x128xf32> to vector<16x128xf32>
    %16 = arith.truncf %15 : vector<16x128xf32> to vector<16x128xbf16>
    %c0_8 = arith.constant 0 : index
    %c128 = arith.constant 128 : index
    %17 = vector.load %arg11[%c0_8, %c128] : memref<32x1408xbf16, #tpu.memory_space<vmem>>, vector<16x128xbf16>
    tpu.vector_store %arg11[%c0_8, %c128], %16 {strides = array<i32>} : memref<32x1408xbf16, #tpu.memory_space<vmem>>, vector<16x128xbf16>,
    %c3_i32 = arith.constant 3 : i32
    %18 = tpu.dynamic_rotate %9 by %c3_i32 dim 0 : vector<32x128xf32>, i32 -> vector<32x128xf32>
    %19 = vector.extract_strided_slice %18 {offsets = [8, 0], sizes = [16, 128], strides = [1, 1]} : vector<32x128xf32> to vector<16x128xf32>
    %20 = arith.truncf %19 : vector<16x128xf32> to vector<16x128xbf16>
    %c0_9 = arith.constant 0 : index
    %c256 = arith.constant 256 : index
    %21 = vector.load %arg11[%c0_9, %c256] : memref<32x1408xbf16, #tpu.memory_space<vmem>>, vector<16x128xbf16>
    tpu.vector_store %arg11[%c0_9, %c256], %20 {strides = array<i32>} : memref<32x1408xbf16, #tpu.memory_space<vmem>>, vector<16x128xbf16>,
    %c2_i32 = arith.constant 2 : i32
    %22 = tpu.dynamic_rotate %9 by %c2_i32 dim 0 : vector<32x128xf32>, i32 -> vector<32x128xf32>
    %23 = vector.extract_strided_slice %22 {offsets = [8, 0], sizes = [16, 128], strides = [1, 1]} : vector<32x128xf32> to vector<16x128xf32>
    %24 = arith.truncf %23 : vector<16x128xf32> to vector<16x128xbf16>
    %c0_10 = arith.constant 0 : index
    %c384 = arith.constant 384 : index
    %25 = vector.load %arg11[%c0_10, %c384] : memref<32x1408xbf16, #tpu.memory_space<vmem>>, vector<16x128xbf16>
    tpu.vector_store %arg11[%c0_10, %c384], %24 {strides = array<i32>} : memref<32x1408xbf16, #tpu.memory_space<vmem>>, vector<16x128xbf16>,
    %c1_i32 = arith.constant 1 : i32
    %26 = tpu.dynamic_rotate %9 by %c1_i32 dim 0 : vector<32x128xf32>, i32 -> vector<32x128xf32>
    %27 = vector.extract_strided_slice %26 {offsets = [8, 0], sizes = [16, 128], strides = [1, 1]} : vector<32x128xf32> to vector<16x128xf32>
    %28 = arith.truncf %27 : vector<16x128xf32> to vector<16x128xbf16>
    %c0_11 = arith.constant 0 : index
    %c512 = arith.constant 512 : index
    %29 = vector.load %arg11[%c0_11, %c512] : memref<32x1408xbf16, #tpu.memory_space<vmem>>, vector<16x128xbf16>
    tpu.vector_store %arg11[%c0_11, %c512], %28 {strides = array<i32>} : memref<32x1408xbf16, #tpu.memory_space<vmem>>, vector<16x128xbf16>,
    %c0_i32 = arith.constant 0 : i32
    %30 = tpu.dynamic_rotate %9 by %c0_i32 dim 0 : vector<32x128xf32>, i32 -> vector<32x128xf32>
    %31 = vector.extract_strided_slice %30 {offsets = [8, 0], sizes = [16, 128], strides = [1, 1]} : vector<32x128xf32> to vector<16x128xf32>
    %32 = arith.truncf %31 : vector<16x128xf32> to vector<16x128xbf16>
    %c0_12 = arith.constant 0 : index
    %c640 = arith.constant 640 : index
    %33 = vector.load %arg11[%c0_12, %c640] : memref<32x1408xbf16, #tpu.memory_space<vmem>>, vector<16x128xbf16>
    tpu.vector_store %arg11[%c0_12, %c640], %32 {strides = array<i32>} : memref<32x1408xbf16, #tpu.memory_space<vmem>>, vector<16x128xbf16>,
    %c31_i32 = arith.constant 31 : i32
    %34 = tpu.dynamic_rotate %9 by %c31_i32 dim 0 : vector<32x128xf32>, i32 -> vector<32x128xf32>
    %35 = vector.extract_strided_slice %34 {offsets = [8, 0], sizes = [16, 128], strides = [1, 1]} : vector<32x128xf32> to vector<16x128xf32>
    %36 = arith.truncf %35 : vector<16x128xf32> to vector<16x128xbf16>
    %c0_13 = arith.constant 0 : index
    %c768 = arith.constant 768 : index
    %37 = vector.load %arg11[%c0_13, %c768] : memref<32x1408xbf16, #tpu.memory_space<vmem>>, vector<16x128xbf16>
    tpu.vector_store %arg11[%c0_13, %c768], %36 {strides = array<i32>} : memref<32x1408xbf16, #tpu.memory_space<vmem>>, vector<16x128xbf16>,
    %c30_i32 = arith.constant 30 : i32
    %38 = tpu.dynamic_rotate %9 by %c30_i32 dim 0 : vector<32x128xf32>, i32 -> vector<32x128xf32>
    %39 = vector.extract_strided_slice %38 {offsets = [8, 0], sizes = [16, 128], strides = [1, 1]} : vector<32x128xf32> to vector<16x128xf32>
    %40 = arith.truncf %39 : vector<16x128xf32> to vector<16x128xbf16>
    %c0_14 = arith.constant 0 : index
    %c896 = arith.constant 896 : index
    %41 = vector.load %arg11[%c0_14, %c896] : memref<32x1408xbf16, #tpu.memory_space<vmem>>, vector<16x128xbf16>
    tpu.vector_store %arg11[%c0_14, %c896], %40 {strides = array<i32>} : memref<32x1408xbf16, #tpu.memory_space<vmem>>, vector<16x128xbf16>,
    %c29_i32 = arith.constant 29 : i32
    %42 = tpu.dynamic_rotate %9 by %c29_i32 dim 0 : vector<32x128xf32>, i32 -> vector<32x128xf32>
    %43 = vector.extract_strided_slice %42 {offsets = [8, 0], sizes = [16, 128], strides = [1, 1]} : vector<32x128xf32> to vector<16x128xf32>
    %44 = arith.truncf %43 : vector<16x128xf32> to vector<16x128xbf16>
    %c0_15 = arith.constant 0 : index
    %c1024 = arith.constant 1024 : index
    %45 = vector.load %arg11[%c0_15, %c1024] : memref<32x1408xbf16, #tpu.memory_space<vmem>>, vector<16x128xbf16>
    tpu.vector_store %arg11[%c0_15, %c1024], %44 {strides = array<i32>} : memref<32x1408xbf16, #tpu.memory_space<vmem>>, vector<16x128xbf16>,
    %c28_i32 = arith.constant 28 : i32
    %46 = tpu.dynamic_rotate %9 by %c28_i32 dim 0 : vector<32x128xf32>, i32 -> vector<32x128xf32>
    %47 = vector.extract_strided_slice %46 {offsets = [8, 0], sizes = [16, 128], strides = [1, 1]} : vector<32x128xf32> to vector<16x128xf32>
    %48 = arith.truncf %47 : vector<16x128xf32> to vector<16x128xbf16>
    %c0_16 = arith.constant 0 : index
    %c1152 = arith.constant 1152 : index
    %49 = vector.load %arg11[%c0_16, %c1152] : memref<32x1408xbf16, #tpu.memory_space<vmem>>, vector<16x128xbf16>
    tpu.vector_store %arg11[%c0_16, %c1152], %48 {strides = array<i32>} : memref<32x1408xbf16, #tpu.memory_space<vmem>>, vector<16x128xbf16>,
    %c27_i32 = arith.constant 27 : i32
    %50 = tpu.dynamic_rotate %9 by %c27_i32 dim 0 : vector<32x128xf32>, i32 -> vector<32x128xf32>
    %51 = vector.extract_strided_slice %50 {offsets = [8, 0], sizes = [16, 128], strides = [1, 1]} : vector<32x128xf32> to vector<16x128xf32>
    %52 = arith.truncf %51 : vector<16x128xf32> to vector<16x128xbf16>
    %c0_17 = arith.constant 0 : index
    %c1280 = arith.constant 1280 : index
    %53 = vector.load %arg11[%c0_17, %c1280] : memref<32x1408xbf16, #tpu.memory_space<vmem>>, vector<16x128xbf16>
    tpu.vector_store %arg11[%c0_17, %c1280], %52 {strides = array<i32>} : memref<32x1408xbf16, #tpu.memory_space<vmem>>, vector<16x128xbf16>,
    %54 = vector.extract_strided_slice %6 {offsets = [16, 0], sizes = [16, 128], strides = [1, 1]} : vector<32x128xf32> to vector<16x128xf32>
    %55 = tpu.concatenate %7, %54, %7 in 0 : vector<8x128xf32>, vector<16x128xf32>, vector<8x128xf32> -> vector<32x128xf32>
    %c5_i32_18 = arith.constant 5 : i32
    %56 = tpu.dynamic_rotate %55 by %c5_i32_18 dim 0 : vector<32x128xf32>, i32 -> vector<32x128xf32>
    %57 = vector.extract_strided_slice %56 {offsets = [8, 0], sizes = [16, 128], strides = [1, 1]} : vector<32x128xf32> to vector<16x128xf32>
    %58 = arith.truncf %57 : vector<16x128xf32> to vector<16x128xbf16>
    %c16 = arith.constant 16 : index
    %c0_19 = arith.constant 0 : index
    %59 = vector.load %arg11[%c16, %c0_19] : memref<32x1408xbf16, #tpu.memory_space<vmem>>, vector<16x128xbf16>
    tpu.vector_store %arg11[%c16, %c0_19], %58 {strides = array<i32>} : memref<32x1408xbf16, #tpu.memory_space<vmem>>, vector<16x128xbf16>,
    %c4_i32_20 = arith.constant 4 : i32
    %60 = tpu.dynamic_rotate %55 by %c4_i32_20 dim 0 : vector<32x128xf32>, i32 -> vector<32x128xf32>
    %61 = vector.extract_strided_slice %60 {offsets = [8, 0], sizes = [16, 128], strides = [1, 1]} : vector<32x128xf32> to vector<16x128xf32>
    %62 = arith.truncf %61 : vector<16x128xf32> to vector<16x128xbf16>
    %c16_21 = arith.constant 16 : index
    %c128_22 = arith.constant 128 : index
    %63 = vector.load %arg11[%c16_21, %c128_22] : memref<32x1408xbf16, #tpu.memory_space<vmem>>, vector<16x128xbf16>
    tpu.vector_store %arg11[%c16_21, %c128_22], %62 {strides = array<i32>} : memref<32x1408xbf16, #tpu.memory_space<vmem>>, vector<16x128xbf16>,
    %c3_i32_23 = arith.constant 3 : i32
    %64 = tpu.dynamic_rotate %55 by %c3_i32_23 dim 0 : vector<32x128xf32>, i32 -> vector<32x128xf32>
    %65 = vector.extract_strided_slice %64 {offsets = [8, 0], sizes = [16, 128], strides = [1, 1]} : vector<32x128xf32> to vector<16x128xf32>
    %66 = arith.truncf %65 : vector<16x128xf32> to vector<16x128xbf16>
    %c16_24 = arith.constant 16 : index
    %c256_25 = arith.constant 256 : index
    %67 = vector.load %arg11[%c16_24, %c256_25] : memref<32x1408xbf16, #tpu.memory_space<vmem>>, vector<16x128xbf16>
    tpu.vector_store %arg11[%c16_24, %c256_25], %66 {strides = array<i32>} : memref<32x1408xbf16, #tpu.memory_space<vmem>>, vector<16x128xbf16>,
    %c2_i32_26 = arith.constant 2 : i32
    %68 = tpu.dynamic_rotate %55 by %c2_i32_26 dim 0 : vector<32x128xf32>, i32 -> vector<32x128xf32>
    %69 = vector.extract_strided_slice %68 {offsets = [8, 0], sizes = [16, 128], strides = [1, 1]} : vector<32x128xf32> to vector<16x128xf32>
    %70 = arith.truncf %69 : vector<16x128xf32> to vector<16x128xbf16>
    %c16_27 = arith.constant 16 : index
    %c384_28 = arith.constant 384 : index
    %71 = vector.load %arg11[%c16_27, %c384_28] : memref<32x1408xbf16, #tpu.memory_space<vmem>>, vector<16x128xbf16>
    tpu.vector_store %arg11[%c16_27, %c384_28], %70 {strides = array<i32>} : memref<32x1408xbf16, #tpu.memory_space<vmem>>, vector<16x128xbf16>,
    %c1_i32_29 = arith.constant 1 : i32
    %72 = tpu.dynamic_rotate %55 by %c1_i32_29 dim 0 : vector<32x128xf32>, i32 -> vector<32x128xf32>
    %73 = vector.extract_strided_slice %72 {offsets = [8, 0], sizes = [16, 128], strides = [1, 1]} : vector<32x128xf32> to vector<16x128xf32>
    %74 = arith.truncf %73 : vector<16x128xf32> to vector<16x128xbf16>
    %c16_30 = arith.constant 16 : index
    %c512_31 = arith.constant 512 : index
    %75 = vector.load %arg11[%c16_30, %c512_31] : memref<32x1408xbf16, #tpu.memory_space<vmem>>, vector<16x128xbf16>
    tpu.vector_store %arg11[%c16_30, %c512_31], %74 {strides = array<i32>} : memref<32x1408xbf16, #tpu.memory_space<vmem>>, vector<16x128xbf16>,
    %c0_i32_32 = arith.constant 0 : i32
    %76 = tpu.dynamic_rotate %55 by %c0_i32_32 dim 0 : vector<32x128xf32>, i32 -> vector<32x128xf32>
    %77 = vector.extract_strided_slice %76 {offsets = [8, 0], sizes = [16, 128], strides = [1, 1]} : vector<32x128xf32> to vector<16x128xf32>
    %78 = arith.truncf %77 : vector<16x128xf32> to vector<16x128xbf16>
    %c16_33 = arith.constant 16 : index
    %c640_34 = arith.constant 640 : index
    %79 = vector.load %arg11[%c16_33, %c640_34] : memref<32x1408xbf16, #tpu.memory_space<vmem>>, vector<16x128xbf16>
    tpu.vector_store %arg11[%c16_33, %c640_34], %78 {strides = array<i32>} : memref<32x1408xbf16, #tpu.memory_space<vmem>>, vector<16x128xbf16>,
    %c31_i32_35 = arith.constant 31 : i32
    %80 = tpu.dynamic_rotate %55 by %c31_i32_35 dim 0 : vector<32x128xf32>, i32 -> vector<32x128xf32>
    %81 = vector.extract_strided_slice %80 {offsets = [8, 0], sizes = [16, 128], strides = [1, 1]} : vector<32x128xf32> to vector<16x128xf32>
    %82 = arith.truncf %81 : vector<16x128xf32> to vector<16x128xbf16>
    %c16_36 = arith.constant 16 : index
    %c768_37 = arith.constant 768 : index
    %83 = vector.load %arg11[%c16_36, %c768_37] : memref<32x1408xbf16, #tpu.memory_space<vmem>>, vector<16x128xbf16>
    tpu.vector_store %arg11[%c16_36, %c768_37], %82 {strides = array<i32>} : memref<32x1408xbf16, #tpu.memory_space<vmem>>, vector<16x128xbf16>,
    %c30_i32_38 = arith.constant 30 : i32
    %84 = tpu.dynamic_rotate %55 by %c30_i32_38 dim 0 : vector<32x128xf32>, i32 -> vector<32x128xf32>
    %85 = vector.extract_strided_slice %84 {offsets = [8, 0], sizes = [16, 128], strides = [1, 1]} : vector<32x128xf32> to vector<16x128xf32>
    %86 = arith.truncf %85 : vector<16x128xf32> to vector<16x128xbf16>
    %c16_39 = arith.constant 16 : index
    %c896_40 = arith.constant 896 : index
    %87 = vector.load %arg11[%c16_39, %c896_40] : memref<32x1408xbf16, #tpu.memory_space<vmem>>, vector<16x128xbf16>
    tpu.vector_store %arg11[%c16_39, %c896_40], %86 {strides = array<i32>} : memref<32x1408xbf16, #tpu.memory_space<vmem>>, vector<16x128xbf16>,
    %c29_i32_41 = arith.constant 29 : i32
    %88 = tpu.dynamic_rotate %55 by %c29_i32_41 dim 0 : vector<32x128xf32>, i32 -> vector<32x128xf32>
    %89 = vector.extract_strided_slice %88 {offsets = [8, 0], sizes = [16, 128], strides = [1, 1]} : vector<32x128xf32> to vector<16x128xf32>
    %90 = arith.truncf %89 : vector<16x128xf32> to vector<16x128xbf16>
    %c16_42 = arith.constant 16 : index
    %c1024_43 = arith.constant 1024 : index
    %91 = vector.load %arg11[%c16_42, %c1024_43] : memref<32x1408xbf16, #tpu.memory_space<vmem>>, vector<16x128xbf16>
    tpu.vector_store %arg11[%c16_42, %c1024_43], %90 {strides = array<i32>} : memref<32x1408xbf16, #tpu.memory_space<vmem>>, vector<16x128xbf16>,
    %c28_i32_44 = arith.constant 28 : i32
    %92 = tpu.dynamic_rotate %55 by %c28_i32_44 dim 0 : vector<32x128xf32>, i32 -> vector<32x128xf32>
    %93 = vector.extract_strided_slice %92 {offsets = [8, 0], sizes = [16, 128], strides = [1, 1]} : vector<32x128xf32> to vector<16x128xf32>
    %94 = arith.truncf %93 : vector<16x128xf32> to vector<16x128xbf16>
    %c16_45 = arith.constant 16 : index
    %c1152_46 = arith.constant 1152 : index
    %95 = vector.load %arg11[%c16_45, %c1152_46] : memref<32x1408xbf16, #tpu.memory_space<vmem>>, vector<16x128xbf16>
    tpu.vector_store %arg11[%c16_45, %c1152_46], %94 {strides = array<i32>} : memref<32x1408xbf16, #tpu.memory_space<vmem>>, vector<16x128xbf16>,
    %c27_i32_47 = arith.constant 27 : i32
    %96 = tpu.dynamic_rotate %55 by %c27_i32_47 dim 0 : vector<32x128xf32>, i32 -> vector<32x128xf32>
    %97 = vector.extract_strided_slice %96 {offsets = [8, 0], sizes = [16, 128], strides = [1, 1]} : vector<32x128xf32> to vector<16x128xf32>
    %98 = arith.truncf %97 : vector<16x128xf32> to vector<16x128xbf16>
    %c16_48 = arith.constant 16 : index
    %c1280_49 = arith.constant 1280 : index
    %99 = vector.load %arg11[%c16_48, %c1280_49] : memref<32x1408xbf16, #tpu.memory_space<vmem>>, vector<16x128xbf16>
    tpu.vector_store %arg11[%c16_48, %c1280_49], %98 {strides = array<i32>} : memref<32x1408xbf16, #tpu.memory_space<vmem>>, vector<16x128xbf16>,
    %c0_50 = arith.constant 0 : index
    %c0_51 = arith.constant 0 : index
    %100 = vector.load %arg11[%c0_50, %c0_51] : memref<32x1408xbf16, #tpu.memory_space<vmem>>, vector<32x1408xbf16>
    %c0_52 = arith.constant 0 : index
    %c0_53 = arith.constant 0 : index
    %101 = vector.load %arg4[%c0_52, %c0_53] : memref<1408x512xbf16, #tpu.memory_space<vmem>>, vector<1408x512xbf16>
    %cst_54 = arith.constant dense<0.000000e+00> : vector<32x512xf32>
    %102 = tpu.matmul %100, %101, %cst_54 {dimension_numbers = #tpu.dot_dimension_numbers<[1], [0], [0], [1], [0, 0, 1, 1], [], []>} : vector<32x1408xbf16>, vector<1408x512xbf16>, vector<32x512xf32> -> vector<32x512xf32>
    %c0_55 = arith.constant 0 : index
    %c0_56 = arith.constant 0 : index
    %103 = vector.load %arg5[%c0_55, %c0_56] : memref<1x512xf32, #tpu.memory_space<vmem>>, vector<1x512xf32>
    %104 = vector.broadcast %103 : vector<1x512xf32> to vector<32x512xf32>
    %105 = arith.addf %102, %104 : vector<32x512xf32>
    %c0_57 = arith.constant 0 : index
    %c0_58 = arith.constant 0 : index
    %106 = vector.load %arg7[%c0_57, %c0_58] : memref<1x512xf32, #tpu.memory_space<vmem>>, vector<1x512xf32>
    %c0_59 = arith.constant 0 : index
    %c0_60 = arith.constant 0 : index
    %107 = vector.load %arg8[%c0_59, %c0_60] : memref<1x512xf32, #tpu.memory_space<vmem>>, vector<1x512xf32>
    %108 = vector.extract_strided_slice %105 {offsets = [0, 0], sizes = [16, 512], strides = [1, 1]} : vector<32x512xf32> to vector<16x512xf32>
    %cst_61 = arith.constant dense<0.000000e+00> : vector<512xf32>
    %109 = vector.multi_reduction <add>, %108, %cst_61 [0] : vector<16x512xf32> to vector<512xf32>
    %110 = vector.shape_cast %109 : vector<512xf32> to vector<1x512xf32>
    %c0_62 = arith.constant 0 : index
    %c0_63 = arith.constant 0 : index
    %111 = vector.load %arg6[%c0_62, %c0_63] : memref<512x512xf32, #tpu.memory_space<vmem>>, vector<512x512xf32>
    %cst_64 = arith.constant dense<0.000000e+00> : vector<1x512xf32>
    %112 = tpu.matmul %110, %111, %cst_64 {dimension_numbers = #tpu.dot_dimension_numbers<[1], [0], [0], [1], [0, 0, 1, 1], [], []>} : vector<1x512xf32>, vector<512x512xf32>, vector<1x512xf32> -> vector<1x512xf32>
    %113 = vector.broadcast %112 : vector<1x512xf32> to vector<16x512xf32>
    %114 = arith.subf %108, %113 : vector<16x512xf32>
    %115 = arith.mulf %114, %114 : vector<16x512xf32>
    %cst_65 = arith.constant dense<0.000000e+00> : vector<512xf32>
    %116 = vector.multi_reduction <add>, %115, %cst_65 [0] : vector<16x512xf32> to vector<512xf32>
    %117 = vector.shape_cast %116 : vector<512xf32> to vector<1x512xf32>
    %c0_66 = arith.constant 0 : index
    %c0_67 = arith.constant 0 : index
    %118 = vector.load %arg6[%c0_66, %c0_67] : memref<512x512xf32, #tpu.memory_space<vmem>>, vector<512x512xf32>
    %cst_68 = arith.constant dense<0.000000e+00> : vector<1x512xf32>
    %119 = tpu.matmul %117, %118, %cst_68 {dimension_numbers = #tpu.dot_dimension_numbers<[1], [0], [0], [1], [0, 0, 1, 1], [], []>} : vector<1x512xf32>, vector<512x512xf32>, vector<1x512xf32> -> vector<1x512xf32>
    %cst_69 = arith.constant 9.99999974E-6 : f32
    %120 = vector.broadcast %cst_69 : f32 to vector<1x512xf32>
    %121 = arith.addf %119, %120 : vector<1x512xf32>
    %122 = math.rsqrt %121 : vector<1x512xf32>
    %123 = vector.broadcast %122 : vector<1x512xf32> to vector<16x512xf32>
    %124 = arith.mulf %114, %123 : vector<16x512xf32>
    %125 = vector.broadcast %106 : vector<1x512xf32> to vector<16x512xf32>
    %126 = arith.mulf %124, %125 : vector<16x512xf32>
    %127 = vector.broadcast %107 : vector<1x512xf32> to vector<16x512xf32>
    %128 = arith.addf %126, %127 : vector<16x512xf32>
    %cst_70 = arith.constant 0.000000e+00 : f32
    %129 = vector.broadcast %cst_70 : f32 to vector<16x512xf32>
    %130 = arith.cmpf oge, %128, %129 : vector<16x512xf32>
    %cst_71 = arith.constant 2.000000e-01 : f32
    %131 = vector.broadcast %cst_71 : f32 to vector<16x512xf32>
    %132 = arith.mulf %131, %128 : vector<16x512xf32>
    %133 = arith.select %130, %128, %132 : vector<16x512xi1>, vector<16x512xf32>
    %134 = vector.extract_strided_slice %105 {offsets = [16, 0], sizes = [16, 512], strides = [1, 1]} : vector<32x512xf32> to vector<16x512xf32>
    %cst_72 = arith.constant dense<0.000000e+00> : vector<512xf32>
    %135 = vector.multi_reduction <add>, %134, %cst_72 [0] : vector<16x512xf32> to vector<512xf32>
    %136 = vector.shape_cast %135 : vector<512xf32> to vector<1x512xf32>
    %c0_73 = arith.constant 0 : index
    %c0_74 = arith.constant 0 : index
    %137 = vector.load %arg6[%c0_73, %c0_74] : memref<512x512xf32, #tpu.memory_space<vmem>>, vector<512x512xf32>
    %cst_75 = arith.constant dense<0.000000e+00> : vector<1x512xf32>
    %138 = tpu.matmul %136, %137, %cst_75 {dimension_numbers = #tpu.dot_dimension_numbers<[1], [0], [0], [1], [0, 0, 1, 1], [], []>} : vector<1x512xf32>, vector<512x512xf32>, vector<1x512xf32> -> vector<1x512xf32>
    %139 = vector.broadcast %138 : vector<1x512xf32> to vector<16x512xf32>
    %140 = arith.subf %134, %139 : vector<16x512xf32>
    %141 = arith.mulf %140, %140 : vector<16x512xf32>
    %cst_76 = arith.constant dense<0.000000e+00> : vector<512xf32>
    %142 = vector.multi_reduction <add>, %141, %cst_76 [0] : vector<16x512xf32> to vector<512xf32>
    %143 = vector.shape_cast %142 : vector<512xf32> to vector<1x512xf32>
    %c0_77 = arith.constant 0 : index
    %c0_78 = arith.constant 0 : index
    %144 = vector.load %arg6[%c0_77, %c0_78] : memref<512x512xf32, #tpu.memory_space<vmem>>, vector<512x512xf32>
    %cst_79 = arith.constant dense<0.000000e+00> : vector<1x512xf32>
    %145 = tpu.matmul %143, %144, %cst_79 {dimension_numbers = #tpu.dot_dimension_numbers<[1], [0], [0], [1], [0, 0, 1, 1], [], []>} : vector<1x512xf32>, vector<512x512xf32>, vector<1x512xf32> -> vector<1x512xf32>
    %cst_80 = arith.constant 9.99999974E-6 : f32
    %146 = vector.broadcast %cst_80 : f32 to vector<1x512xf32>
    %147 = arith.addf %145, %146 : vector<1x512xf32>
    %148 = math.rsqrt %147 : vector<1x512xf32>
    %149 = vector.broadcast %148 : vector<1x512xf32> to vector<16x512xf32>
    %150 = arith.mulf %140, %149 : vector<16x512xf32>
    %151 = vector.broadcast %106 : vector<1x512xf32> to vector<16x512xf32>
    %152 = arith.mulf %150, %151 : vector<16x512xf32>
    %153 = vector.broadcast %107 : vector<1x512xf32> to vector<16x512xf32>
    %154 = arith.addf %152, %153 : vector<16x512xf32>
    %cst_81 = arith.constant 0.000000e+00 : f32
    %155 = vector.broadcast %cst_81 : f32 to vector<16x512xf32>
    %156 = arith.cmpf oge, %154, %155 : vector<16x512xf32>
    %cst_82 = arith.constant 2.000000e-01 : f32
    %157 = vector.broadcast %cst_82 : f32 to vector<16x512xf32>
    %158 = arith.mulf %157, %154 : vector<16x512xf32>
    %159 = arith.select %156, %154, %158 : vector<16x512xi1>, vector<16x512xf32>
    %160 = tpu.concatenate %133, %159 in 0 : vector<16x512xf32>, vector<16x512xf32> -> vector<32x512xf32>
    %c0_83 = arith.constant 0 : index
    %c0_84 = arith.constant 0 : index
    %161 = vector.load %arg9[%c0_83, %c0_84] : memref<512x128xf32, #tpu.memory_space<vmem>>, vector<512x128xf32>
    %cst_85 = arith.constant dense<0.000000e+00> : vector<32x128xf32>
    %162 = tpu.matmul %160, %161, %cst_85 {dimension_numbers = #tpu.dot_dimension_numbers<[1], [0], [0], [1], [0, 0, 1, 1], [], []>} : vector<32x512xf32>, vector<512x128xf32>, vector<32x128xf32> -> vector<32x128xf32>
    %c0_86 = arith.constant 0 : index
    %c0_87 = arith.constant 0 : index
    %163 = vector.load %arg10[%c0_86, %c0_87] : memref<32x128xf32, #tpu.memory_space<vmem>>, vector<32x128xf32>
    tpu.vector_store %arg10[%c0_86, %c0_87], %162 {strides = array<i32>} : memref<32x128xf32, #tpu.memory_space<vmem>>, vector<32x128xf32>,
    return
  }
  func.func @transform_0(%arg0: i32) -> (i32, i32) {
    %c0_i32 = arith.constant 0 : i32
    %c0_i32_0 = arith.constant 0 : i32
    return %arg0, %c0_i32 : i32, i32
  }
  func.func @transform_1(%arg0: i32) -> (i32, i32) {
    %c0_i32 = arith.constant 0 : i32
    %c0_i32_0 = arith.constant 0 : i32
    %c0_i32_1 = arith.constant 0 : i32
    return %c0_i32, %c0_i32_0 : i32, i32
  }
  func.func @transform_2(%arg0: i32) -> (i32, i32) {
    %c0_i32 = arith.constant 0 : i32
    %c0_i32_0 = arith.constant 0 : i32
    %c0_i32_1 = arith.constant 0 : i32
    return %c0_i32, %c0_i32_0 : i32, i32
  }
  func.func @transform_3(%arg0: i32) -> (i32, i32) {
    %c0_i32 = arith.constant 0 : i32
    %c0_i32_0 = arith.constant 0 : i32
    %c0_i32_1 = arith.constant 0 : i32
    return %c0_i32, %c0_i32_0 : i32, i32
  }
  func.func @transform_4(%arg0: i32) -> (i32, i32) {
    %c0_i32 = arith.constant 0 : i32
    %c0_i32_0 = arith.constant 0 : i32
    %c0_i32_1 = arith.constant 0 : i32
    return %c0_i32, %c0_i32_0 : i32, i32
  }
  func.func @transform_5(%arg0: i32) -> (i32, i32) {
    %c0_i32 = arith.constant 0 : i32
    %c0_i32_0 = arith.constant 0 : i32
    %c0_i32_1 = arith.constant 0 : i32
    return %c0_i32, %c0_i32_0 : i32, i32
  }
  func.func @transform_6(%arg0: i32) -> (i32, i32) {
    %c0_i32 = arith.constant 0 : i32
    %c0_i32_0 = arith.constant 0 : i32
    %c0_i32_1 = arith.constant 0 : i32
    return %c0_i32, %c0_i32_0 : i32, i32
  }
  func.func @transform_7(%arg0: i32) -> (i32, i32) {
    %c0_i32 = arith.constant 0 : i32
    %c0_i32_0 = arith.constant 0 : i32
    %c0_i32_1 = arith.constant 0 : i32
    return %c0_i32, %c0_i32_0 : i32, i32
  }
  func.func @transform_8(%arg0: i32) -> (i32, i32) {
    %c0_i32 = arith.constant 0 : i32
    %c0_i32_0 = arith.constant 0 : i32
    %c0_i32_1 = arith.constant 0 : i32
    return %c0_i32, %c0_i32_0 : i32, i32
  }
  func.func @transform_9(%arg0: i32) -> (i32, i32) {
    %c0_i32 = arith.constant 0 : i32
    %c0_i32_0 = arith.constant 0 : i32
    return %arg0, %c0_i32 : i32, i32
  }
}

</mosaic_0001>

<llo_original>
// kernel: tpu_custom_call.1
$region0: #{tpu_custom_call.1}
  #allocation0 [shape = 'u32[]', space=smem, size = 0x4, offset = 0x4, fixed_abs, tag = 'smem constant byte address 0x4 - core index']
  #allocation1 [shape = 'u32[72,128]{1,0:T(1,128)}', space=vmem, size = 0x9000, scoped, tag = 'internal scratch']
  #allocation2 [shape = 'bf16[32,1408]{1,0:T(8,128)(2,1)}', space=vmem, size = 0x16000, scoped, tag = 'scratch operand']
  %s0 = inlined_call_operand.hbm [shape: f32[32,64], index: 0, kind: input, shape index: {}]
  %s1 = inlined_call_operand.hbm [shape: bf16[64,128], index: 1, kind: input, shape index: {}]
  %s2 = inlined_call_operand.hbm [shape: f32[1,128], index: 2, kind: input, shape index: {}]
  %s3 = inlined_call_operand.hbm [shape: bf16[1408,512], index: 3, kind: input, shape index: {}]
  %s4 = inlined_call_operand.hbm [shape: f32[1,512], index: 4, kind: input, shape index: {}]
  %s5 = inlined_call_operand.hbm [shape: f32[512,512], index: 5, kind: input, shape index: {}]
  %s6 = inlined_call_operand.hbm [shape: f32[1,512], index: 6, kind: input, shape index: {}]
  %s7 = inlined_call_operand.hbm [shape: f32[1,512], index: 7, kind: input, shape index: {}]
  %s8 = inlined_call_operand.hbm [shape: f32[512,128], index: 8, kind: input, shape index: {}]
  %s9 = inlined_call_operand.hbm [shape: f32[32,128], index: 9, kind: output, shape index: {}]
  %s10 = sld [smem:[#allocation0]]
  $region82: #{tpu_custom_call.1} parent=0
    _
  %s12 = ssub.s32 1, %s10
  %s13 = scalar_select 0, %s12, %s10
  $region1: #{tpu_custom_call.1} parent=0
    #allocation3 [shape = 'u8[16384]{0}', space=vmem, size = 0x4000, scoped, tag = 'input window, operand 0, single buffered']
    #allocation4 [shape = 's32[1]{0}', space=sflag, size = 0x4, scoped, tag = 'scoped memory for tpu_custom_call.1']
    #allocation5 [shape = 's32[1]{0}', space=sflag, size = 0x4, scoped, tag = 'scoped memory for tpu_custom_call.1']
    #allocation6 [shape = 'u8[16384]{0}', space=vmem, size = 0x4000, scoped, tag = 'input window, operand 1, single buffered']
    #allocation7 [shape = 's32[1]{0}', space=sflag, size = 0x4, scoped, tag = 'scoped memory for tpu_custom_call.1']
    #allocation8 [shape = 'u8[512]{0}', space=vmem, size = 0x400, scoped, tag = 'input window, operand 2, single buffered']
    #allocation9 [shape = 'u8[1441792]{0}', space=vmem, size = 0x160000, scoped, tag = 'input window, operand 3, single buffered']
    #allocation10 [shape = 's32[1]{0}', space=sflag, size = 0x4, scoped, tag = 'scoped memory for tpu_custom_call.1']
    #allocation11 [shape = 'u8[2048]{0}', space=vmem, size = 0x800, scoped, tag = 'input window, operand 4, single buffered']
    #allocation12 [shape = 'u8[1048576]{0}', space=vmem, size = 0x100000, scoped, tag = 'input window, operand 5, single buffered']
    #allocation13 [shape = 's32[1]{0}', space=sflag, size = 0x4, scoped, tag = 'scoped memory for tpu_custom_call.1']
    #allocation14 [shape = 'u8[2048]{0}', space=vmem, size = 0x800, scoped, tag = 'input window, operand 6, single buffered']
    #allocation15 [shape = 'u8[2048]{0}', space=vmem, size = 0x800, scoped, tag = 'input window, operand 7, single buffered']
    #allocation16 [shape = 's32[1]{0}', space=sflag, size = 0x4, scoped, tag = 'scoped memory for tpu_custom_call.1']
    #allocation17 [shape = 'u8[262144]{0}', space=vmem, size = 0x40000, scoped, tag = 'input window, operand 8, single buffered']
    #allocation18 [shape = 'u8[16384]{0}', space=vmem, size = 0x4000, scoped, tag = 'output window, operand 0, single buffered']
    %14 = vsyncpa [#allocation4], 0
    %15 = vsyncpa [#allocation7], 0
    %16 = vsyncpa [#allocation10], 0
    %17 = vsyncpa [#allocation13], 0
    %18 = vsyncpa [#allocation16], 0
    %19 = vsyncpa [#allocation5], 0
    // Predicated region
    $region2: #{tpu_custom_call.1} parent=1 // pred_check
      _
    $region3: #{tpu_custom_call.1} parent=1 // pred_check_branch
      %21 = sbr.rel (0) target = $region5
    $region4: #{tpu_custom_call.1} parent=1 // pred_region
      %23 = vsyncadd [#allocation4], 0
      %s24 = sshll.u32 %s0, 4
      %s25 = int_to_ptr.hbm [resolvable:$true] %s24
      %s26 = sshll.u32 [#allocation3], 4
      %s27 = int_to_ptr.vmem [resolvable:$true] %s26
      %32 = dma.hbm_to_vmem [thread:$0]  %s25, 512, %s27, [#allocation4], 128, 128, 8
    $region5: #{tpu_custom_call.1} parent=1 // pred_fallthru
      _
    // Predicated region
    $region6: #{tpu_custom_call.1} parent=1 // pred_check
      _
    $region7: #{tpu_custom_call.1} parent=1 // pred_check_branch
      %34 = sbr.rel (0) target = $region9
    $region8: #{tpu_custom_call.1} parent=1 // pred_region
      %36 = vsyncadd [#allocation7], 0
      %s37 = sshll.u32 %s1, 4
      %s38 = int_to_ptr.hbm [resolvable:$true] %s37
      %s39 = sshll.u32 [#allocation6], 4
      %s40 = int_to_ptr.vmem [resolvable:$true] %s39
      %45 = dma.hbm_to_vmem [thread:$0]  %s38, 512, %s40, [#allocation7], 64, 64, 4
    $region9: #{tpu_custom_call.1} parent=1 // pred_fallthru
      _
    // Predicated region
    $region10: #{tpu_custom_call.1} parent=1 // pred_check
      _
    $region11: #{tpu_custom_call.1} parent=1 // pred_check_branch
      %47 = sbr.rel (0) target = $region13
    $region12: #{tpu_custom_call.1} parent=1 // pred_region
      %49 = vsyncadd [#allocation7], 0
      %s51 = sshll.u32 %s2, 4
      %s52 = int_to_ptr.hbm [resolvable:$true] %s51
      %s53 = sshll.u32 [#allocation8], 4
      %s54 = int_to_ptr.vmem [resolvable:$true] %s53
      %56 = dma.hbm_to_vmem [thread:$0]  %s52, 16, %s54, [#allocation7]
    $region13: #{tpu_custom_call.1} parent=1 // pred_fallthru
      _
    // Predicated region
    $region14: #{tpu_custom_call.1} parent=1 // pred_check
      _
    $region15: #{tpu_custom_call.1} parent=1 // pred_check_branch
      %58 = sbr.rel (0) target = $region17
    $region16: #{tpu_custom_call.1} parent=1 // pred_region
      %60 = vsyncadd [#allocation10], 0
      %s61 = sshll.u32 %s3, 4
      %s62 = int_to_ptr.hbm [resolvable:$true] %s61
      %s63 = sshll.u32 [#allocation9], 4
      %s64 = int_to_ptr.vmem [resolvable:$true] %s63
      %69 = dma.hbm_to_vmem [thread:$0]  %s62, 45056, %s64, [#allocation10], 256, 256, 16
    $region17: #{tpu_custom_call.1} parent=1 // pred_fallthru
      _
    // Predicated region
    $region18: #{tpu_custom_call.1} parent=1 // pred_check
      _
    $region19: #{tpu_custom_call.1} parent=1 // pred_check_branch
      %71 = sbr.rel (0) target = $region21
    $region20: #{tpu_custom_call.1} parent=1 // pred_region
      %73 = vsyncadd [#allocation10], 0
      %s75 = sshll.u32 %s4, 4
      %s76 = int_to_ptr.hbm [resolvable:$true] %s75
      %s77 = sshll.u32 [#allocation11], 4
      %s78 = int_to_ptr.vmem [resolvable:$true] %s77
      %80 = dma.hbm_to_vmem [thread:$0]  %s76, 64, %s78, [#allocation10]
    $region21: #{tpu_custom_call.1} parent=1 // pred_fallthru
      _
    // Predicated region
    $region22: #{tpu_custom_call.1} parent=1 // pred_check
      _
    $region23: #{tpu_custom_call.1} parent=1 // pred_check_branch
      %82 = sbr.rel (0) target = $region25
    $region24: #{tpu_custom_call.1} parent=1 // pred_region
      %84 = vsyncadd [#allocation13], 0
      %s85 = sshll.u32 %s5, 4
      %s86 = int_to_ptr.hbm [resolvable:$true] %s85
      %s87 = sshll.u32 [#allocation12], 4
      %s88 = int_to_ptr.vmem [resolvable:$true] %s87
      %93 = dma.hbm_to_vmem [thread:$0]  %s86, 32768, %s88, [#allocation13], 512, 512, 32
    $region25: #{tpu_custom_call.1} parent=1 // pred_fallthru
      _
    // Predicated region
    $region26: #{tpu_custom_call.1} parent=1 // pred_check
      _
    $region27: #{tpu_custom_call.1} parent=1 // pred_check_branch
      %95 = sbr.rel (0) target = $region29
    $region28: #{tpu_custom_call.1} parent=1 // pred_region
      %97 = vsyncadd [#allocation13], 0
      %s99 = sshll.u32 %s6, 4
      %s100 = int_to_ptr.hbm [resolvable:$true] %s99
      %s101 = sshll.u32 [#allocation14], 4
      %s102 = int_to_ptr.vmem [resolvable:$true] %s101
      %104 = dma.hbm_to_vmem [thread:$0]  %s100, 64, %s102, [#allocation13]
    $region29: #{tpu_custom_call.1} parent=1 // pred_fallthru
      _
    // Predicated region
    $region30: #{tpu_custom_call.1} parent=1 // pred_check
      _
    $region31: #{tpu_custom_call.1} parent=1 // pred_check_branch
      %106 = sbr.rel (0) target = $region33
    $region32: #{tpu_custom_call.1} parent=1 // pred_region
      %108 = vsyncadd [#allocation16], 0
      %s110 = sshll.u32 %s7, 4
      %s111 = int_to_ptr.hbm [resolvable:$true] %s110
      %s112 = sshll.u32 [#allocation15], 4
      %s113 = int_to_ptr.vmem [resolvable:$true] %s112
      %115 = dma.hbm_to_vmem [thread:$0]  %s111, 64, %s113, [#allocation16]
    $region33: #{tpu_custom_call.1} parent=1 // pred_fallthru
      _
    // Predicated region
    $region34: #{tpu_custom_call.1} parent=1 // pred_check
      _
    $region35: #{tpu_custom_call.1} parent=1 // pred_check_branch
      %117 = sbr.rel (0) target = $region37
    $region36: #{tpu_custom_call.1} parent=1 // pred_region
      %119 = vsyncadd [#allocation16], 0
      %s120 = sshll.u32 %s8, 4
      %s121 = int_to_ptr.hbm [resolvable:$true] %s120
      %s122 = sshll.u32 [#allocation17], 4
      %s123 = int_to_ptr.vmem [resolvable:$true] %s122
      %128 = dma.hbm_to_vmem [thread:$0]  %s121, 8192, %s123, [#allocation16], 128, 128, 8
    $region37: #{tpu_custom_call.1} parent=1 // pred_fallthru
      _
    // Predicated region
    $region38: #{tpu_custom_call.1} parent=1 // pred_check
      _
    $region39: #{tpu_custom_call.1} parent=1 // pred_check_branch
      %130 = sbr.rel (0) target = $region41
    $region40: #{tpu_custom_call.1} parent=1 // pred_region
      %132 = dma.done [#allocation4], 512
    $region41: #{tpu_custom_call.1} parent=1 // pred_fallthru
      _
    // Predicated region
    $region42: #{tpu_custom_call.1} parent=1 // pred_check
      _
    $region43: #{tpu_custom_call.1} parent=1 // pred_check_branch
      %134 = sbr.rel (0) target = $region45
    $region44: #{tpu_custom_call.1} parent=1 // pred_region
      %136 = dma.done [#allocation7], 512
    $region45: #{tpu_custom_call.1} parent=1 // pred_fallthru
      _
    // Predicated region
    $region46: #{tpu_custom_call.1} parent=1 // pred_check
      _
    $region47: #{tpu_custom_call.1} parent=1 // pred_check_branch
      %138 = sbr.rel (0) target = $region49
    $region48: #{tpu_custom_call.1} parent=1 // pred_region
      %140 = dma.done [#allocation7], 16
    $region49: #{tpu_custom_call.1} parent=1 // pred_fallthru
      _
    // Predicated region
    $region50: #{tpu_custom_call.1} parent=1 // pred_check
      _
    $region51: #{tpu_custom_call.1} parent=1 // pred_check_branch
      %142 = sbr.rel (0) target = $region53
    $region52: #{tpu_custom_call.1} parent=1 // pred_region
      %144 = dma.done [#allocation10], 45056
    $region53: #{tpu_custom_call.1} parent=1 // pred_fallthru
      _
    // Predicated region
    $region54: #{tpu_custom_call.1} parent=1 // pred_check
      _
    $region55: #{tpu_custom_call.1} parent=1 // pred_check_branch
      %146 = sbr.rel (0) target = $region57
    $region56: #{tpu_custom_call.1} parent=1 // pred_region
      %148 = dma.done [#allocation10], 64
    $region57: #{tpu_custom_call.1} parent=1 // pred_fallthru
      _
    // Predicated region
    $region58: #{tpu_custom_call.1} parent=1 // pred_check
      _
    $region59: #{tpu_custom_call.1} parent=1 // pred_check_branch
      %150 = sbr.rel (0) target = $region61
    $region60: #{tpu_custom_call.1} parent=1 // pred_region
      %152 = dma.done [#allocation13], 32768
    $region61: #{tpu_custom_call.1} parent=1 // pred_fallthru
      _
    // Predicated region
    $region62: #{tpu_custom_call.1} parent=1 // pred_check
      _
    $region63: #{tpu_custom_call.1} parent=1 // pred_check_branch
      %154 = sbr.rel (0) target = $region65
    $region64: #{tpu_custom_call.1} parent=1 // pred_region
      %156 = dma.done [#allocation13], 64
    $region65: #{tpu_custom_call.1} parent=1 // pred_fallthru
      _
    // Predicated region
    $region66: #{tpu_custom_call.1} parent=1 // pred_check
      _
    $region67: #{tpu_custom_call.1} parent=1 // pred_check_branch
      %158 = sbr.rel (0) target = $region69
    $region68: #{tpu_custom_call.1} parent=1 // pred_region
      %160 = dma.done [#allocation16], 64
    $region69: #{tpu_custom_call.1} parent=1 // pred_fallthru
      _
    // Predicated region
    $region70: #{tpu_custom_call.1} parent=1 // pred_check
      _
    $region71: #{tpu_custom_call.1} parent=1 // pred_check_branch
      %162 = sbr.rel (0) target = $region73
    $region72: #{tpu_custom_call.1} parent=1 // pred_region
      %164 = dma.done [#allocation16], 8192
    $region73: #{tpu_custom_call.1} parent=1 // pred_fallthru
      _
    %v166 = vld [vmem:[#allocation3] sm:$0xff]
    %v167 = vld [vmem:[#allocation3 + $0x8] sm:$0xff]
    %v168 = vld [vmem:[#allocation3 + $0x10] sm:$0xff]
    %v169 = vld [vmem:[#allocation3 + $0x18] sm:$0xff]
    %v170 = vpack.c.bf16 %v167, %v166
    %v171 = vpack.c.bf16 %v169, %v168
    %v172 = vld [vmem:[#allocation6] sm:$0xf]
    %v173 = vld [vmem:[#allocation6 + $0x4] sm:$0xf]
    %v174 = vld [vmem:[#allocation6 + $0x8] sm:$0xf]
    %v175 = vld [vmem:[#allocation6 + $0xc] sm:$0xf]
    %v176 = vld [vmem:[#allocation6 + $0x10] sm:$0xf]
    %v177 = vld [vmem:[#allocation6 + $0x14] sm:$0xf]
    %v178 = vld [vmem:[#allocation6 + $0x18] sm:$0xf]
    %v179 = vld [vmem:[#allocation6 + $0x1c] sm:$0xf]
    %v180 = vld [vmem:[#allocation8] sm:$0x1]
    %v182 = vperm.slane %v180, 0
    %v192 = vunpack.c.l.b16 %v172
    %v193 = vunpack.c.l.b16 %v173
    %v194 = vunpack.c.l.b16 %v174
    %v195 = vunpack.c.l.b16 %v175
    %v196 = vunpack.c.l.b16 %v176
    %v197 = vunpack.c.l.b16 %v177
    %v198 = vunpack.c.l.b16 %v178
    %v199 = vunpack.c.l.b16 %v179
    %v200 = vpack.c.b16 %v193, %v192
    %v201 = vpack.c.b16 %v195, %v194
    %v202 = vpack.c.b16 %v197, %v196
    %v203 = vpack.c.b16 %v199, %v198
    %vm208 = vcmask 523264
    %v210 = vsel %vm208, %v170, 0
    %v213 = vsel %vm208, %v171, 0
    %215 = vmatpush.bf16.msra.mxu0 0
    %216 = vmatpush.bf16.msra.mxu0 0
    %217 = vmatpush.bf16.msra.mxu0 0
    %218 = vmatpush.bf16.msra.mxu0 0
    %219 = vmatpush.bf16.msra.mxu0 %v203
    %220 = vmatpush.bf16.msra.mxu0 %v202
    %221 = vmatpush.bf16.msra.mxu0 %v201
    %222 = vmatpush.bf16.msra.mxu0 %v200
    %223 = vmatmul.bf16.gmra.mxu0 %v210
    %v224 = vpop.f32.mrf.mxu0
    %v225 = vadd.f32 %v182, %v224
    %v226 = vpop.f32.mrf.mxu0
    %v227 = vadd.f32 %v182, %v226
    %228 = vmatmul.bf16.gmra.mxu0 %v213
    %v229 = vpop.f32.mrf.mxu0
    %v230 = vadd.f32 %v182, %v229
    %v231 = vpop.f32.mrf.mxu0
    %v232 = vadd.f32 %v182, %v231
    %233 = vdwg.mxu0
    %v234 = vrot.slane %v225, 3
    %v235 = vrot.slane %v227, 3
    %v236 = vlaneseq
    %v237 = vshrl.u32 %v236, 7
    %vm238 = vcmp.lt.s32.totalorder %v237, 5
    %v239 = vsel %vm238, %v234, %v235
    %v240 = vsel %vm238, 0.0, %v234
    %v241 = vpack.c.bf16 %v240, %v240
    %v242 = vpack.c.bf16 %v239, %v239
    %243 = vst [vmem:[#allocation2] sm:$0xf] %v241
    %244 = vst [vmem:[#allocation2 + $0x2c] sm:$0xf] %v242
    %v245 = vrot.slane %v225, 4
    %v246 = vrot.slane %v227, 4
    %vm247 = vcmp.lt.s32.totalorder %v237, 4
    %v248 = vsel %vm247, %v245, %v246
    %v249 = vsel %vm247, 0.0, %v245
    %v250 = vpack.c.bf16 %v249, %v249
    %v251 = vpack.c.bf16 %v248, %v248
    %252 = vst [vmem:[#allocation2 + $0x4] sm:$0xf] %v250
    %253 = vst [vmem:[#allocation2 + $0x30] sm:$0xf] %v251
    %v254 = vrot.slane %v225, 5
    %v255 = vrot.slane %v227, 5
    %vm256 = vcmp.lt.s32.totalorder %v237, 3
    %v257 = vsel %vm256, %v254, %v255
    %v258 = vsel %vm256, 0.0, %v254
    %v259 = vpack.c.bf16 %v258, %v258
    %v260 = vpack.c.bf16 %v257, %v257
    %261 = vst [vmem:[#allocation2 + $0x8] sm:$0xf] %v259
    %262 = vst [vmem:[#allocation2 + $0x34] sm:$0xf] %v260
    %v263 = vrot.slane %v225, 6
    %v264 = vrot.slane %v227, 6
    %vm265 = vcmp.lt.s32.totalorder %v237, 2
    %v266 = vsel %vm265, %v263, %v264
    %v267 = vsel %vm265, 0.0, %v263
    %v268 = vpack.c.bf16 %v267, %v267
    %v269 = vpack.c.bf16 %v266, %v266
    %270 = vst [vmem:[#allocation2 + $0xc] sm:$0xf] %v268
    %271 = vst [vmem:[#allocation2 + $0x38] sm:$0xf] %v269
    %v272 = vrot.slane %v225, 7
    %v273 = vrot.slane %v227, 7
    %vm274 = vcmp.lt.s32.totalorder %v237, 1
    %v275 = vsel %vm274, %v272, %v273
    %v276 = vsel %vm274, 0.0, %v272
    %v277 = vpack.c.bf16 %v276, %v276
    %v278 = vpack.c.bf16 %v275, %v275
    %279 = vst [vmem:[#allocation2 + $0x10] sm:$0xf] %v277
    %280 = vst [vmem:[#allocation2 + $0x3c] sm:$0xf] %v278
    %v281 = vpack.c.bf16 %v225, %v225
    %v282 = vpack.c.bf16 %v227, %v227
    %283 = vst [vmem:[#allocation2 + $0x14] sm:$0xf] %v281
    %284 = vst [vmem:[#allocation2 + $0x40] sm:$0xf] %v282
    %v285 = vrot.slane %v225, 1
    %v286 = vrot.slane %v227, 1
    %vm287 = vcmp.lt.s32.totalorder %v237, 7
    %v288 = vsel %vm287, %v286, 0.0
    %v289 = vsel %vm287, %v285, %v286
    %v290 = vpack.c.bf16 %v289, %v289
    %v291 = vpack.c.bf16 %v288, %v288
    %292 = vst [vmem:[#allocation2 + $0x18] sm:$0xf] %v290
    %293 = vst [vmem:[#allocation2 + $0x44] sm:$0xf] %v291
    %v294 = vrot.slane %v225, 2
    %v295 = vrot.slane %v227, 2
    %vm296 = vcmp.lt.s32.totalorder %v237, 6
    %v297 = vsel %vm296, %v295, 0.0
    %v298 = vsel %vm296, %v294, %v295
    %v299 = vpack.c.bf16 %v298, %v298
    %v300 = vpack.c.bf16 %v297, %v297
    %301 = vst [vmem:[#allocation2 + $0x1c] sm:$0xf] %v299
    %302 = vst [vmem:[#allocation2 + $0x48] sm:$0xf] %v300
    %v303 = vsel %vm238, %v235, 0.0
    %v304 = vpack.c.bf16 %v303, %v303
    %305 = vst [vmem:[#allocation2 + $0x20] sm:$0xf] %v242
    %306 = vst [vmem:[#allocation2 + $0x4c] sm:$0xf] %v304
    %v307 = vsel %vm247, %v246, 0.0
    %v308 = vpack.c.bf16 %v307, %v307
    %309 = vst [vmem:[#allocation2 + $0x24] sm:$0xf] %v251
    %310 = vst [vmem:[#allocation2 + $0x50] sm:$0xf] %v308
    %v311 = vsel %vm256, %v255, 0.0
    %v312 = vpack.c.bf16 %v311, %v311
    %313 = vst [vmem:[#allocation2 + $0x28] sm:$0xf] %v260
    %314 = vst [vmem:[#allocation2 + $0x54] sm:$0xf] %v312
    %v315 = vrot.slane %v230, 3
    %v316 = vrot.slane %v232, 3
    %v317 = vsel %vm238, %v315, %v316
    %v318 = vsel %vm238, 0.0, %v315
    %v319 = vpack.c.bf16 %v318, %v318
    %v320 = vpack.c.bf16 %v317, %v317
    %321 = vst [vmem:[#allocation2 + $0x58] sm:$0xf] %v319
    %322 = vst [vmem:[#allocation2 + $0x84] sm:$0xf] %v320
    %v323 = vrot.slane %v230, 4
    %v324 = vrot.slane %v232, 4
    %v325 = vsel %vm247, %v323, %v324
    %v326 = vsel %vm247, 0.0, %v323
    %v327 = vpack.c.bf16 %v326, %v326
    %v328 = vpack.c.bf16 %v325, %v325
    %329 = vst [vmem:[#allocation2 + $0x5c] sm:$0xf] %v327
    %330 = vst [vmem:[#allocation2 + $0x88] sm:$0xf] %v328
    %v331 = vrot.slane %v230, 5
    %v332 = vrot.slane %v232, 5
    %v333 = vsel %vm256, %v331, %v332
    %v334 = vsel %vm256, 0.0, %v331
    %v335 = vpack.c.bf16 %v334, %v334
    %v336 = vpack.c.bf16 %v333, %v333
    %337 = vst [vmem:[#allocation2 + $0x60] sm:$0xf] %v335
    %338 = vst [vmem:[#allocation2 + $0x8c] sm:$0xf] %v336
    %v339 = vrot.slane %v230, 6
    %v340 = vrot.slane %v232, 6
    %v341 = vsel %vm265, %v339, %v340
    %v342 = vsel %vm265, 0.0, %v339
    %v343 = vpack.c.bf16 %v342, %v342
    %v344 = vpack.c.bf16 %v341, %v341
    %345 = vst [vmem:[#allocation2 + $0x64] sm:$0xf] %v343
    %346 = vst [vmem:[#allocation2 + $0x90] sm:$0xf] %v344
    %v347 = vrot.slane %v230, 7
    %v348 = vrot.slane %v232, 7
    %v349 = vsel %vm274, %v347, %v348
    %v350 = vsel %vm274, 0.0, %v347
    %v351 = vpack.c.bf16 %v350, %v350
    %v352 = vpack.c.bf16 %v349, %v349
    %353 = vst [vmem:[#allocation2 + $0x68] sm:$0xf] %v351
    %354 = vst [vmem:[#allocation2 + $0x94] sm:$0xf] %v352
    %v355 = vpack.c.bf16 %v230, %v230
    %v356 = vpack.c.bf16 %v232, %v232
    %357 = vst [vmem:[#allocation2 + $0x6c] sm:$0xf] %v355
    %358 = vst [vmem:[#allocation2 + $0x98] sm:$0xf] %v356
    %v359 = vrot.slane %v230, 1
    %v360 = vrot.slane %v232, 1
    %v361 = vsel %vm287, %v360, 0.0
    %v362 = vsel %vm287, %v359, %v360
    %v363 = vpack.c.bf16 %v362, %v362
    %v364 = vpack.c.bf16 %v361, %v361
    %365 = vst [vmem:[#allocation2 + $0x70] sm:$0xf] %v363
    %366 = vst [vmem:[#allocation2 + $0x9c] sm:$0xf] %v364
    %v367 = vrot.slane %v230, 2
    %v368 = vrot.slane %v232, 2
    %v369 = vsel %vm296, %v368, 0.0
    %v370 = vsel %vm296, %v367, %v368
    %v371 = vpack.c.bf16 %v370, %v370
    %v372 = vpack.c.bf16 %v369, %v369
    %373 = vst [vmem:[#allocation2 + $0x74] sm:$0xf] %v371
    %374 = vst [vmem:[#allocation2 + $0xa0] sm:$0xf] %v372
    %v375 = vsel %vm238, %v316, 0.0
    %v376 = vpack.c.bf16 %v375, %v375
    %377 = vst [vmem:[#allocation2 + $0x78] sm:$0xf] %v320
    %378 = vst [vmem:[#allocation2 + $0xa4] sm:$0xf] %v376
    %v379 = vsel %vm247, %v324, 0.0
    %v380 = vpack.c.bf16 %v379, %v379
    %381 = vst [vmem:[#allocation2 + $0x7c] sm:$0xf] %v328
    %382 = vst [vmem:[#allocation2 + $0xa8] sm:$0xf] %v380
    %v383 = vsel %vm256, %v332, 0.0
    %v384 = vpack.c.bf16 %v383, %v383
    %385 = vst [vmem:[#allocation2 + $0x80] sm:$0xf] %v336
    %386 = vst [vmem:[#allocation2 + $0xac] sm:$0xf] %v384
    %v387 = vld [vmem:[#allocation2] sm:$0xff]
    %v388 = vld [vmem:[#allocation2 + $0x8] sm:$0xff]
    %v389 = vld [vmem:[#allocation2 + $0x10] sm:$0xff]
    %v390 = vld [vmem:[#allocation2 + $0x18] sm:$0xff]
    %v391 = vld [vmem:[#allocation2 + $0x20] sm:$0xff]
    %v392 = vld [vmem:[#allocation2 + $0x28] sm:$0xf]
    %v393 = vld [vmem:[#allocation2 + $0x2c] sm:$0xff]
    %v394 = vld [vmem:[#allocation2 + $0x34] sm:$0xff]
    %v395 = vld [vmem:[#allocation2 + $0x3c] sm:$0xff]
    %v396 = vld [vmem:[#allocation2 + $0x44] sm:$0xff]
    %v397 = vld [vmem:[#allocation2 + $0x4c] sm:$0xff]
    %v398 = vld [vmem:[#allocation2 + $0x54] sm:$0xf]
    %v399 = vld [vmem:[#allocation2 + $0x58] sm:$0xff]
    %v400 = vld [vmem:[#allocation2 + $0x60] sm:$0xff]
    %v401 = vld [vmem:[#allocation2 + $0x68] sm:$0xff]
    %v402 = vld [vmem:[#allocation2 + $0x70] sm:$0xff]
    %v403 = vld [vmem:[#allocation2 + $0x78] sm:$0xff]
    %v404 = vld [vmem:[#allocation2 + $0x80] sm:$0xf]
    %v405 = vld [vmem:[#allocation2 + $0x84] sm:$0xff]
    %v406 = vld [vmem:[#allocation2 + $0x8c] sm:$0xff]
    %v407 = vld [vmem:[#allocation2 + $0x94] sm:$0xff]
    %v408 = vld [vmem:[#allocation2 + $0x9c] sm:$0xff]
    %v409 = vld [vmem:[#allocation2 + $0xa4] sm:$0xff]
    %v410 = vld [vmem:[#allocation2 + $0xac] sm:$0xf]
    %v411 = vld [vmem:[#allocation9] sm:$0xff]
    %v412 = vld [vmem:[#allocation9 + $0x8] sm:$0xff]
    %v413 = vld [vmem:[#allocation9 + $0x10] sm:$0xff]
    %v414 = vld [vmem:[#allocation9 + $0x18] sm:$0xff]
    %v415 = vld [vmem:[#allocation9 + $0x20] sm:$0xff]
    %v416 = vld [vmem:[#allocation9 + $0x28] sm:$0xff]
    %v417 = vld [vmem:[#allocation9 + $0x30] sm:$0xff]
    %v418 = vld [vmem:[#allocation9 + $0x38] sm:$0xff]
    %v419 = vld [vmem:[#allocation9 + $0x40] sm:$0xff]
    %v420 = vld [vmem:[#allocation9 + $0x48] sm:$0xff]
    %v421 = vld [vmem:[#allocation9 + $0x50] sm:$0xff]
    %v422 = vld [vmem:[#allocation9 + $0x58] sm:$0xff]
    %v423 = vld [vmem:[#allocation9 + $0x60] sm:$0xff]
    %v424 = vld [vmem:[#allocation9 + $0x68] sm:$0xff]
    %v425 = vld [vmem:[#allocation9 + $0x70] sm:$0xff]
    %v426 = vld [vmem:[#allocation9 + $0x78] sm:$0xff]
    %v427 = vld [vmem:[#allocation9 + $0x80] sm:$0xff]
    %v428 = vld [vmem:[#allocation9 + $0x88] sm:$0xff]
    %v429 = vld [vmem:[#allocation9 + $0x90] sm:$0xff]
    %v430 = vld [vmem:[#allocation9 + $0x98] sm:$0xff]
    %v431 = vld [vmem:[#allocation9 + $0xa0] sm:$0xff]
    %v432 = vld [vmem:[#allocation9 + $0xa8] sm:$0xff]
    %v433 = vld [vmem:[#allocation9 + $0xb0] sm:$0xff]
    %v434 = vld [vmem:[#allocation9 + $0xb8] sm:$0xff]
    %v435 = vld [vmem:[#allocation9 + $0xc0] sm:$0xff]
    %v436 = vld [vmem:[#allocation9 + $0xc8] sm:$0xff]
    %v437 = vld [vmem:[#allocation9 + $0xd0] sm:$0xff]
    %v438 = vld [vmem:[#allocation9 + $0xd8] sm:$0xff]
    %v439 = vld [vmem:[#allocation9 + $0xe0] sm:$0xff]
    %v440 = vld [vmem:[#allocation9 + $0xe8] sm:$0xff]
    %v441 = vld [vmem:[#allocation9 + $0xf0] sm:$0xff]
    %v442 = vld [vmem:[#allocation9 + $0xf8] sm:$0xff]
    %v443 = vld [vmem:[#allocation9 + $0x100] sm:$0xff]
    %v444 = vld [vmem:[#allocation9 + $0x108] sm:$0xff]
    %v445 = vld [vmem:[#allocation9 + $0x110] sm:$0xff]
    %v446 = vld [vmem:[#allocation9 + $0x118] sm:$0xff]
    %v447 = vld [vmem:[#allocation9 + $0x120] sm:$0xff]
    %v448 = vld [vmem:[#allocation9 + $0x128] sm:$0xff]
    %v449 = vld [vmem:[#allocation9 + $0x130] sm:$0xff]
    %v450 = vld [vmem:[#allocation9 + $0x138] sm:$0xff]
    %v451 = vld [vmem:[#allocation9 + $0x140] sm:$0xff]
    %v452 = vld [vmem:[#allocation9 + $0x148] sm:$0xff]
    %v453 = vld [vmem:[#allocation9 + $0x150] sm:$0xff]
    %v454 = vld [vmem:[#allocation9 + $0x158] sm:$0xff]
    %v455 = vld [vmem:[#allocation9 + $0x160] sm:$0xff]
    %v456 = vld [vmem:[#allocation9 + $0x168] sm:$0xff]
    %v457 = vld [vmem:[#allocation9 + $0x170] sm:$0xff]
    %v458 = vld [vmem:[#allocation9 + $0x178] sm:$0xff]
    %v459 = vld [vmem:[#allocation9 + $0x180] sm:$0xff]
    %v460 = vld [vmem:[#allocation9 + $0x188] sm:$0xff]
    %v461 = vld [vmem:[#allocation9 + $0x190] sm:$0xff]
    %v462 = vld [vmem:[#allocation9 + $0x198] sm:$0xff]
    %v463 = vld [vmem:[#allocation9 + $0x1a0] sm:$0xff]
    %v464 = vld [vmem:[#allocation9 + $0x1a8] sm:$0xff]
    %v465 = vld [vmem:[#allocation9 + $0x1b0] sm:$0xff]
    %v466 = vld [vmem:[#allocation9 + $0x1b8] sm:$0xff]
    %v467 = vld [vmem:[#allocation9 + $0x1c0] sm:$0xff]
    %v468 = vld [vmem:[#allocation9 + $0x1c8] sm:$0xff]
    %v469 = vld [vmem:[#allocation9 + $0x1d0] sm:$0xff]
    %v470 = vld [vmem:[#allocation9 + $0x1d8] sm:$0xff]
    %v471 = vld [vmem:[#allocation9 + $0x1e0] sm:$0xff]
    %v472 = vld [vmem:[#allocation9 + $0x1e8] sm:$0xff]
    %v473 = vld [vmem:[#allocation9 + $0x1f0] sm:$0xff]
    %v474 = vld [vmem:[#allocation9 + $0x1f8] sm:$0xff]
    %v475 = vld [vmem:[#allocation9 + $0x200] sm:$0xff]
    %v476 = vld [vmem:[#allocation9 + $0x208] sm:$0xff]
    %v477 = vld [vmem:[#allocation9 + $0x210] sm:$0xff]
    %v478 = vld [vmem:[#allocation9 + $0x218] sm:$0xff]
    %v479 = vld [vmem:[#allocation9 + $0x220] sm:$0xff]
    %v480 = vld [vmem:[#allocation9 + $0x228] sm:$0xff]
    %v481 = vld [vmem:[#allocation9 + $0x230] sm:$0xff]
    %v482 = vld [vmem:[#allocation9 + $0x238] sm:$0xff]
    %v483 = vld [vmem:[#allocation9 + $0x240] sm:$0xff]
    %v484 = vld [vmem:[#allocation9 + $0x248] sm:$0xff]
    %v485 = vld [vmem:[#allocation9 + $0x250] sm:$0xff]
    %v486 = vld [vmem:[#allocation9 + $0x258] sm:$0xff]
    %v487 = vld [vmem:[#allocation9 + $0x260] sm:$0xff]
    %v488 = vld [vmem:[#allocation9 + $0x268] sm:$0xff]
    %v489 = vld [vmem:[#allocation9 + $0x270] sm:$0xff]
    %v490 = vld [vmem:[#allocation9 + $0x278] sm:$0xff]
    %v491 = vld [vmem:[#allocation9 + $0x280] sm:$0xff]
    %v492 = vld [vmem:[#allocation9 + $0x288] sm:$0xff]
    %v493 = vld [vmem:[#allocation9 + $0x290] sm:$0xff]
    %v494 = vld [vmem:[#allocation9 + $0x298] sm:$0xff]
    %v495 = vld [vmem:[#allocation9 + $0x2a0] sm:$0xff]
    %v496 = vld [vmem:[#allocation9 + $0x2a8] sm:$0xff]
    %v497 = vld [vmem:[#allocation9 + $0x2b0] sm:$0xff]
    %v498 = vld [vmem:[#allocation9 + $0x2b8] sm:$0xff]
    %v499 = vld [vmem:[#allocation9 + $0x2c0] sm:$0xff]
    %v500 = vld [vmem:[#allocation9 + $0x2c8] sm:$0xff]
    %v501 = vld [vmem:[#allocation9 + $0x2d0] sm:$0xff]
    %v502 = vld [vmem:[#allocation9 + $0x2d8] sm:$0xff]
    %v503 = vld [vmem:[#allocation9 + $0x2e0] sm:$0xff]
    %v504 = vld [vmem:[#allocation9 + $0x2e8] sm:$0xff]
    %v505 = vld [vmem:[#allocation9 + $0x2f0] sm:$0xff]
    %v506 = vld [vmem:[#allocation9 + $0x2f8] sm:$0xff]
    %v507 = vld [vmem:[#allocation9 + $0x300] sm:$0xff]
    %v508 = vld [vmem:[#allocation9 + $0x308] sm:$0xff]
    %v509 = vld [vmem:[#allocation9 + $0x310] sm:$0xff]
    %v510 = vld [vmem:[#allocation9 + $0x318] sm:$0xff]
    %v511 = vld [vmem:[#allocation9 + $0x320] sm:$0xff]
    %v512 = vld [vmem:[#allocation9 + $0x328] sm:$0xff]
    %v513 = vld [vmem:[#allocation9 + $0x330] sm:$0xff]
    %v514 = vld [vmem:[#allocation9 + $0x338] sm:$0xff]
    %v515 = vld [vmem:[#allocation9 + $0x340] sm:$0xff]
    %v516 = vld [vmem:[#allocation9 + $0x348] sm:$0xff]
    %v517 = vld [vmem:[#allocation9 + $0x350] sm:$0xff]
    %v518 = vld [vmem:[#allocation9 + $0x358] sm:$0xff]
    %v519 = vld [vmem:[#allocation9 + $0x360] sm:$0xff]
    %v520 = vld [vmem:[#allocation9 + $0x368] sm:$0xff]
    %v521 = vld [vmem:[#allocation9 + $0x370] sm:$0xff]
    %v522 = vld [vmem:[#allocation9 + $0x378] sm:$0xff]
    %v523 = vld [vmem:[#allocation9 + $0x380] sm:$0xff]
    %v524 = vld [vmem:[#allocation9 + $0x388] sm:$0xff]
    %v525 = vld [vmem:[#allocation9 + $0x390] sm:$0xff]
    %v526 = vld [vmem:[#allocation9 + $0x398] sm:$0xff]
    %v527 = vld [vmem:[#allocation9 + $0x3a0] sm:$0xff]
    %v528 = vld [vmem:[#allocation9 + $0x3a8] sm:$0xff]
    %v529 = vld [vmem:[#allocation9 + $0x3b0] sm:$0xff]
    %v530 = vld [vmem:[#allocation9 + $0x3b8] sm:$0xff]
    %v531 = vld [vmem:[#allocation9 + $0x3c0] sm:$0xff]
    %v532 = vld [vmem:[#allocation9 + $0x3c8] sm:$0xff]
    %v533 = vld [vmem:[#allocation9 + $0x3d0] sm:$0xff]
    %v534 = vld [vmem:[#allocation9 + $0x3d8] sm:$0xff]
    %v535 = vld [vmem:[#allocation9 + $0x3e0] sm:$0xff]
    %v536 = vld [vmem:[#allocation9 + $0x3e8] sm:$0xff]
    %v537 = vld [vmem:[#allocation9 + $0x3f0] sm:$0xff]
    %v538 = vld [vmem:[#allocation9 + $0x3f8] sm:$0xff]
    %v539 = vld [vmem:[#allocation9 + $0x400] sm:$0xff]
    %v540 = vld [vmem:[#allocation9 + $0x408] sm:$0xff]
    %v541 = vld [vmem:[#allocation9 + $0x410] sm:$0xff]
    %v542 = vld [vmem:[#allocation9 + $0x418] sm:$0xff]
    %v543 = vld [vmem:[#allocation9 + $0x420] sm:$0xff]
    %v544 = vld [vmem:[#allocation9 + $0x428] sm:$0xff]
    %v545 = vld [vmem:[#allocation9 + $0x430] sm:$0xff]
    %v546 = vld [vmem:[#allocation9 + $0x438] sm:$0xff]
    %v547 = vld [vmem:[#allocation9 + $0x440] sm:$0xff]
    %v548 = vld [vmem:[#allocation9 + $0x448] sm:$0xff]
    %v549 = vld [vmem:[#allocation9 + $0x450] sm:$0xff]
    %v550 = vld [vmem:[#allocation9 + $0x458] sm:$0xff]
    %v551 = vld [vmem:[#allocation9 + $0x460] sm:$0xff]
    %v552 = vld [vmem:[#allocation9 + $0x468] sm:$0xff]
    %v553 = vld [vmem:[#allocation9 + $0x470] sm:$0xff]
    %v554 = vld [vmem:[#allocation9 + $0x478] sm:$0xff]
    %v555 = vld [vmem:[#allocation9 + $0x480] sm:$0xff]
    %v556 = vld [vmem:[#allocation9 + $0x488] sm:$0xff]
    %v557 = vld [vmem:[#allocation9 + $0x490] sm:$0xff]
    %v558 = vld [vmem:[#allocation9 + $0x498] sm:$0xff]
    %v559 = vld [vmem:[#allocation9 + $0x4a0] sm:$0xff]
    %v560 = vld [vmem:[#allocation9 + $0x4a8] sm:$0xff]
    %v561 = vld [vmem:[#allocation9 + $0x4b0] sm:$0xff]
    %v562 = vld [vmem:[#allocation9 + $0x4b8] sm:$0xff]
    %v563 = vld [vmem:[#allocation9 + $0x4c0] sm:$0xff]
    %v564 = vld [vmem:[#allocation9 + $0x4c8] sm:$0xff]
    %v565 = vld [vmem:[#allocation9 + $0x4d0] sm:$0xff]
    %v566 = vld [vmem:[#allocation9 + $0x4d8] sm:$0xff]
    %v567 = vld [vmem:[#allocation9 + $0x4e0] sm:$0xff]
    %v568 = vld [vmem:[#allocation9 + $0x4e8] sm:$0xff]
    %v569 = vld [vmem:[#allocation9 + $0x4f0] sm:$0xff]
    %v570 = vld [vmem:[#allocation9 + $0x4f8] sm:$0xff]
    %v571 = vld [vmem:[#allocation9 + $0x500] sm:$0xff]
    %v572 = vld [vmem:[#allocation9 + $0x508] sm:$0xff]
    %v573 = vld [vmem:[#allocation9 + $0x510] sm:$0xff]
    %v574 = vld [vmem:[#allocation9 + $0x518] sm:$0xff]
    %v575 = vld [vmem:[#allocation9 + $0x520] sm:$0xff]
    %v576 = vld [vmem:[#allocation9 + $0x528] sm:$0xff]
    %v577 = vld [vmem:[#allocation9 + $0x530] sm:$0xff]
    %v578 = vld [vmem:[#allocation9 + $0x538] sm:$0xff]
    %v579 = vld [vmem:[#allocation9 + $0x540] sm:$0xff]
    %v580 = vld [vmem:[#allocation9 + $0x548] sm:$0xff]
    %v581 = vld [vmem:[#allocation9 + $0x550] sm:$0xff]
    %v582 = vld [vmem:[#allocation9 + $0x558] sm:$0xff]
    %v583 = vld [vmem:[#allocation9 + $0x560] sm:$0xff]
    %v584 = vld [vmem:[#allocation9 + $0x568] sm:$0xff]
    %v585 = vld [vmem:[#allocation9 + $0x570] sm:$0xff]
    %v586 = vld [vmem:[#allocation9 + $0x578] sm:$0xff]
    %v587 = vld [vmem:[#allocation9 + $0x580] sm:$0xff]
    %v588 = vld [vmem:[#allocation9 + $0x588] sm:$0xff]
    %v589 = vld [vmem:[#allocation9 + $0x590] sm:$0xff]
    %v590 = vld [vmem:[#allocation9 + $0x598] sm:$0xff]
    %v591 = vld [vmem:[#allocation9 + $0x5a0] sm:$0xff]
    %v592 = vld [vmem:[#allocation9 + $0x5a8] sm:$0xff]
    %v593 = vld [vmem:[#allocation9 + $0x5b0] sm:$0xff]
    %v594 = vld [vmem:[#allocation9 + $0x5b8] sm:$0xff]
    %v595 = vld [vmem:[#allocation9 + $0x5c0] sm:$0xff]
    %v596 = vld [vmem:[#allocation9 + $0x5c8] sm:$0xff]
    %v597 = vld [vmem:[#allocation9 + $0x5d0] sm:$0xff]
    %v598 = vld [vmem:[#allocation9 + $0x5d8] sm:$0xff]
    %v599 = vld [vmem:[#allocation9 + $0x5e0] sm:$0xff]
    %v600 = vld [vmem:[#allocation9 + $0x5e8] sm:$0xff]
    %v601 = vld [vmem:[#allocation9 + $0x5f0] sm:$0xff]
    %v602 = vld [vmem:[#allocation9 + $0x5f8] sm:$0xff]
    %v603 = vld [vmem:[#allocation9 + $0x600] sm:$0xff]
    %v604 = vld [vmem:[#allocation9 + $0x608] sm:$0xff]
    %v605 = vld [vmem:[#allocation9 + $0x610] sm:$0xff]
    %v606 = vld [vmem:[#allocation9 + $0x618] sm:$0xff]
    %v607 = vld [vmem:[#allocation9 + $0x620] sm:$0xff]
    %v608 = vld [vmem:[#allocation9 + $0x628] sm:$0xff]
    %v609 = vld [vmem:[#allocation9 + $0x630] sm:$0xff]
    %v610 = vld [vmem:[#allocation9 + $0x638] sm:$0xff]
    %v611 = vld [vmem:[#allocation9 + $0x640] sm:$0xff]
    %v612 = vld [vmem:[#allocation9 + $0x648] sm:$0xff]
    %v613 = vld [vmem:[#allocation9 + $0x650] sm:$0xff]
    %v614 = vld [vmem:[#allocation9 + $0x658] sm:$0xff]
    %v615 = vld [vmem:[#allocation9 + $0x660] sm:$0xff]
    %v616 = vld [vmem:[#allocation9 + $0x668] sm:$0xff]
    %v617 = vld [vmem:[#allocation9 + $0x670] sm:$0xff]
    %v618 = vld [vmem:[#allocation9 + $0x678] sm:$0xff]
    %v619 = vld [vmem:[#allocation9 + $0x680] sm:$0xff]
    %v620 = vld [vmem:[#allocation9 + $0x688] sm:$0xff]
    %v621 = vld [vmem:[#allocation9 + $0x690] sm:$0xff]
    %v622 = vld [vmem:[#allocation9 + $0x698] sm:$0xff]
    %v623 = vld [vmem:[#allocation9 + $0x6a0] sm:$0xff]
    %v624 = vld [vmem:[#allocation9 + $0x6a8] sm:$0xff]
    %v625 = vld [vmem:[#allocation9 + $0x6b0] sm:$0xff]
    %v626 = vld [vmem:[#allocation9 + $0x6b8] sm:$0xff]
    %v627 = vld [vmem:[#allocation9 + $0x6c0] sm:$0xff]
    %v628 = vld [vmem:[#allocation9 + $0x6c8] sm:$0xff]
    %v629 = vld [vmem:[#allocation9 + $0x6d0] sm:$0xff]
    %v630 = vld [vmem:[#allocation9 + $0x6d8] sm:$0xff]
    %v631 = vld [vmem:[#allocation9 + $0x6e0] sm:$0xff]
    %v632 = vld [vmem:[#allocation9 + $0x6e8] sm:$0xff]
    %v633 = vld [vmem:[#allocation9 + $0x6f0] sm:$0xff]
    %v634 = vld [vmem:[#allocation9 + $0x6f8] sm:$0xff]
    %v635 = vld [vmem:[#allocation9 + $0x700] sm:$0xff]
    %v636 = vld [vmem:[#allocation9 + $0x708] sm:$0xff]
    %v637 = vld [vmem:[#allocation9 + $0x710] sm:$0xff]
    %v638 = vld [vmem:[#allocation9 + $0x718] sm:$0xff]
    %v639 = vld [vmem:[#allocation9 + $0x720] sm:$0xff]
    %v640 = vld [vmem:[#allocation9 + $0x728] sm:$0xff]
    %v641 = vld [vmem:[#allocation9 + $0x730] sm:$0xff]
    %v642 = vld [vmem:[#allocation9 + $0x738] sm:$0xff]
    %v643 = vld [vmem:[#allocation9 + $0x740] sm:$0xff]
    %v644 = vld [vmem:[#allocation9 + $0x748] sm:$0xff]
    %v645 = vld [vmem:[#allocation9 + $0x750] sm:$0xff]
    %v646 = vld [vmem:[#allocation9 + $0x758] sm:$0xff]
    %v647 = vld [vmem:[#allocation9 + $0x760] sm:$0xff]
    %v648 = vld [vmem:[#allocation9 + $0x768] sm:$0xff]
    %v649 = vld [vmem:[#allocation9 + $0x770] sm:$0xff]
    %v650 = vld [vmem:[#allocation9 + $0x778] sm:$0xff]
    %v651 = vld [vmem:[#allocation9 + $0x780] sm:$0xff]
    %v652 = vld [vmem:[#allocation9 + $0x788] sm:$0xff]
    %v653 = vld [vmem:[#allocation9 + $0x790] sm:$0xff]
    %v654 = vld [vmem:[#allocation9 + $0x798] sm:$0xff]
    %v655 = vld [vmem:[#allocation9 + $0x7a0] sm:$0xff]
    %v656 = vld [vmem:[#allocation9 + $0x7a8] sm:$0xff]
    %v657 = vld [vmem:[#allocation9 + $0x7b0] sm:$0xff]
    %v658 = vld [vmem:[#allocation9 + $0x7b8] sm:$0xff]
    %v659 = vld [vmem:[#allocation9 + $0x7c0] sm:$0xff]
    %v660 = vld [vmem:[#allocation9 + $0x7c8] sm:$0xff]
    %v661 = vld [vmem:[#allocation9 + $0x7d0] sm:$0xff]
    %v662 = vld [vmem:[#allocation9 + $0x7d8] sm:$0xff]
    %v663 = vld [vmem:[#allocation9 + $0x7e0] sm:$0xff]
    %v664 = vld [vmem:[#allocation9 + $0x7e8] sm:$0xff]
    %v665 = vld [vmem:[#allocation9 + $0x7f0] sm:$0xff]
    %v666 = vld [vmem:[#allocation9 + $0x7f8] sm:$0xff]
    %v667 = vld [vmem:[#allocation9 + $0x800] sm:$0xff]
    %v668 = vld [vmem:[#allocation9 + $0x808] sm:$0xff]
    %v669 = vld [vmem:[#allocation9 + $0x810] sm:$0xff]
    %v670 = vld [vmem:[#allocation9 + $0x818] sm:$0xff]
    %v671 = vld [vmem:[#allocation9 + $0x820] sm:$0xff]
    %v672 = vld [vmem:[#allocation9 + $0x828] sm:$0xff]
    %v673 = vld [vmem:[#allocation9 + $0x830] sm:$0xff]
    %v674 = vld [vmem:[#allocation9 + $0x838] sm:$0xff]
    %v675 = vld [vmem:[#allocation9 + $0x840] sm:$0xff]
    %v676 = vld [vmem:[#allocation9 + $0x848] sm:$0xff]
    %v677 = vld [vmem:[#allocation9 + $0x850] sm:$0xff]
    %v678 = vld [vmem:[#allocation9 + $0x858] sm:$0xff]
    %v679 = vld [vmem:[#allocation9 + $0x860] sm:$0xff]
    %v680 = vld [vmem:[#allocation9 + $0x868] sm:$0xff]
    %v681 = vld [vmem:[#allocation9 + $0x870] sm:$0xff]
    %v682 = vld [vmem:[#allocation9 + $0x878] sm:$0xff]
    %v683 = vld [vmem:[#allocation9 + $0x880] sm:$0xff]
    %v684 = vld [vmem:[#allocation9 + $0x888] sm:$0xff]
    %v685 = vld [vmem:[#allocation9 + $0x890] sm:$0xff]
    %v686 = vld [vmem:[#allocation9 + $0x898] sm:$0xff]
    %v687 = vld [vmem:[#allocation9 + $0x8a0] sm:$0xff]
    %v688 = vld [vmem:[#allocation9 + $0x8a8] sm:$0xff]
    %v689 = vld [vmem:[#allocation9 + $0x8b0] sm:$0xff]
    %v690 = vld [vmem:[#allocation9 + $0x8b8] sm:$0xff]
    %v691 = vld [vmem:[#allocation9 + $0x8c0] sm:$0xff]
    %v692 = vld [vmem:[#allocation9 + $0x8c8] sm:$0xff]
    %v693 = vld [vmem:[#allocation9 + $0x8d0] sm:$0xff]
    %v694 = vld [vmem:[#allocation9 + $0x8d8] sm:$0xff]
    %v695 = vld [vmem:[#allocation9 + $0x8e0] sm:$0xff]
    %v696 = vld [vmem:[#allocation9 + $0x8e8] sm:$0xff]
    %v697 = vld [vmem:[#allocation9 + $0x8f0] sm:$0xff]
    %v698 = vld [vmem:[#allocation9 + $0x8f8] sm:$0xff]
    %v699 = vld [vmem:[#allocation9 + $0x900] sm:$0xff]
    %v700 = vld [vmem:[#allocation9 + $0x908] sm:$0xff]
    %v701 = vld [vmem:[#allocation9 + $0x910] sm:$0xff]
    %v702 = vld [vmem:[#allocation9 + $0x918] sm:$0xff]
    %v703 = vld [vmem:[#allocation9 + $0x920] sm:$0xff]
    %v704 = vld [vmem:[#allocation9 + $0x928] sm:$0xff]
    %v705 = vld [vmem:[#allocation9 + $0x930] sm:$0xff]
    %v706 = vld [vmem:[#allocation9 + $0x938] sm:$0xff]
    %v707 = vld [vmem:[#allocation9 + $0x940] sm:$0xff]
    %v708 = vld [vmem:[#allocation9 + $0x948] sm:$0xff]
    %v709 = vld [vmem:[#allocation9 + $0x950] sm:$0xff]
    %v710 = vld [vmem:[#allocation9 + $0x958] sm:$0xff]
    %v711 = vld [vmem:[#allocation9 + $0x960] sm:$0xff]
    %v712 = vld [vmem:[#allocation9 + $0x968] sm:$0xff]
    %v713 = vld [vmem:[#allocation9 + $0x970] sm:$0xff]
    %v714 = vld [vmem:[#allocation9 + $0x978] sm:$0xff]
    %v715 = vld [vmem:[#allocation9 + $0x980] sm:$0xff]
    %v716 = vld [vmem:[#allocation9 + $0x988] sm:$0xff]
    %v717 = vld [vmem:[#allocation9 + $0x990] sm:$0xff]
    %v718 = vld [vmem:[#allocation9 + $0x998] sm:$0xff]
    %v719 = vld [vmem:[#allocation9 + $0x9a0] sm:$0xff]
    %v720 = vld [vmem:[#allocation9 + $0x9a8] sm:$0xff]
    %v721 = vld [vmem:[#allocation9 + $0x9b0] sm:$0xff]
    %v722 = vld [vmem:[#allocation9 + $0x9b8] sm:$0xff]
    %v723 = vld [vmem:[#allocation9 + $0x9c0] sm:$0xff]
    %v724 = vld [vmem:[#allocation9 + $0x9c8] sm:$0xff]
    %v725 = vld [vmem:[#allocation9 + $0x9d0] sm:$0xff]
    %v726 = vld [vmem:[#allocation9 + $0x9d8] sm:$0xff]
    %v727 = vld [vmem:[#allocation9 + $0x9e0] sm:$0xff]
    %v728 = vld [vmem:[#allocation9 + $0x9e8] sm:$0xff]
    %v729 = vld [vmem:[#allocation9 + $0x9f0] sm:$0xff]
    %v730 = vld [vmem:[#allocation9 + $0x9f8] sm:$0xff]
    %v731 = vld [vmem:[#allocation9 + $0xa00] sm:$0xff]
    %v732 = vld [vmem:[#allocation9 + $0xa08] sm:$0xff]
    %v733 = vld [vmem:[#allocation9 + $0xa10] sm:$0xff]
    %v734 = vld [vmem:[#allocation9 + $0xa18] sm:$0xff]
    %v735 = vld [vmem:[#allocation9 + $0xa20] sm:$0xff]
    %v736 = vld [vmem:[#allocation9 + $0xa28] sm:$0xff]
    %v737 = vld [vmem:[#allocation9 + $0xa30] sm:$0xff]
    %v738 = vld [vmem:[#allocation9 + $0xa38] sm:$0xff]
    %v739 = vld [vmem:[#allocation9 + $0xa40] sm:$0xff]
    %v740 = vld [vmem:[#allocation9 + $0xa48] sm:$0xff]
    %v741 = vld [vmem:[#allocation9 + $0xa50] sm:$0xff]
    %v742 = vld [vmem:[#allocation9 + $0xa58] sm:$0xff]
    %v743 = vld [vmem:[#allocation9 + $0xa60] sm:$0xff]
    %v744 = vld [vmem:[#allocation9 + $0xa68] sm:$0xff]
    %v745 = vld [vmem:[#allocation9 + $0xa70] sm:$0xff]
    %v746 = vld [vmem:[#allocation9 + $0xa78] sm:$0xff]
    %v747 = vld [vmem:[#allocation9 + $0xa80] sm:$0xff]
    %v748 = vld [vmem:[#allocation9 + $0xa88] sm:$0xff]
    %v749 = vld [vmem:[#allocation9 + $0xa90] sm:$0xff]
    %v750 = vld [vmem:[#allocation9 + $0xa98] sm:$0xff]
    %v751 = vld [vmem:[#allocation9 + $0xaa0] sm:$0xff]
    %v752 = vld [vmem:[#allocation9 + $0xaa8] sm:$0xff]
    %v753 = vld [vmem:[#allocation9 + $0xab0] sm:$0xff]
    %v754 = vld [vmem:[#allocation9 + $0xab8] sm:$0xff]
    %v755 = vld [vmem:[#allocation9 + $0xac0] sm:$0xff]
    %v756 = vld [vmem:[#allocation9 + $0xac8] sm:$0xff]
    %v757 = vld [vmem:[#allocation9 + $0xad0] sm:$0xff]
    %v758 = vld [vmem:[#allocation9 + $0xad8] sm:$0xff]
    %v759 = vld [vmem:[#allocation9 + $0xae0] sm:$0xff]
    %v760 = vld [vmem:[#allocation9 + $0xae8] sm:$0xff]
    %v761 = vld [vmem:[#allocation9 + $0xaf0] sm:$0xff]
    %v762 = vld [vmem:[#allocation9 + $0xaf8] sm:$0xff]
    %v763 = vld [vmem:[#allocation11] sm:$0xf]
    %v765 = vperm.slane %v763, 0
    %v766 = vperm.slane %v763, 1
    %v767 = vperm.slane %v763, 2
    %v768 = vperm.slane %v763, 3
    %v797 = vunpack.c.l.b16 %v387
    %v798 = vunpack.c.h.b16 %v387
    %v799 = vunpack.c.l.b16 %v388
    %v800 = vunpack.c.h.b16 %v388
    %v801 = vunpack.c.l.b16 %v389
    %v802 = vunpack.c.h.b16 %v389
    %v803 = vunpack.c.l.b16 %v390
    %v804 = vunpack.c.h.b16 %v390
    %v805 = vunpack.c.l.b16 %v391
    %v806 = vunpack.c.h.b16 %v391
    %v807 = vunpack.c.l.b16 %v392
    %v808 = vunpack.c.l.b16 %v393
    %v809 = vunpack.c.h.b16 %v393
    %v810 = vunpack.c.l.b16 %v394
    %v811 = vunpack.c.h.b16 %v394
    %v812 = vunpack.c.l.b16 %v395
    %v813 = vunpack.c.h.b16 %v395
    %v814 = vunpack.c.l.b16 %v396
    %v815 = vunpack.c.h.b16 %v396
    %v816 = vunpack.c.l.b16 %v397
    %v817 = vunpack.c.h.b16 %v397
    %v818 = vunpack.c.l.b16 %v398
    %v819 = vunpack.c.l.b16 %v399
    %v820 = vunpack.c.h.b16 %v399
    %v821 = vunpack.c.l.b16 %v400
    %v822 = vunpack.c.h.b16 %v400
    %v823 = vunpack.c.l.b16 %v401
    %v824 = vunpack.c.h.b16 %v401
    %v825 = vunpack.c.l.b16 %v402
    %v826 = vunpack.c.h.b16 %v402
    %v827 = vunpack.c.l.b16 %v403
    %v828 = vunpack.c.h.b16 %v403
    %v829 = vunpack.c.l.b16 %v404
    %v830 = vunpack.c.l.b16 %v405
    %v831 = vunpack.c.h.b16 %v405
    %v832 = vunpack.c.l.b16 %v406
    %v833 = vunpack.c.h.b16 %v406
    %v834 = vunpack.c.l.b16 %v407
    %v835 = vunpack.c.h.b16 %v407
    %v836 = vunpack.c.l.b16 %v408
    %v837 = vunpack.c.h.b16 %v408
    %v838 = vunpack.c.l.b16 %v409
    %v839 = vunpack.c.h.b16 %v409
    %v840 = vunpack.c.l.b16 %v410
    %v841 = vpack.c.b16 %v808, %v797
    %v842 = vpack.c.b16 %v809, %v798
    %v843 = vpack.c.b16 %v810, %v799
    %v844 = vpack.c.b16 %v811, %v800
    %v845 = vpack.c.b16 %v812, %v801
    %v846 = vpack.c.b16 %v813, %v802
    %v847 = vpack.c.b16 %v814, %v803
    %v848 = vpack.c.b16 %v815, %v804
    %v849 = vpack.c.b16 %v816, %v805
    %v850 = vpack.c.b16 %v817, %v806
    %v851 = vpack.c.b16 %v818, %v807
    %v852 = vpack.c.b16 %v830, %v819
    %v853 = vpack.c.b16 %v831, %v820
    %v854 = vpack.c.b16 %v832, %v821
    %v855 = vpack.c.b16 %v833, %v822
    %v856 = vpack.c.b16 %v834, %v823
    %v857 = vpack.c.b16 %v835, %v824
    %v858 = vpack.c.b16 %v836, %v825
    %v859 = vpack.c.b16 %v837, %v826
    %v860 = vpack.c.b16 %v838, %v827
    %v861 = vpack.c.b16 %v839, %v828
    %v862 = vpack.c.b16 %v840, %v829
    %v1237 = vunpack.c.l.b16 %v411
    %v1238 = vunpack.c.h.b16 %v411
    %v1239 = vunpack.c.l.b16 %v412
    %v1240 = vunpack.c.h.b16 %v412
    %v1241 = vunpack.c.l.b16 %v413
    %v1242 = vunpack.c.h.b16 %v413
    %v1243 = vunpack.c.l.b16 %v414
    %v1244 = vunpack.c.h.b16 %v414
    %v1245 = vunpack.c.l.b16 %v415
    %v1246 = vunpack.c.h.b16 %v415
    %v1247 = vunpack.c.l.b16 %v416
    %v1248 = vunpack.c.h.b16 %v416
    %v1249 = vunpack.c.l.b16 %v417
    %v1250 = vunpack.c.h.b16 %v417
    %v1251 = vunpack.c.l.b16 %v418
    %v1252 = vunpack.c.h.b16 %v418
    %v1253 = vunpack.c.l.b16 %v419
    %v1254 = vunpack.c.h.b16 %v419
    %v1255 = vunpack.c.l.b16 %v420
    %v1256 = vunpack.c.h.b16 %v420
    %v1257 = vunpack.c.l.b16 %v421
    %v1258 = vunpack.c.h.b16 %v421
    %v1259 = vunpack.c.l.b16 %v422
    %v1260 = vunpack.c.h.b16 %v422
    %v1261 = vunpack.c.l.b16 %v423
    %v1262 = vunpack.c.h.b16 %v423
    %v1263 = vunpack.c.l.b16 %v424
    %v1264 = vunpack.c.h.b16 %v424
    %v1265 = vunpack.c.l.b16 %v425
    %v1266 = vunpack.c.h.b16 %v425
    %v1267 = vunpack.c.l.b16 %v426
    %v1268 = vunpack.c.h.b16 %v426
    %v1269 = vunpack.c.l.b16 %v427
    %v1270 = vunpack.c.h.b16 %v427
    %v1271 = vunpack.c.l.b16 %v428
    %v1272 = vunpack.c.h.b16 %v428
    %v1273 = vunpack.c.l.b16 %v429
    %v1274 = vunpack.c.h.b16 %v429
    %v1275 = vunpack.c.l.b16 %v430
    %v1276 = vunpack.c.h.b16 %v430
    %v1277 = vunpack.c.l.b16 %v431
    %v1278 = vunpack.c.h.b16 %v431
    %v1279 = vunpack.c.l.b16 %v432
    %v1280 = vunpack.c.h.b16 %v432
    %v1281 = vunpack.c.l.b16 %v433
    %v1282 = vunpack.c.h.b16 %v433
    %v1283 = vunpack.c.l.b16 %v434
    %v1284 = vunpack.c.h.b16 %v434
    %v1285 = vunpack.c.l.b16 %v435
    %v1286 = vunpack.c.h.b16 %v435
    %v1287 = vunpack.c.l.b16 %v436
    %v1288 = vunpack.c.h.b16 %v436
    %v1289 = vunpack.c.l.b16 %v437
    %v1290 = vunpack.c.h.b16 %v437
    %v1291 = vunpack.c.l.b16 %v438
    %v1292 = vunpack.c.h.b16 %v438
    %v1293 = vunpack.c.l.b16 %v439
    %v1294 = vunpack.c.h.b16 %v439
    %v1295 = vunpack.c.l.b16 %v440
    %v1296 = vunpack.c.h.b16 %v440
    %v1297 = vunpack.c.l.b16 %v441
    %v1298 = vunpack.c.h.b16 %v441
    %v1299 = vunpack.c.l.b16 %v442
    %v1300 = vunpack.c.h.b16 %v442
    %v1301 = vunpack.c.l.b16 %v443
    %v1302 = vunpack.c.h.b16 %v443
    %v1303 = vunpack.c.l.b16 %v444
    %v1304 = vunpack.c.h.b16 %v444
    %v1305 = vunpack.c.l.b16 %v445
    %v1306 = vunpack.c.h.b16 %v445
    %v1307 = vunpack.c.l.b16 %v446
    %v1308 = vunpack.c.h.b16 %v446
    %v1309 = vunpack.c.l.b16 %v447
    %v1310 = vunpack.c.h.b16 %v447
    %v1311 = vunpack.c.l.b16 %v448
    %v1312 = vunpack.c.h.b16 %v448
    %v1313 = vunpack.c.l.b16 %v449
    %v1314 = vunpack.c.h.b16 %v449
    %v1315 = vunpack.c.l.b16 %v450
    %v1316 = vunpack.c.h.b16 %v450
    %v1317 = vunpack.c.l.b16 %v451
    %v1318 = vunpack.c.h.b16 %v451
    %v1319 = vunpack.c.l.b16 %v452
    %v1320 = vunpack.c.h.b16 %v452
    %v1321 = vunpack.c.l.b16 %v453
    %v1322 = vunpack.c.h.b16 %v453
    %v1323 = vunpack.c.l.b16 %v454
    %v1324 = vunpack.c.h.b16 %v454
    %v1325 = vunpack.c.l.b16 %v455
    %v1326 = vunpack.c.h.b16 %v455
    %v1327 = vunpack.c.l.b16 %v456
    %v1328 = vunpack.c.h.b16 %v456
    %v1329 = vunpack.c.l.b16 %v457
    %v1330 = vunpack.c.h.b16 %v457
    %v1331 = vunpack.c.l.b16 %v458
    %v1332 = vunpack.c.h.b16 %v458
    %v1333 = vunpack.c.l.b16 %v459
    %v1334 = vunpack.c.h.b16 %v459
    %v1335 = vunpack.c.l.b16 %v460
    %v1336 = vunpack.c.h.b16 %v460
    %v1337 = vunpack.c.l.b16 %v461
    %v1338 = vunpack.c.h.b16 %v461
    %v1339 = vunpack.c.l.b16 %v462
    %v1340 = vunpack.c.h.b16 %v462
    %v1341 = vunpack.c.l.b16 %v463
    %v1342 = vunpack.c.h.b16 %v463
    %v1343 = vunpack.c.l.b16 %v464
    %v1344 = vunpack.c.h.b16 %v464
    %v1345 = vunpack.c.l.b16 %v465
    %v1346 = vunpack.c.h.b16 %v465
    %v1347 = vunpack.c.l.b16 %v466
    %v1348 = vunpack.c.h.b16 %v466
    %v1349 = vunpack.c.l.b16 %v467
    %v1350 = vunpack.c.h.b16 %v467
    %v1351 = vunpack.c.l.b16 %v468
    %v1352 = vunpack.c.h.b16 %v468
    %v1353 = vunpack.c.l.b16 %v469
    %v1354 = vunpack.c.h.b16 %v469
    %v1355 = vunpack.c.l.b16 %v470
    %v1356 = vunpack.c.h.b16 %v470
    %v1357 = vunpack.c.l.b16 %v471
    %v1358 = vunpack.c.h.b16 %v471
    %v1359 = vunpack.c.l.b16 %v472
    %v1360 = vunpack.c.h.b16 %v472
    %v1361 = vunpack.c.l.b16 %v473
    %v1362 = vunpack.c.h.b16 %v473
    %v1363 = vunpack.c.l.b16 %v474
    %v1364 = vunpack.c.h.b16 %v474
    %v1365 = vunpack.c.l.b16 %v475
    %v1366 = vunpack.c.h.b16 %v475
    %v1367 = vunpack.c.l.b16 %v476
    %v1368 = vunpack.c.h.b16 %v476
    %v1369 = vunpack.c.l.b16 %v477
    %v1370 = vunpack.c.h.b16 %v477
    %v1371 = vunpack.c.l.b16 %v478
    %v1372 = vunpack.c.h.b16 %v478
    %v1373 = vunpack.c.l.b16 %v479
    %v1374 = vunpack.c.h.b16 %v479
    %v1375 = vunpack.c.l.b16 %v480
    %v1376 = vunpack.c.h.b16 %v480
    %v1377 = vunpack.c.l.b16 %v481
    %v1378 = vunpack.c.h.b16 %v481
    %v1379 = vunpack.c.l.b16 %v482
    %v1380 = vunpack.c.h.b16 %v482
    %v1381 = vunpack.c.l.b16 %v483
    %v1382 = vunpack.c.h.b16 %v483
    %v1383 = vunpack.c.l.b16 %v484
    %v1384 = vunpack.c.h.b16 %v484
    %v1385 = vunpack.c.l.b16 %v485
    %v1386 = vunpack.c.h.b16 %v485
    %v1387 = vunpack.c.l.b16 %v486
    %v1388 = vunpack.c.h.b16 %v486
    %v1389 = vunpack.c.l.b16 %v487
    %v1390 = vunpack.c.h.b16 %v487
    %v1391 = vunpack.c.l.b16 %v488
    %v1392 = vunpack.c.h.b16 %v488
    %v1393 = vunpack.c.l.b16 %v489
    %v1394 = vunpack.c.h.b16 %v489
    %v1395 = vunpack.c.l.b16 %v490
    %v1396 = vunpack.c.h.b16 %v490
    %v1397 = vunpack.c.l.b16 %v491
    %v1398 = vunpack.c.h.b16 %v491
    %v1399 = vunpack.c.l.b16 %v492
    %v1400 = vunpack.c.h.b16 %v492
    %v1401 = vunpack.c.l.b16 %v493
    %v1402 = vunpack.c.h.b16 %v493
    %v1403 = vunpack.c.l.b16 %v494
    %v1404 = vunpack.c.h.b16 %v494
    %v1405 = vunpack.c.l.b16 %v495
    %v1406 = vunpack.c.h.b16 %v495
    %v1407 = vunpack.c.l.b16 %v496
    %v1408 = vunpack.c.h.b16 %v496
    %v1409 = vunpack.c.l.b16 %v497
    %v1410 = vunpack.c.h.b16 %v497
    %v1411 = vunpack.c.l.b16 %v498
    %v1412 = vunpack.c.h.b16 %v498
    %v1413 = vunpack.c.l.b16 %v499
    %v1414 = vunpack.c.h.b16 %v499
    %v1415 = vunpack.c.l.b16 %v500
    %v1416 = vunpack.c.h.b16 %v500
    %v1417 = vunpack.c.l.b16 %v501
    %v1418 = vunpack.c.h.b16 %v501
    %v1419 = vunpack.c.l.b16 %v502
    %v1420 = vunpack.c.h.b16 %v502
    %v1421 = vunpack.c.l.b16 %v503
    %v1422 = vunpack.c.h.b16 %v503
    %v1423 = vunpack.c.l.b16 %v504
    %v1424 = vunpack.c.h.b16 %v504
    %v1425 = vunpack.c.l.b16 %v505
    %v1426 = vunpack.c.h.b16 %v505
    %v1427 = vunpack.c.l.b16 %v506
    %v1428 = vunpack.c.h.b16 %v506
    %v1429 = vunpack.c.l.b16 %v507
    %v1430 = vunpack.c.h.b16 %v507
    %v1431 = vunpack.c.l.b16 %v508
    %v1432 = vunpack.c.h.b16 %v508
    %v1433 = vunpack.c.l.b16 %v509
    %v1434 = vunpack.c.h.b16 %v509
    %v1435 = vunpack.c.l.b16 %v510
    %v1436 = vunpack.c.h.b16 %v510
    %v1437 = vunpack.c.l.b16 %v511
    %v1438 = vunpack.c.h.b16 %v511
    %v1439 = vunpack.c.l.b16 %v512
    %v1440 = vunpack.c.h.b16 %v512
    %v1441 = vunpack.c.l.b16 %v513
    %v1442 = vunpack.c.h.b16 %v513
    %v1443 = vunpack.c.l.b16 %v514
    %v1444 = vunpack.c.h.b16 %v514
    %v1445 = vunpack.c.l.b16 %v515
    %v1446 = vunpack.c.h.b16 %v515
    %v1447 = vunpack.c.l.b16 %v516
    %v1448 = vunpack.c.h.b16 %v516
    %v1449 = vunpack.c.l.b16 %v517
    %v1450 = vunpack.c.h.b16 %v517
    %v1451 = vunpack.c.l.b16 %v518
    %v1452 = vunpack.c.h.b16 %v518
    %v1453 = vunpack.c.l.b16 %v519
    %v1454 = vunpack.c.h.b16 %v519
    %v1455 = vunpack.c.l.b16 %v520
    %v1456 = vunpack.c.h.b16 %v520
    %v1457 = vunpack.c.l.b16 %v521
    %v1458 = vunpack.c.h.b16 %v521
    %v1459 = vunpack.c.l.b16 %v522
    %v1460 = vunpack.c.h.b16 %v522
    %v1461 = vunpack.c.l.b16 %v523
    %v1462 = vunpack.c.h.b16 %v523
    %v1463 = vunpack.c.l.b16 %v524
    %v1464 = vunpack.c.h.b16 %v524
    %v1465 = vunpack.c.l.b16 %v525
    %v1466 = vunpack.c.h.b16 %v525
    %v1467 = vunpack.c.l.b16 %v526
    %v1468 = vunpack.c.h.b16 %v526
    %v1469 = vunpack.c.l.b16 %v527
    %v1470 = vunpack.c.h.b16 %v527
    %v1471 = vunpack.c.l.b16 %v528
    %v1472 = vunpack.c.h.b16 %v528
    %v1473 = vunpack.c.l.b16 %v529
    %v1474 = vunpack.c.h.b16 %v529
    %v1475 = vunpack.c.l.b16 %v530
    %v1476 = vunpack.c.h.b16 %v530
    %v1477 = vunpack.c.l.b16 %v531
    %v1478 = vunpack.c.h.b16 %v531
    %v1479 = vunpack.c.l.b16 %v532
    %v1480 = vunpack.c.h.b16 %v532
    %v1481 = vunpack.c.l.b16 %v533
    %v1482 = vunpack.c.h.b16 %v533
    %v1483 = vunpack.c.l.b16 %v534
    %v1484 = vunpack.c.h.b16 %v534
    %v1485 = vunpack.c.l.b16 %v535
    %v1486 = vunpack.c.h.b16 %v535
    %v1487 = vunpack.c.l.b16 %v536
    %v1488 = vunpack.c.h.b16 %v536
    %v1489 = vunpack.c.l.b16 %v537
    %v1490 = vunpack.c.h.b16 %v537
    %v1491 = vunpack.c.l.b16 %v538
    %v1492 = vunpack.c.h.b16 %v538
    %v1493 = vunpack.c.l.b16 %v539
    %v1494 = vunpack.c.h.b16 %v539
    %v1495 = vunpack.c.l.b16 %v540
    %v1496 = vunpack.c.h.b16 %v540
    %v1497 = vunpack.c.l.b16 %v541
    %v1498 = vunpack.c.h.b16 %v541
    %v1499 = vunpack.c.l.b16 %v542
    %v1500 = vunpack.c.h.b16 %v542
    %v1501 = vunpack.c.l.b16 %v543
    %v1502 = vunpack.c.h.b16 %v543
    %v1503 = vunpack.c.l.b16 %v544
    %v1504 = vunpack.c.h.b16 %v544
    %v1505 = vunpack.c.l.b16 %v545
    %v1506 = vunpack.c.h.b16 %v545
    %v1507 = vunpack.c.l.b16 %v546
    %v1508 = vunpack.c.h.b16 %v546
    %v1509 = vunpack.c.l.b16 %v547
    %v1510 = vunpack.c.h.b16 %v547
    %v1511 = vunpack.c.l.b16 %v548
    %v1512 = vunpack.c.h.b16 %v548
    %v1513 = vunpack.c.l.b16 %v549
    %v1514 = vunpack.c.h.b16 %v549
    %v1515 = vunpack.c.l.b16 %v550
    %v1516 = vunpack.c.h.b16 %v550
    %v1517 = vunpack.c.l.b16 %v551
    %v1518 = vunpack.c.h.b16 %v551
    %v1519 = vunpack.c.l.b16 %v552
    %v1520 = vunpack.c.h.b16 %v552
    %v1521 = vunpack.c.l.b16 %v553
    %v1522 = vunpack.c.h.b16 %v553
    %v1523 = vunpack.c.l.b16 %v554
    %v1524 = vunpack.c.h.b16 %v554
    %v1525 = vunpack.c.l.b16 %v555
    %v1526 = vunpack.c.h.b16 %v555
    %v1527 = vunpack.c.l.b16 %v556
    %v1528 = vunpack.c.h.b16 %v556
    %v1529 = vunpack.c.l.b16 %v557
    %v1530 = vunpack.c.h.b16 %v557
    %v1531 = vunpack.c.l.b16 %v558
    %v1532 = vunpack.c.h.b16 %v558
    %v1533 = vunpack.c.l.b16 %v559
    %v1534 = vunpack.c.h.b16 %v559
    %v1535 = vunpack.c.l.b16 %v560
    %v1536 = vunpack.c.h.b16 %v560
    %v1537 = vunpack.c.l.b16 %v561
    %v1538 = vunpack.c.h.b16 %v561
    %v1539 = vunpack.c.l.b16 %v562
    %v1540 = vunpack.c.h.b16 %v562
    %v1541 = vunpack.c.l.b16 %v563
    %v1542 = vunpack.c.h.b16 %v563
    %v1543 = vunpack.c.l.b16 %v564
    %v1544 = vunpack.c.h.b16 %v564
    %v1545 = vunpack.c.l.b16 %v565
    %v1546 = vunpack.c.h.b16 %v565
    %v1547 = vunpack.c.l.b16 %v566
    %v1548 = vunpack.c.h.b16 %v566
    %v1549 = vunpack.c.l.b16 %v567
    %v1550 = vunpack.c.h.b16 %v567
    %v1551 = vunpack.c.l.b16 %v568
    %v1552 = vunpack.c.h.b16 %v568
    %v1553 = vunpack.c.l.b16 %v569
    %v1554 = vunpack.c.h.b16 %v569
    %v1555 = vunpack.c.l.b16 %v570
    %v1556 = vunpack.c.h.b16 %v570
    %v1557 = vunpack.c.l.b16 %v571
    %v1558 = vunpack.c.h.b16 %v571
    %v1559 = vunpack.c.l.b16 %v572
    %v1560 = vunpack.c.h.b16 %v572
    %v1561 = vunpack.c.l.b16 %v573
    %v1562 = vunpack.c.h.b16 %v573
    %v1563 = vunpack.c.l.b16 %v574
    %v1564 = vunpack.c.h.b16 %v574
    %v1565 = vunpack.c.l.b16 %v575
    %v1566 = vunpack.c.h.b16 %v575
    %v1567 = vunpack.c.l.b16 %v576
    %v1568 = vunpack.c.h.b16 %v576
    %v1569 = vunpack.c.l.b16 %v577
    %v1570 = vunpack.c.h.b16 %v577
    %v1571 = vunpack.c.l.b16 %v578
    %v1572 = vunpack.c.h.b16 %v578
    %v1573 = vunpack.c.l.b16 %v579
    %v1574 = vunpack.c.h.b16 %v579
    %v1575 = vunpack.c.l.b16 %v580
    %v1576 = vunpack.c.h.b16 %v580
    %v1577 = vunpack.c.l.b16 %v581
    %v1578 = vunpack.c.h.b16 %v581
    %v1579 = vunpack.c.l.b16 %v582
    %v1580 = vunpack.c.h.b16 %v582
    %v1581 = vunpack.c.l.b16 %v583
    %v1582 = vunpack.c.h.b16 %v583
    %v1583 = vunpack.c.l.b16 %v584
    %v1584 = vunpack.c.h.b16 %v584
    %v1585 = vunpack.c.l.b16 %v585
    %v1586 = vunpack.c.h.b16 %v585
    %v1587 = vunpack.c.l.b16 %v586
    %v1588 = vunpack.c.h.b16 %v586
    %v1589 = vunpack.c.l.b16 %v587
    %v1590 = vunpack.c.h.b16 %v587
    %v1591 = vunpack.c.l.b16 %v588
    %v1592 = vunpack.c.h.b16 %v588
    %v1593 = vunpack.c.l.b16 %v589
    %v1594 = vunpack.c.h.b16 %v589
    %v1595 = vunpack.c.l.b16 %v590
    %v1596 = vunpack.c.h.b16 %v590
    %v1597 = vunpack.c.l.b16 %v591
    %v1598 = vunpack.c.h.b16 %v591
    %v1599 = vunpack.c.l.b16 %v592
    %v1600 = vunpack.c.h.b16 %v592
    %v1601 = vunpack.c.l.b16 %v593
    %v1602 = vunpack.c.h.b16 %v593
    %v1603 = vunpack.c.l.b16 %v594
    %v1604 = vunpack.c.h.b16 %v594
    %v1605 = vunpack.c.l.b16 %v595
    %v1606 = vunpack.c.h.b16 %v595
    %v1607 = vunpack.c.l.b16 %v596
    %v1608 = vunpack.c.h.b16 %v596
    %v1609 = vunpack.c.l.b16 %v597
    %v1610 = vunpack.c.h.b16 %v597
    %v1611 = vunpack.c.l.b16 %v598
    %v1612 = vunpack.c.h.b16 %v598
    %v1613 = vunpack.c.l.b16 %v599
    %v1614 = vunpack.c.h.b16 %v599
    %v1615 = vunpack.c.l.b16 %v600
    %v1616 = vunpack.c.h.b16 %v600
    %v1617 = vunpack.c.l.b16 %v601
    %v1618 = vunpack.c.h.b16 %v601
    %v1619 = vunpack.c.l.b16 %v602
    %v1620 = vunpack.c.h.b16 %v602
    %v1621 = vunpack.c.l.b16 %v603
    %v1622 = vunpack.c.h.b16 %v603
    %v1623 = vunpack.c.l.b16 %v604
    %v1624 = vunpack.c.h.b16 %v604
    %v1625 = vunpack.c.l.b16 %v605
    %v1626 = vunpack.c.h.b16 %v605
    %v1627 = vunpack.c.l.b16 %v606
    %v1628 = vunpack.c.h.b16 %v606
    %v1629 = vunpack.c.l.b16 %v607
    %v1630 = vunpack.c.h.b16 %v607
    %v1631 = vunpack.c.l.b16 %v608
    %v1632 = vunpack.c.h.b16 %v608
    %v1633 = vunpack.c.l.b16 %v609
    %v1634 = vunpack.c.h.b16 %v609
    %v1635 = vunpack.c.l.b16 %v610
    %v1636 = vunpack.c.h.b16 %v610
    %v1637 = vunpack.c.l.b16 %v611
    %v1638 = vunpack.c.h.b16 %v611
    %v1639 = vunpack.c.l.b16 %v612
    %v1640 = vunpack.c.h.b16 %v612
    %v1641 = vunpack.c.l.b16 %v613
    %v1642 = vunpack.c.h.b16 %v613
    %v1643 = vunpack.c.l.b16 %v614
    %v1644 = vunpack.c.h.b16 %v614
    %v1645 = vunpack.c.l.b16 %v615
    %v1646 = vunpack.c.h.b16 %v615
    %v1647 = vunpack.c.l.b16 %v616
    %v1648 = vunpack.c.h.b16 %v616
    %v1649 = vunpack.c.l.b16 %v617
    %v1650 = vunpack.c.h.b16 %v617
    %v1651 = vunpack.c.l.b16 %v618
    %v1652 = vunpack.c.h.b16 %v618
    %v1653 = vunpack.c.l.b16 %v619
    %v1654 = vunpack.c.h.b16 %v619
    %v1655 = vunpack.c.l.b16 %v620
    %v1656 = vunpack.c.h.b16 %v620
    %v1657 = vunpack.c.l.b16 %v621
    %v1658 = vunpack.c.h.b16 %v621
    %v1659 = vunpack.c.l.b16 %v622
    %v1660 = vunpack.c.h.b16 %v622
    %v1661 = vunpack.c.l.b16 %v623
    %v1662 = vunpack.c.h.b16 %v623
    %v1663 = vunpack.c.l.b16 %v624
    %v1664 = vunpack.c.h.b16 %v624
    %v1665 = vunpack.c.l.b16 %v625
    %v1666 = vunpack.c.h.b16 %v625
    %v1667 = vunpack.c.l.b16 %v626
    %v1668 = vunpack.c.h.b16 %v626
    %v1669 = vunpack.c.l.b16 %v627
    %v1670 = vunpack.c.h.b16 %v627
    %v1671 = vunpack.c.l.b16 %v628
    %v1672 = vunpack.c.h.b16 %v628
    %v1673 = vunpack.c.l.b16 %v629
    %v1674 = vunpack.c.h.b16 %v629
    %v1675 = vunpack.c.l.b16 %v630
    %v1676 = vunpack.c.h.b16 %v630
    %v1677 = vunpack.c.l.b16 %v631
    %v1678 = vunpack.c.h.b16 %v631
    %v1679 = vunpack.c.l.b16 %v632
    %v1680 = vunpack.c.h.b16 %v632
    %v1681 = vunpack.c.l.b16 %v633
    %v1682 = vunpack.c.h.b16 %v633
    %v1683 = vunpack.c.l.b16 %v634
    %v1684 = vunpack.c.h.b16 %v634
    %v1685 = vunpack.c.l.b16 %v635
    %v1686 = vunpack.c.h.b16 %v635
    %v1687 = vunpack.c.l.b16 %v636
    %v1688 = vunpack.c.h.b16 %v636
    %v1689 = vunpack.c.l.b16 %v637
    %v1690 = vunpack.c.h.b16 %v637
    %v1691 = vunpack.c.l.b16 %v638
    %v1692 = vunpack.c.h.b16 %v638
    %v1693 = vunpack.c.l.b16 %v639
    %v1694 = vunpack.c.h.b16 %v639
    %v1695 = vunpack.c.l.b16 %v640
    %v1696 = vunpack.c.h.b16 %v640
    %v1697 = vunpack.c.l.b16 %v641
    %v1698 = vunpack.c.h.b16 %v641
    %v1699 = vunpack.c.l.b16 %v642
    %v1700 = vunpack.c.h.b16 %v642
    %v1701 = vunpack.c.l.b16 %v643
    %v1702 = vunpack.c.h.b16 %v643
    %v1703 = vunpack.c.l.b16 %v644
    %v1704 = vunpack.c.h.b16 %v644
    %v1705 = vunpack.c.l.b16 %v645
    %v1706 = vunpack.c.h.b16 %v645
    %v1707 = vunpack.c.l.b16 %v646
    %v1708 = vunpack.c.h.b16 %v646
    %v1709 = vunpack.c.l.b16 %v647
    %v1710 = vunpack.c.h.b16 %v647
    %v1711 = vunpack.c.l.b16 %v648
    %v1712 = vunpack.c.h.b16 %v648
    %v1713 = vunpack.c.l.b16 %v649
    %v1714 = vunpack.c.h.b16 %v649
    %v1715 = vunpack.c.l.b16 %v650
    %v1716 = vunpack.c.h.b16 %v650
    %v1717 = vunpack.c.l.b16 %v651
    %v1718 = vunpack.c.h.b16 %v651
    %v1719 = vunpack.c.l.b16 %v652
    %v1720 = vunpack.c.h.b16 %v652
    %v1721 = vunpack.c.l.b16 %v653
    %v1722 = vunpack.c.h.b16 %v653
    %v1723 = vunpack.c.l.b16 %v654
    %v1724 = vunpack.c.h.b16 %v654
    %v1725 = vunpack.c.l.b16 %v655
    %v1726 = vunpack.c.h.b16 %v655
    %v1727 = vunpack.c.l.b16 %v656
    %v1728 = vunpack.c.h.b16 %v656
    %v1729 = vunpack.c.l.b16 %v657
    %v1730 = vunpack.c.h.b16 %v657
    %v1731 = vunpack.c.l.b16 %v658
    %v1732 = vunpack.c.h.b16 %v658
    %v1733 = vunpack.c.l.b16 %v659
    %v1734 = vunpack.c.h.b16 %v659
    %v1735 = vunpack.c.l.b16 %v660
    %v1736 = vunpack.c.h.b16 %v660
    %v1737 = vunpack.c.l.b16 %v661
    %v1738 = vunpack.c.h.b16 %v661
    %v1739 = vunpack.c.l.b16 %v662
    %v1740 = vunpack.c.h.b16 %v662
    %v1741 = vunpack.c.l.b16 %v663
    %v1742 = vunpack.c.h.b16 %v663
    %v1743 = vunpack.c.l.b16 %v664
    %v1744 = vunpack.c.h.b16 %v664
    %v1745 = vunpack.c.l.b16 %v665
    %v1746 = vunpack.c.h.b16 %v665
    %v1747 = vunpack.c.l.b16 %v666
    %v1748 = vunpack.c.h.b16 %v666
    %v1749 = vunpack.c.l.b16 %v667
    %v1750 = vunpack.c.h.b16 %v667
    %v1751 = vunpack.c.l.b16 %v668
    %v1752 = vunpack.c.h.b16 %v668
    %v1753 = vunpack.c.l.b16 %v669
    %v1754 = vunpack.c.h.b16 %v669
    %v1755 = vunpack.c.l.b16 %v670
    %v1756 = vunpack.c.h.b16 %v670
    %v1757 = vunpack.c.l.b16 %v671
    %v1758 = vunpack.c.h.b16 %v671
    %v1759 = vunpack.c.l.b16 %v672
    %v1760 = vunpack.c.h.b16 %v672
    %v1761 = vunpack.c.l.b16 %v673
    %v1762 = vunpack.c.h.b16 %v673
    %v1763 = vunpack.c.l.b16 %v674
    %v1764 = vunpack.c.h.b16 %v674
    %v1765 = vunpack.c.l.b16 %v675
    %v1766 = vunpack.c.h.b16 %v675
    %v1767 = vunpack.c.l.b16 %v676
    %v1768 = vunpack.c.h.b16 %v676
    %v1769 = vunpack.c.l.b16 %v677
    %v1770 = vunpack.c.h.b16 %v677
    %v1771 = vunpack.c.l.b16 %v678
    %v1772 = vunpack.c.h.b16 %v678
    %v1773 = vunpack.c.l.b16 %v679
    %v1774 = vunpack.c.h.b16 %v679
    %v1775 = vunpack.c.l.b16 %v680
    %v1776 = vunpack.c.h.b16 %v680
    %v1777 = vunpack.c.l.b16 %v681
    %v1778 = vunpack.c.h.b16 %v681
    %v1779 = vunpack.c.l.b16 %v682
    %v1780 = vunpack.c.h.b16 %v682
    %v1781 = vunpack.c.l.b16 %v683
    %v1782 = vunpack.c.h.b16 %v683
    %v1783 = vunpack.c.l.b16 %v684
    %v1784 = vunpack.c.h.b16 %v684
    %v1785 = vunpack.c.l.b16 %v685
    %v1786 = vunpack.c.h.b16 %v685
    %v1787 = vunpack.c.l.b16 %v686
    %v1788 = vunpack.c.h.b16 %v686
    %v1789 = vunpack.c.l.b16 %v687
    %v1790 = vunpack.c.h.b16 %v687
    %v1791 = vunpack.c.l.b16 %v688
    %v1792 = vunpack.c.h.b16 %v688
    %v1793 = vunpack.c.l.b16 %v689
    %v1794 = vunpack.c.h.b16 %v689
    %v1795 = vunpack.c.l.b16 %v690
    %v1796 = vunpack.c.h.b16 %v690
    %v1797 = vunpack.c.l.b16 %v691
    %v1798 = vunpack.c.h.b16 %v691
    %v1799 = vunpack.c.l.b16 %v692
    %v1800 = vunpack.c.h.b16 %v692
    %v1801 = vunpack.c.l.b16 %v693
    %v1802 = vunpack.c.h.b16 %v693
    %v1803 = vunpack.c.l.b16 %v694
    %v1804 = vunpack.c.h.b16 %v694
    %v1805 = vunpack.c.l.b16 %v695
    %v1806 = vunpack.c.h.b16 %v695
    %v1807 = vunpack.c.l.b16 %v696
    %v1808 = vunpack.c.h.b16 %v696
    %v1809 = vunpack.c.l.b16 %v697
    %v1810 = vunpack.c.h.b16 %v697
    %v1811 = vunpack.c.l.b16 %v698
    %v1812 = vunpack.c.h.b16 %v698
    %v1813 = vunpack.c.l.b16 %v699
    %v1814 = vunpack.c.h.b16 %v699
    %v1815 = vunpack.c.l.b16 %v700
    %v1816 = vunpack.c.h.b16 %v700
    %v1817 = vunpack.c.l.b16 %v701
    %v1818 = vunpack.c.h.b16 %v701
    %v1819 = vunpack.c.l.b16 %v702
    %v1820 = vunpack.c.h.b16 %v702
    %v1821 = vunpack.c.l.b16 %v703
    %v1822 = vunpack.c.h.b16 %v703
    %v1823 = vunpack.c.l.b16 %v704
    %v1824 = vunpack.c.h.b16 %v704
    %v1825 = vunpack.c.l.b16 %v705
    %v1826 = vunpack.c.h.b16 %v705
    %v1827 = vunpack.c.l.b16 %v706
    %v1828 = vunpack.c.h.b16 %v706
    %v1829 = vunpack.c.l.b16 %v707
    %v1830 = vunpack.c.h.b16 %v707
    %v1831 = vunpack.c.l.b16 %v708
    %v1832 = vunpack.c.h.b16 %v708
    %v1833 = vunpack.c.l.b16 %v709
    %v1834 = vunpack.c.h.b16 %v709
    %v1835 = vunpack.c.l.b16 %v710
    %v1836 = vunpack.c.h.b16 %v710
    %v1837 = vunpack.c.l.b16 %v711
    %v1838 = vunpack.c.h.b16 %v711
    %v1839 = vunpack.c.l.b16 %v712
    %v1840 = vunpack.c.h.b16 %v712
    %v1841 = vunpack.c.l.b16 %v713
    %v1842 = vunpack.c.h.b16 %v713
    %v1843 = vunpack.c.l.b16 %v714
    %v1844 = vunpack.c.h.b16 %v714
    %v1845 = vunpack.c.l.b16 %v715
    %v1846 = vunpack.c.h.b16 %v715
    %v1847 = vunpack.c.l.b16 %v716
    %v1848 = vunpack.c.h.b16 %v716
    %v1849 = vunpack.c.l.b16 %v717
    %v1850 = vunpack.c.h.b16 %v717
    %v1851 = vunpack.c.l.b16 %v718
    %v1852 = vunpack.c.h.b16 %v718
    %v1853 = vunpack.c.l.b16 %v719
    %v1854 = vunpack.c.h.b16 %v719
    %v1855 = vunpack.c.l.b16 %v720
    %v1856 = vunpack.c.h.b16 %v720
    %v1857 = vunpack.c.l.b16 %v721
    %v1858 = vunpack.c.h.b16 %v721
    %v1859 = vunpack.c.l.b16 %v722
    %v1860 = vunpack.c.h.b16 %v722
    %v1861 = vunpack.c.l.b16 %v723
    %v1862 = vunpack.c.h.b16 %v723
    %v1863 = vunpack.c.l.b16 %v724
    %v1864 = vunpack.c.h.b16 %v724
    %v1865 = vunpack.c.l.b16 %v725
    %v1866 = vunpack.c.h.b16 %v725
    %v1867 = vunpack.c.l.b16 %v726
    %v1868 = vunpack.c.h.b16 %v726
    %v1869 = vunpack.c.l.b16 %v727
    %v1870 = vunpack.c.h.b16 %v727
    %v1871 = vunpack.c.l.b16 %v728
    %v1872 = vunpack.c.h.b16 %v728
    %v1873 = vunpack.c.l.b16 %v729
    %v1874 = vunpack.c.h.b16 %v729
    %v1875 = vunpack.c.l.b16 %v730
    %v1876 = vunpack.c.h.b16 %v730
    %v1877 = vunpack.c.l.b16 %v731
    %v1878 = vunpack.c.h.b16 %v731
    %v1879 = vunpack.c.l.b16 %v732
    %v1880 = vunpack.c.h.b16 %v732
    %v1881 = vunpack.c.l.b16 %v733
    %v1882 = vunpack.c.h.b16 %v733
    %v1883 = vunpack.c.l.b16 %v734
    %v1884 = vunpack.c.h.b16 %v734
    %v1885 = vunpack.c.l.b16 %v735
    %v1886 = vunpack.c.h.b16 %v735
    %v1887 = vunpack.c.l.b16 %v736
    %v1888 = vunpack.c.h.b16 %v736
    %v1889 = vunpack.c.l.b16 %v737
    %v1890 = vunpack.c.h.b16 %v737
    %v1891 = vunpack.c.l.b16 %v738
    %v1892 = vunpack.c.h.b16 %v738
    %v1893 = vunpack.c.l.b16 %v739
    %v1894 = vunpack.c.h.b16 %v739
    %v1895 = vunpack.c.l.b16 %v740
    %v1896 = vunpack.c.h.b16 %v740
    %v1897 = vunpack.c.l.b16 %v741
    %v1898 = vunpack.c.h.b16 %v741
    %v1899 = vunpack.c.l.b16 %v742
    %v1900 = vunpack.c.h.b16 %v742
    %v1901 = vunpack.c.l.b16 %v743
    %v1902 = vunpack.c.h.b16 %v743
    %v1903 = vunpack.c.l.b16 %v744
    %v1904 = vunpack.c.h.b16 %v744
    %v1905 = vunpack.c.l.b16 %v745
    %v1906 = vunpack.c.h.b16 %v745
    %v1907 = vunpack.c.l.b16 %v746
    %v1908 = vunpack.c.h.b16 %v746
    %v1909 = vunpack.c.l.b16 %v747
    %v1910 = vunpack.c.h.b16 %v747
    %v1911 = vunpack.c.l.b16 %v748
    %v1912 = vunpack.c.h.b16 %v748
    %v1913 = vunpack.c.l.b16 %v749
    %v1914 = vunpack.c.h.b16 %v749
    %v1915 = vunpack.c.l.b16 %v750
    %v1916 = vunpack.c.h.b16 %v750
    %v1917 = vunpack.c.l.b16 %v751
    %v1918 = vunpack.c.h.b16 %v751
    %v1919 = vunpack.c.l.b16 %v752
    %v1920 = vunpack.c.h.b16 %v752
    %v1921 = vunpack.c.l.b16 %v753
    %v1922 = vunpack.c.h.b16 %v753
    %v1923 = vunpack.c.l.b16 %v754
    %v1924 = vunpack.c.h.b16 %v754
    %v1925 = vunpack.c.l.b16 %v755
    %v1926 = vunpack.c.h.b16 %v755
    %v1927 = vunpack.c.l.b16 %v756
    %v1928 = vunpack.c.h.b16 %v756
    %v1929 = vunpack.c.l.b16 %v757
    %v1930 = vunpack.c.h.b16 %v757
    %v1931 = vunpack.c.l.b16 %v758
    %v1932 = vunpack.c.h.b16 %v758
    %v1933 = vunpack.c.l.b16 %v759
    %v1934 = vunpack.c.h.b16 %v759
    %v1935 = vunpack.c.l.b16 %v760
    %v1936 = vunpack.c.h.b16 %v760
    %v1937 = vunpack.c.l.b16 %v761
    %v1938 = vunpack.c.h.b16 %v761
    %v1939 = vunpack.c.l.b16 %v762
    %v1940 = vunpack.c.h.b16 %v762
    %v1941 = vpack.c.b16 %v1241, %v1237
    %v1942 = vpack.c.b16 %v1242, %v1238
    %v1943 = vpack.c.b16 %v1243, %v1239
    %v1944 = vpack.c.b16 %v1244, %v1240
    %v1945 = vpack.c.b16 %v1249, %v1245
    %v1946 = vpack.c.b16 %v1250, %v1246
    %v1947 = vpack.c.b16 %v1251, %v1247
    %v1948 = vpack.c.b16 %v1252, %v1248
    %v1949 = vpack.c.b16 %v1257, %v1253
    %v1950 = vpack.c.b16 %v1258, %v1254
    %v1951 = vpack.c.b16 %v1259, %v1255
    %v1952 = vpack.c.b16 %v1260, %v1256
    %v1953 = vpack.c.b16 %v1265, %v1261
    %v1954 = vpack.c.b16 %v1266, %v1262
    %v1955 = vpack.c.b16 %v1267, %v1263
    %v1956 = vpack.c.b16 %v1268, %v1264
    %v1957 = vpack.c.b16 %v1273, %v1269
    %v1958 = vpack.c.b16 %v1274, %v1270
    %v1959 = vpack.c.b16 %v1275, %v1271
    %v1960 = vpack.c.b16 %v1276, %v1272
    %v1961 = vpack.c.b16 %v1281, %v1277
    %v1962 = vpack.c.b16 %v1282, %v1278
    %v1963 = vpack.c.b16 %v1283, %v1279
    %v1964 = vpack.c.b16 %v1284, %v1280
    %v1965 = vpack.c.b16 %v1289, %v1285
    %v1966 = vpack.c.b16 %v1290, %v1286
    %v1967 = vpack.c.b16 %v1291, %v1287
    %v1968 = vpack.c.b16 %v1292, %v1288
    %v1969 = vpack.c.b16 %v1297, %v1293
    %v1970 = vpack.c.b16 %v1298, %v1294
    %v1971 = vpack.c.b16 %v1299, %v1295
    %v1972 = vpack.c.b16 %v1300, %v1296
    %v1973 = vpack.c.b16 %v1305, %v1301
    %v1974 = vpack.c.b16 %v1306, %v1302
    %v1975 = vpack.c.b16 %v1307, %v1303
    %v1976 = vpack.c.b16 %v1308, %v1304
    %v1977 = vpack.c.b16 %v1313, %v1309
    %v1978 = vpack.c.b16 %v1314, %v1310
    %v1979 = vpack.c.b16 %v1315, %v1311
    %v1980 = vpack.c.b16 %v1316, %v1312
    %v1981 = vpack.c.b16 %v1321, %v1317
    %v1982 = vpack.c.b16 %v1322, %v1318
    %v1983 = vpack.c.b16 %v1323, %v1319
    %v1984 = vpack.c.b16 %v1324, %v1320
    %v1985 = vpack.c.b16 %v1329, %v1325
    %v1986 = vpack.c.b16 %v1330, %v1326
    %v1987 = vpack.c.b16 %v1331, %v1327
    %v1988 = vpack.c.b16 %v1332, %v1328
    %v1989 = vpack.c.b16 %v1337, %v1333
    %v1990 = vpack.c.b16 %v1338, %v1334
    %v1991 = vpack.c.b16 %v1339, %v1335
    %v1992 = vpack.c.b16 %v1340, %v1336
    %v1993 = vpack.c.b16 %v1345, %v1341
    %v1994 = vpack.c.b16 %v1346, %v1342
    %v1995 = vpack.c.b16 %v1347, %v1343
    %v1996 = vpack.c.b16 %v1348, %v1344
    %v1997 = vpack.c.b16 %v1353, %v1349
    %v1998 = vpack.c.b16 %v1354, %v1350
    %v1999 = vpack.c.b16 %v1355, %v1351
    %v2000 = vpack.c.b16 %v1356, %v1352
    %v2001 = vpack.c.b16 %v1361, %v1357
    %v2002 = vpack.c.b16 %v1362, %v1358
    %v2003 = vpack.c.b16 %v1363, %v1359
    %v2004 = vpack.c.b16 %v1364, %v1360
    %v2005 = vpack.c.b16 %v1369, %v1365
    %v2006 = vpack.c.b16 %v1370, %v1366
    %v2007 = vpack.c.b16 %v1371, %v1367
    %v2008 = vpack.c.b16 %v1372, %v1368
    %v2009 = vpack.c.b16 %v1377, %v1373
    %v2010 = vpack.c.b16 %v1378, %v1374
    %v2011 = vpack.c.b16 %v1379, %v1375
    %v2012 = vpack.c.b16 %v1380, %v1376
    %v2013 = vpack.c.b16 %v1385, %v1381
    %v2014 = vpack.c.b16 %v1386, %v1382
    %v2015 = vpack.c.b16 %v1387, %v1383
    %v2016 = vpack.c.b16 %v1388, %v1384
    %v2017 = vpack.c.b16 %v1393, %v1389
    %v2018 = vpack.c.b16 %v1394, %v1390
    %v2019 = vpack.c.b16 %v1395, %v1391
    %v2020 = vpack.c.b16 %v1396, %v1392
    %v2021 = vpack.c.b16 %v1401, %v1397
    %v2022 = vpack.c.b16 %v1402, %v1398
    %v2023 = vpack.c.b16 %v1403, %v1399
    %v2024 = vpack.c.b16 %v1404, %v1400
    %v2025 = vpack.c.b16 %v1409, %v1405
    %v2026 = vpack.c.b16 %v1410, %v1406
    %v2027 = vpack.c.b16 %v1411, %v1407
    %v2028 = vpack.c.b16 %v1412, %v1408
    %v2029 = vpack.c.b16 %v1417, %v1413
    %v2030 = vpack.c.b16 %v1418, %v1414
    %v2031 = vpack.c.b16 %v1419, %v1415
    %v2032 = vpack.c.b16 %v1420, %v1416
    %v2033 = vpack.c.b16 %v1425, %v1421
    %v2034 = vpack.c.b16 %v1426, %v1422
    %v2035 = vpack.c.b16 %v1427, %v1423
    %v2036 = vpack.c.b16 %v1428, %v1424
    %v2037 = vpack.c.b16 %v1433, %v1429
    %v2038 = vpack.c.b16 %v1434, %v1430
    %v2039 = vpack.c.b16 %v1435, %v1431
    %v2040 = vpack.c.b16 %v1436, %v1432
    %v2041 = vpack.c.b16 %v1441, %v1437
    %v2042 = vpack.c.b16 %v1442, %v1438
    %v2043 = vpack.c.b16 %v1443, %v1439
    %v2044 = vpack.c.b16 %v1444, %v1440
    %v2045 = vpack.c.b16 %v1449, %v1445
    %v2046 = vpack.c.b16 %v1450, %v1446
    %v2047 = vpack.c.b16 %v1451, %v1447
    %v2048 = vpack.c.b16 %v1452, %v1448
    %v2049 = vpack.c.b16 %v1457, %v1453
    %v2050 = vpack.c.b16 %v1458, %v1454
    %v2051 = vpack.c.b16 %v1459, %v1455
    %v2052 = vpack.c.b16 %v1460, %v1456
    %v2053 = vpack.c.b16 %v1465, %v1461
    %v2054 = vpack.c.b16 %v1466, %v1462
    %v2055 = vpack.c.b16 %v1467, %v1463
    %v2056 = vpack.c.b16 %v1468, %v1464
    %v2057 = vpack.c.b16 %v1473, %v1469
    %v2058 = vpack.c.b16 %v1474, %v1470
    %v2059 = vpack.c.b16 %v1475, %v1471
    %v2060 = vpack.c.b16 %v1476, %v1472
    %v2061 = vpack.c.b16 %v1481, %v1477
    %v2062 = vpack.c.b16 %v1482, %v1478
    %v2063 = vpack.c.b16 %v1483, %v1479
    %v2064 = vpack.c.b16 %v1484, %v1480
    %v2065 = vpack.c.b16 %v1489, %v1485
    %v2066 = vpack.c.b16 %v1490, %v1486
    %v2067 = vpack.c.b16 %v1491, %v1487
    %v2068 = vpack.c.b16 %v1492, %v1488
    %v2069 = vpack.c.b16 %v1497, %v1493
    %v2070 = vpack.c.b16 %v1498, %v1494
    %v2071 = vpack.c.b16 %v1499, %v1495
    %v2072 = vpack.c.b16 %v1500, %v1496
    %v2073 = vpack.c.b16 %v1505, %v1501
    %v2074 = vpack.c.b16 %v1506, %v1502
    %v2075 = vpack.c.b16 %v1507, %v1503
    %v2076 = vpack.c.b16 %v1508, %v1504
    %v2077 = vpack.c.b16 %v1513, %v1509
    %v2078 = vpack.c.b16 %v1514, %v1510
    %v2079 = vpack.c.b16 %v1515, %v1511
    %v2080 = vpack.c.b16 %v1516, %v1512
    %v2081 = vpack.c.b16 %v1521, %v1517
    %v2082 = vpack.c.b16 %v1522, %v1518
    %v2083 = vpack.c.b16 %v1523, %v1519
    %v2084 = vpack.c.b16 %v1524, %v1520
    %v2085 = vpack.c.b16 %v1529, %v1525
    %v2086 = vpack.c.b16 %v1530, %v1526
    %v2087 = vpack.c.b16 %v1531, %v1527
    %v2088 = vpack.c.b16 %v1532, %v1528
    %v2089 = vpack.c.b16 %v1537, %v1533
    %v2090 = vpack.c.b16 %v1538, %v1534
    %v2091 = vpack.c.b16 %v1539, %v1535
    %v2092 = vpack.c.b16 %v1540, %v1536
    %v2093 = vpack.c.b16 %v1545, %v1541
    %v2094 = vpack.c.b16 %v1546, %v1542
    %v2095 = vpack.c.b16 %v1547, %v1543
    %v2096 = vpack.c.b16 %v1548, %v1544
    %v2097 = vpack.c.b16 %v1553, %v1549
    %v2098 = vpack.c.b16 %v1554, %v1550
    %v2099 = vpack.c.b16 %v1555, %v1551
    %v2100 = vpack.c.b16 %v1556, %v1552
    %v2101 = vpack.c.b16 %v1561, %v1557
    %v2102 = vpack.c.b16 %v1562, %v1558
    %v2103 = vpack.c.b16 %v1563, %v1559
    %v2104 = vpack.c.b16 %v1564, %v1560
    %v2105 = vpack.c.b16 %v1569, %v1565
    %v2106 = vpack.c.b16 %v1570, %v1566
    %v2107 = vpack.c.b16 %v1571, %v1567
    %v2108 = vpack.c.b16 %v1572, %v1568
    %v2109 = vpack.c.b16 %v1577, %v1573
    %v2110 = vpack.c.b16 %v1578, %v1574
    %v2111 = vpack.c.b16 %v1579, %v1575
    %v2112 = vpack.c.b16 %v1580, %v1576
    %v2113 = vpack.c.b16 %v1585, %v1581
    %v2114 = vpack.c.b16 %v1586, %v1582
    %v2115 = vpack.c.b16 %v1587, %v1583
    %v2116 = vpack.c.b16 %v1588, %v1584
    %v2117 = vpack.c.b16 %v1593, %v1589
    %v2118 = vpack.c.b16 %v1594, %v1590
    %v2119 = vpack.c.b16 %v1595, %v1591
    %v2120 = vpack.c.b16 %v1596, %v1592
    %v2121 = vpack.c.b16 %v1601, %v1597
    %v2122 = vpack.c.b16 %v1602, %v1598
    %v2123 = vpack.c.b16 %v1603, %v1599
    %v2124 = vpack.c.b16 %v1604, %v1600
    %v2125 = vpack.c.b16 %v1609, %v1605
    %v2126 = vpack.c.b16 %v1610, %v1606
    %v2127 = vpack.c.b16 %v1611, %v1607
    %v2128 = vpack.c.b16 %v1612, %v1608
    %v2129 = vpack.c.b16 %v1617, %v1613
    %v2130 = vpack.c.b16 %v1618, %v1614
    %v2131 = vpack.c.b16 %v1619, %v1615
    %v2132 = vpack.c.b16 %v1620, %v1616
    %v2133 = vpack.c.b16 %v1625, %v1621
    %v2134 = vpack.c.b16 %v1626, %v1622
    %v2135 = vpack.c.b16 %v1627, %v1623
    %v2136 = vpack.c.b16 %v1628, %v1624
    %v2137 = vpack.c.b16 %v1633, %v1629
    %v2138 = vpack.c.b16 %v1634, %v1630
    %v2139 = vpack.c.b16 %v1635, %v1631
    %v2140 = vpack.c.b16 %v1636, %v1632
    %v2141 = vpack.c.b16 %v1641, %v1637
    %v2142 = vpack.c.b16 %v1642, %v1638
    %v2143 = vpack.c.b16 %v1643, %v1639
    %v2144 = vpack.c.b16 %v1644, %v1640
    %v2145 = vpack.c.b16 %v1649, %v1645
    %v2146 = vpack.c.b16 %v1650, %v1646
    %v2147 = vpack.c.b16 %v1651, %v1647
    %v2148 = vpack.c.b16 %v1652, %v1648
    %v2149 = vpack.c.b16 %v1657, %v1653
    %v2150 = vpack.c.b16 %v1658, %v1654
    %v2151 = vpack.c.b16 %v1659, %v1655
    %v2152 = vpack.c.b16 %v1660, %v1656
    %v2153 = vpack.c.b16 %v1665, %v1661
    %v2154 = vpack.c.b16 %v1666, %v1662
    %v2155 = vpack.c.b16 %v1667, %v1663
    %v2156 = vpack.c.b16 %v1668, %v1664
    %v2157 = vpack.c.b16 %v1673, %v1669
    %v2158 = vpack.c.b16 %v1674, %v1670
    %v2159 = vpack.c.b16 %v1675, %v1671
    %v2160 = vpack.c.b16 %v1676, %v1672
    %v2161 = vpack.c.b16 %v1681, %v1677
    %v2162 = vpack.c.b16 %v1682, %v1678
    %v2163 = vpack.c.b16 %v1683, %v1679
    %v2164 = vpack.c.b16 %v1684, %v1680
    %v2165 = vpack.c.b16 %v1689, %v1685
    %v2166 = vpack.c.b16 %v1690, %v1686
    %v2167 = vpack.c.b16 %v1691, %v1687
    %v2168 = vpack.c.b16 %v1692, %v1688
    %v2169 = vpack.c.b16 %v1697, %v1693
    %v2170 = vpack.c.b16 %v1698, %v1694
    %v2171 = vpack.c.b16 %v1699, %v1695
    %v2172 = vpack.c.b16 %v1700, %v1696
    %v2173 = vpack.c.b16 %v1705, %v1701
    %v2174 = vpack.c.b16 %v1706, %v1702
    %v2175 = vpack.c.b16 %v1707, %v1703
    %v2176 = vpack.c.b16 %v1708, %v1704
    %v2177 = vpack.c.b16 %v1713, %v1709
    %v2178 = vpack.c.b16 %v1714, %v1710
    %v2179 = vpack.c.b16 %v1715, %v1711
    %v2180 = vpack.c.b16 %v1716, %v1712
    %v2181 = vpack.c.b16 %v1721, %v1717
    %v2182 = vpack.c.b16 %v1722, %v1718
    %v2183 = vpack.c.b16 %v1723, %v1719
    %v2184 = vpack.c.b16 %v1724, %v1720
    %v2185 = vpack.c.b16 %v1729, %v1725
    %v2186 = vpack.c.b16 %v1730, %v1726
    %v2187 = vpack.c.b16 %v1731, %v1727
    %v2188 = vpack.c.b16 %v1732, %v1728
    %v2189 = vpack.c.b16 %v1737, %v1733
    %v2190 = vpack.c.b16 %v1738, %v1734
    %v2191 = vpack.c.b16 %v1739, %v1735
    %v2192 = vpack.c.b16 %v1740, %v1736
    %v2193 = vpack.c.b16 %v1745, %v1741
    %v2194 = vpack.c.b16 %v1746, %v1742
    %v2195 = vpack.c.b16 %v1747, %v1743
    %v2196 = vpack.c.b16 %v1748, %v1744
    %v2197 = vpack.c.b16 %v1753, %v1749
    %v2198 = vpack.c.b16 %v1754, %v1750
    %v2199 = vpack.c.b16 %v1755, %v1751
    %v2200 = vpack.c.b16 %v1756, %v1752
    %v2201 = vpack.c.b16 %v1761, %v1757
    %v2202 = vpack.c.b16 %v1762, %v1758
    %v2203 = vpack.c.b16 %v1763, %v1759
    %v2204 = vpack.c.b16 %v1764, %v1760
    %v2205 = vpack.c.b16 %v1769, %v1765
    %v2206 = vpack.c.b16 %v1770, %v1766
    %v2207 = vpack.c.b16 %v1771, %v1767
    %v2208 = vpack.c.b16 %v1772, %v1768
    %v2209 = vpack.c.b16 %v1777, %v1773
    %v2210 = vpack.c.b16 %v1778, %v1774
    %v2211 = vpack.c.b16 %v1779, %v1775
    %v2212 = vpack.c.b16 %v1780, %v1776
    %v2213 = vpack.c.b16 %v1785, %v1781
    %v2214 = vpack.c.b16 %v1786, %v1782
    %v2215 = vpack.c.b16 %v1787, %v1783
    %v2216 = vpack.c.b16 %v1788, %v1784
    %v2217 = vpack.c.b16 %v1793, %v1789
    %v2218 = vpack.c.b16 %v1794, %v1790
    %v2219 = vpack.c.b16 %v1795, %v1791
    %v2220 = vpack.c.b16 %v1796, %v1792
    %v2221 = vpack.c.b16 %v1801, %v1797
    %v2222 = vpack.c.b16 %v1802, %v1798
    %v2223 = vpack.c.b16 %v1803, %v1799
    %v2224 = vpack.c.b16 %v1804, %v1800
    %v2225 = vpack.c.b16 %v1809, %v1805
    %v2226 = vpack.c.b16 %v1810, %v1806
    %v2227 = vpack.c.b16 %v1811, %v1807
    %v2228 = vpack.c.b16 %v1812, %v1808
    %v2229 = vpack.c.b16 %v1817, %v1813
    %v2230 = vpack.c.b16 %v1818, %v1814
    %v2231 = vpack.c.b16 %v1819, %v1815
    %v2232 = vpack.c.b16 %v1820, %v1816
    %v2233 = vpack.c.b16 %v1825, %v1821
    %v2234 = vpack.c.b16 %v1826, %v1822
    %v2235 = vpack.c.b16 %v1827, %v1823
    %v2236 = vpack.c.b16 %v1828, %v1824
    %v2237 = vpack.c.b16 %v1833, %v1829
    %v2238 = vpack.c.b16 %v1834, %v1830
    %v2239 = vpack.c.b16 %v1835, %v1831
    %v2240 = vpack.c.b16 %v1836, %v1832
    %v2241 = vpack.c.b16 %v1841, %v1837
    %v2242 = vpack.c.b16 %v1842, %v1838
    %v2243 = vpack.c.b16 %v1843, %v1839
    %v2244 = vpack.c.b16 %v1844, %v1840
    %v2245 = vpack.c.b16 %v1849, %v1845
    %v2246 = vpack.c.b16 %v1850, %v1846
    %v2247 = vpack.c.b16 %v1851, %v1847
    %v2248 = vpack.c.b16 %v1852, %v1848
    %v2249 = vpack.c.b16 %v1857, %v1853
    %v2250 = vpack.c.b16 %v1858, %v1854
    %v2251 = vpack.c.b16 %v1859, %v1855
    %v2252 = vpack.c.b16 %v1860, %v1856
    %v2253 = vpack.c.b16 %v1865, %v1861
    %v2254 = vpack.c.b16 %v1866, %v1862
    %v2255 = vpack.c.b16 %v1867, %v1863
    %v2256 = vpack.c.b16 %v1868, %v1864
    %v2257 = vpack.c.b16 %v1873, %v1869
    %v2258 = vpack.c.b16 %v1874, %v1870
    %v2259 = vpack.c.b16 %v1875, %v1871
    %v2260 = vpack.c.b16 %v1876, %v1872
    %v2261 = vpack.c.b16 %v1881, %v1877
    %v2262 = vpack.c.b16 %v1882, %v1878
    %v2263 = vpack.c.b16 %v1883, %v1879
    %v2264 = vpack.c.b16 %v1884, %v1880
    %v2265 = vpack.c.b16 %v1889, %v1885
    %v2266 = vpack.c.b16 %v1890, %v1886
    %v2267 = vpack.c.b16 %v1891, %v1887
    %v2268 = vpack.c.b16 %v1892, %v1888
    %v2269 = vpack.c.b16 %v1897, %v1893
    %v2270 = vpack.c.b16 %v1898, %v1894
    %v2271 = vpack.c.b16 %v1899, %v1895
    %v2272 = vpack.c.b16 %v1900, %v1896
    %v2273 = vpack.c.b16 %v1905, %v1901
    %v2274 = vpack.c.b16 %v1906, %v1902
    %v2275 = vpack.c.b16 %v1907, %v1903
    %v2276 = vpack.c.b16 %v1908, %v1904
    %v2277 = vpack.c.b16 %v1913, %v1909
    %v2278 = vpack.c.b16 %v1914, %v1910
    %v2279 = vpack.c.b16 %v1915, %v1911
    %v2280 = vpack.c.b16 %v1916, %v1912
    %v2281 = vpack.c.b16 %v1921, %v1917
    %v2282 = vpack.c.b16 %v1922, %v1918
    %v2283 = vpack.c.b16 %v1923, %v1919
    %v2284 = vpack.c.b16 %v1924, %v1920
    %v2285 = vpack.c.b16 %v1929, %v1925
    %v2286 = vpack.c.b16 %v1930, %v1926
    %v2287 = vpack.c.b16 %v1931, %v1927
    %v2288 = vpack.c.b16 %v1932, %v1928
    %v2289 = vpack.c.b16 %v1937, %v1933
    %v2290 = vpack.c.b16 %v1938, %v1934
    %v2291 = vpack.c.b16 %v1939, %v1935
    %v2292 = vpack.c.b16 %v1940, %v1936
    %2645 = vmatpush.bf16.msra.mxu0 %v1969
    %2646 = vmatpush.bf16.msra.mxu0 %v1965
    %2647 = vmatpush.bf16.msra.mxu0 %v1961
    %2648 = vmatpush.bf16.msra.mxu0 %v1957
    %2649 = vmatpush.bf16.msra.mxu0 %v1953
    %2650 = vmatpush.bf16.msra.mxu0 %v1949
    %2651 = vmatpush.bf16.msra.mxu0 %v1945
    %2652 = vmatpush.bf16.msra.mxu0 %v1941
    %2653 = vmatmul.bf16.gmra.mxu0 %v841
    %v2654 = vpop.f32.mrf.mxu0
    %v2655 = vadd.f32 %v765, %v2654
    %v2656 = vpop.f32.mrf.mxu0
    %v2657 = vadd.f32 %v765, %v2656
    %2658 = vmatmul.bf16.gmra.mxu0 %v852
    %v2659 = vpop.f32.mrf.mxu0
    %v2660 = vadd.f32 %v765, %v2659
    %v2661 = vpop.f32.mrf.mxu0
    %v2662 = vadd.f32 %v765, %v2661
    %2663 = vdwg.mxu0
    %2664 = vmatpush.bf16.msra.mxu0 %v2001
    %2665 = vmatpush.bf16.msra.mxu0 %v1997
    %2666 = vmatpush.bf16.msra.mxu0 %v1993
    %2667 = vmatpush.bf16.msra.mxu0 %v1989
    %2668 = vmatpush.bf16.msra.mxu0 %v1985
    %2669 = vmatpush.bf16.msra.mxu0 %v1981
    %2670 = vmatpush.bf16.msra.mxu0 %v1977
    %2671 = vmatpush.bf16.msra.mxu0 %v1973
    %2672 = vmatmul.bf16.gmra.mxu0 %v842
    %v2673 = vpop.f32.mrf.mxu0
    %v2674 = vadd.f32 %v2655, %v2673
    %v2675 = vpop.f32.mrf.mxu0
    %v2676 = vadd.f32 %v2657, %v2675
    %2677 = vmatmul.bf16.gmra.mxu0 %v853
    %v2678 = vpop.f32.mrf.mxu0
    %v2679 = vadd.f32 %v2660, %v2678
    %v2680 = vpop.f32.mrf.mxu0
    %v2681 = vadd.f32 %v2662, %v2680
    %2682 = vdwg.mxu0
    %2683 = vmatpush.bf16.msra.mxu0 %v2033
    %2684 = vmatpush.bf16.msra.mxu0 %v2029
    %2685 = vmatpush.bf16.msra.mxu0 %v2025
    %2686 = vmatpush.bf16.msra.mxu0 %v2021
    %2687 = vmatpush.bf16.msra.mxu0 %v2017
    %2688 = vmatpush.bf16.msra.mxu0 %v2013
    %2689 = vmatpush.bf16.msra.mxu0 %v2009
    %2690 = vmatpush.bf16.msra.mxu0 %v2005
    %2691 = vmatmul.bf16.gmra.mxu0 %v843
    %v2692 = vpop.f32.mrf.mxu0
    %v2693 = vadd.f32 %v2674, %v2692
    %v2694 = vpop.f32.mrf.mxu0
    %v2695 = vadd.f32 %v2676, %v2694
    %2696 = vmatmul.bf16.gmra.mxu0 %v854
    %v2697 = vpop.f32.mrf.mxu0
    %v2698 = vadd.f32 %v2679, %v2697
    %v2699 = vpop.f32.mrf.mxu0
    %v2700 = vadd.f32 %v2681, %v2699
    %2701 = vdwg.mxu0
    %2702 = vmatpush.bf16.msra.mxu0 %v2065
    %2703 = vmatpush.bf16.msra.mxu0 %v2061
    %2704 = vmatpush.bf16.msra.mxu0 %v2057
    %2705 = vmatpush.bf16.msra.mxu0 %v2053
    %2706 = vmatpush.bf16.msra.mxu0 %v2049
    %2707 = vmatpush.bf16.msra.mxu0 %v2045
    %2708 = vmatpush.bf16.msra.mxu0 %v2041
    %2709 = vmatpush.bf16.msra.mxu0 %v2037
    %2710 = vmatmul.bf16.gmra.mxu0 %v844
    %v2711 = vpop.f32.mrf.mxu0
    %v2712 = vadd.f32 %v2693, %v2711
    %v2713 = vpop.f32.mrf.mxu0
    %v2714 = vadd.f32 %v2695, %v2713
    %2715 = vmatmul.bf16.gmra.mxu0 %v855
    %v2716 = vpop.f32.mrf.mxu0
    %v2717 = vadd.f32 %v2698, %v2716
    %v2718 = vpop.f32.mrf.mxu0
    %v2719 = vadd.f32 %v2700, %v2718
    %2720 = vdwg.mxu0
    %2721 = vmatpush.bf16.msra.mxu0 %v2097
    %2722 = vmatpush.bf16.msra.mxu0 %v2093
    %2723 = vmatpush.bf16.msra.mxu0 %v2089
    %2724 = vmatpush.bf16.msra.mxu0 %v2085
    %2725 = vmatpush.bf16.msra.mxu0 %v2081
    %2726 = vmatpush.bf16.msra.mxu0 %v2077
    %2727 = vmatpush.bf16.msra.mxu0 %v2073
    %2728 = vmatpush.bf16.msra.mxu0 %v2069
    %2729 = vmatmul.bf16.gmra.mxu0 %v845
    %v2730 = vpop.f32.mrf.mxu0
    %v2731 = vadd.f32 %v2712, %v2730
    %v2732 = vpop.f32.mrf.mxu0
    %v2733 = vadd.f32 %v2714, %v2732
    %2734 = vmatmul.bf16.gmra.mxu0 %v856
    %v2735 = vpop.f32.mrf.mxu0
    %v2736 = vadd.f32 %v2717, %v2735
    %v2737 = vpop.f32.mrf.mxu0
    %v2738 = vadd.f32 %v2719, %v2737
    %2739 = vdwg.mxu0
    %2740 = vmatpush.bf16.msra.mxu0 %v2129
    %2741 = vmatpush.bf16.msra.mxu0 %v2125
    %2742 = vmatpush.bf16.msra.mxu0 %v2121
    %2743 = vmatpush.bf16.msra.mxu0 %v2117
    %2744 = vmatpush.bf16.msra.mxu0 %v2113
    %2745 = vmatpush.bf16.msra.mxu0 %v2109
    %2746 = vmatpush.bf16.msra.mxu0 %v2105
    %2747 = vmatpush.bf16.msra.mxu0 %v2101
    %2748 = vmatmul.bf16.gmra.mxu0 %v846
    %v2749 = vpop.f32.mrf.mxu0
    %v2750 = vadd.f32 %v2731, %v2749
    %v2751 = vpop.f32.mrf.mxu0
    %v2752 = vadd.f32 %v2733, %v2751
    %2753 = vmatmul.bf16.gmra.mxu0 %v857
    %v2754 = vpop.f32.mrf.mxu0
    %v2755 = vadd.f32 %v2736, %v2754
    %v2756 = vpop.f32.mrf.mxu0
    %v2757 = vadd.f32 %v2738, %v2756
    %2758 = vdwg.mxu0
    %2759 = vmatpush.bf16.msra.mxu0 %v2161
    %2760 = vmatpush.bf16.msra.mxu0 %v2157
    %2761 = vmatpush.bf16.msra.mxu0 %v2153
    %2762 = vmatpush.bf16.msra.mxu0 %v2149
    %2763 = vmatpush.bf16.msra.mxu0 %v2145
    %2764 = vmatpush.bf16.msra.mxu0 %v2141
    %2765 = vmatpush.bf16.msra.mxu0 %v2137
    %2766 = vmatpush.bf16.msra.mxu0 %v2133
    %2767 = vmatmul.bf16.gmra.mxu0 %v847
    %v2768 = vpop.f32.mrf.mxu0
    %v2769 = vadd.f32 %v2750, %v2768
    %v2770 = vpop.f32.mrf.mxu0
    %v2771 = vadd.f32 %v2752, %v2770
    %2772 = vmatmul.bf16.gmra.mxu0 %v858
    %v2773 = vpop.f32.mrf.mxu0
    %v2774 = vadd.f32 %v2755, %v2773
    %v2775 = vpop.f32.mrf.mxu0
    %v2776 = vadd.f32 %v2757, %v2775
    %2777 = vdwg.mxu0
    %2778 = vmatpush.bf16.msra.mxu0 %v2193
    %2779 = vmatpush.bf16.msra.mxu0 %v2189
    %2780 = vmatpush.bf16.msra.mxu0 %v2185
    %2781 = vmatpush.bf16.msra.mxu0 %v2181
    %2782 = vmatpush.bf16.msra.mxu0 %v2177
    %2783 = vmatpush.bf16.msra.mxu0 %v2173
    %2784 = vmatpush.bf16.msra.mxu0 %v2169
    %2785 = vmatpush.bf16.msra.mxu0 %v2165
    %2786 = vmatmul.bf16.gmra.mxu0 %v848
    %v2787 = vpop.f32.mrf.mxu0
    %v2788 = vadd.f32 %v2769, %v2787
    %v2789 = vpop.f32.mrf.mxu0
    %v2790 = vadd.f32 %v2771, %v2789
    %2791 = vmatmul.bf16.gmra.mxu0 %v859
    %v2792 = vpop.f32.mrf.mxu0
    %v2793 = vadd.f32 %v2774, %v2792
    %v2794 = vpop.f32.mrf.mxu0
    %v2795 = vadd.f32 %v2776, %v2794
    %2796 = vdwg.mxu0
    %2797 = vmatpush.bf16.msra.mxu0 %v2225
    %2798 = vmatpush.bf16.msra.mxu0 %v2221
    %2799 = vmatpush.bf16.msra.mxu0 %v2217
    %2800 = vmatpush.bf16.msra.mxu0 %v2213
    %2801 = vmatpush.bf16.msra.mxu0 %v2209
    %2802 = vmatpush.bf16.msra.mxu0 %v2205
    %2803 = vmatpush.bf16.msra.mxu0 %v2201
    %2804 = vmatpush.bf16.msra.mxu0 %v2197
    %2805 = vmatmul.bf16.gmra.mxu0 %v849
    %v2806 = vpop.f32.mrf.mxu0
    %v2807 = vadd.f32 %v2788, %v2806
    %v2808 = vpop.f32.mrf.mxu0
    %v2809 = vadd.f32 %v2790, %v2808
    %2810 = vmatmul.bf16.gmra.mxu0 %v860
    %v2811 = vpop.f32.mrf.mxu0
    %v2812 = vadd.f32 %v2793, %v2811
    %v2813 = vpop.f32.mrf.mxu0
    %v2814 = vadd.f32 %v2795, %v2813
    %2815 = vdwg.mxu0
    %2816 = vmatpush.bf16.msra.mxu0 %v2257
    %2817 = vmatpush.bf16.msra.mxu0 %v2253
    %2818 = vmatpush.bf16.msra.mxu0 %v2249
    %2819 = vmatpush.bf16.msra.mxu0 %v2245
    %2820 = vmatpush.bf16.msra.mxu0 %v2241
    %2821 = vmatpush.bf16.msra.mxu0 %v2237
    %2822 = vmatpush.bf16.msra.mxu0 %v2233
    %2823 = vmatpush.bf16.msra.mxu0 %v2229
    %2824 = vmatmul.bf16.gmra.mxu0 %v850
    %v2825 = vpop.f32.mrf.mxu0
    %v2826 = vadd.f32 %v2807, %v2825
    %v2827 = vpop.f32.mrf.mxu0
    %v2828 = vadd.f32 %v2809, %v2827
    %2829 = vmatmul.bf16.gmra.mxu0 %v861
    %v2830 = vpop.f32.mrf.mxu0
    %v2831 = vadd.f32 %v2812, %v2830
    %v2832 = vpop.f32.mrf.mxu0
    %v2833 = vadd.f32 %v2814, %v2832
    %2834 = vdwg.mxu0
    %2835 = vmatpush.bf16.msra.mxu0 %v2289
    %2836 = vmatpush.bf16.msra.mxu0 %v2285
    %2837 = vmatpush.bf16.msra.mxu0 %v2281
    %2838 = vmatpush.bf16.msra.mxu0 %v2277
    %2839 = vmatpush.bf16.msra.mxu0 %v2273
    %2840 = vmatpush.bf16.msra.mxu0 %v2269
    %2841 = vmatpush.bf16.msra.mxu0 %v2265
    %2842 = vmatpush.bf16.msra.mxu0 %v2261
    %2843 = vmatmul.bf16.gmra.mxu0 %v851
    %v2844 = vpop.f32.mrf.mxu0
    %v2845 = vadd.f32 %v2826, %v2844
    %v2846 = vpop.f32.mrf.mxu0
    %v2847 = vadd.f32 %v2828, %v2846
    %2848 = vmatmul.bf16.gmra.mxu0 %v862
    %v2849 = vpop.f32.mrf.mxu0
    %v2850 = vadd.f32 %v2831, %v2849
    %v2851 = vpop.f32.mrf.mxu0
    %v2852 = vadd.f32 %v2833, %v2851
    %2853 = vdwg.mxu0
    %2854 = vmatpush.bf16.msra.mxu0 %v1970
    %2855 = vmatpush.bf16.msra.mxu0 %v1966
    %2856 = vmatpush.bf16.msra.mxu0 %v1962
    %2857 = vmatpush.bf16.msra.mxu0 %v1958
    %2858 = vmatpush.bf16.msra.mxu0 %v1954
    %2859 = vmatpush.bf16.msra.mxu0 %v1950
    %2860 = vmatpush.bf16.msra.mxu0 %v1946
    %2861 = vmatpush.bf16.msra.mxu0 %v1942
    %2862 = vmatmul.bf16.gmra.mxu0 %v841
    %v2863 = vpop.f32.mrf.mxu0
    %v2864 = vadd.f32 %v766, %v2863
    %v2865 = vpop.f32.mrf.mxu0
    %v2866 = vadd.f32 %v766, %v2865
    %2867 = vmatmul.bf16.gmra.mxu0 %v852
    %v2868 = vpop.f32.mrf.mxu0
    %v2869 = vadd.f32 %v766, %v2868
    %v2870 = vpop.f32.mrf.mxu0
    %v2871 = vadd.f32 %v766, %v2870
    %2872 = vdwg.mxu0
    %2873 = vmatpush.bf16.msra.mxu0 %v2002
    %2874 = vmatpush.bf16.msra.mxu0 %v1998
    %2875 = vmatpush.bf16.msra.mxu0 %v1994
    %2876 = vmatpush.bf16.msra.mxu0 %v1990
    %2877 = vmatpush.bf16.msra.mxu0 %v1986
    %2878 = vmatpush.bf16.msra.mxu0 %v1982
    %2879 = vmatpush.bf16.msra.mxu0 %v1978
    %2880 = vmatpush.bf16.msra.mxu0 %v1974
    %2881 = vmatmul.bf16.gmra.mxu0 %v842
    %v2882 = vpop.f32.mrf.mxu0
    %v2883 = vadd.f32 %v2864, %v2882
    %v2884 = vpop.f32.mrf.mxu0
    %v2885 = vadd.f32 %v2866, %v2884
    %2886 = vmatmul.bf16.gmra.mxu0 %v853
    %v2887 = vpop.f32.mrf.mxu0
    %v2888 = vadd.f32 %v2869, %v2887
    %v2889 = vpop.f32.mrf.mxu0
    %v2890 = vadd.f32 %v2871, %v2889
    %2891 = vdwg.mxu0
    %2892 = vmatpush.bf16.msra.mxu0 %v2034
    %2893 = vmatpush.bf16.msra.mxu0 %v2030
    %2894 = vmatpush.bf16.msra.mxu0 %v2026
    %2895 = vmatpush.bf16.msra.mxu0 %v2022
    %2896 = vmatpush.bf16.msra.mxu0 %v2018
    %2897 = vmatpush.bf16.msra.mxu0 %v2014
    %2898 = vmatpush.bf16.msra.mxu0 %v2010
    %2899 = vmatpush.bf16.msra.mxu0 %v2006
    %2900 = vmatmul.bf16.gmra.mxu0 %v843
    %v2901 = vpop.f32.mrf.mxu0
    %v2902 = vadd.f32 %v2883, %v2901
    %v2903 = vpop.f32.mrf.mxu0
    %v2904 = vadd.f32 %v2885, %v2903
    %2905 = vmatmul.bf16.gmra.mxu0 %v854
    %v2906 = vpop.f32.mrf.mxu0
    %v2907 = vadd.f32 %v2888, %v2906
    %v2908 = vpop.f32.mrf.mxu0
    %v2909 = vadd.f32 %v2890, %v2908
    %2910 = vdwg.mxu0
    %2911 = vmatpush.bf16.msra.mxu0 %v2066
    %2912 = vmatpush.bf16.msra.mxu0 %v2062
    %2913 = vmatpush.bf16.msra.mxu0 %v2058
    %2914 = vmatpush.bf16.msra.mxu0 %v2054
    %2915 = vmatpush.bf16.msra.mxu0 %v2050
    %2916 = vmatpush.bf16.msra.mxu0 %v2046
    %2917 = vmatpush.bf16.msra.mxu0 %v2042
    %2918 = vmatpush.bf16.msra.mxu0 %v2038
    %2919 = vmatmul.bf16.gmra.mxu0 %v844
    %v2920 = vpop.f32.mrf.mxu0
    %v2921 = vadd.f32 %v2902, %v2920
    %v2922 = vpop.f32.mrf.mxu0
    %v2923 = vadd.f32 %v2904, %v2922
    %2924 = vmatmul.bf16.gmra.mxu0 %v855
    %v2925 = vpop.f32.mrf.mxu0
    %v2926 = vadd.f32 %v2907, %v2925
    %v2927 = vpop.f32.mrf.mxu0
    %v2928 = vadd.f32 %v2909, %v2927
    %2929 = vdwg.mxu0
    %2930 = vmatpush.bf16.msra.mxu0 %v2098
    %2931 = vmatpush.bf16.msra.mxu0 %v2094
    %2932 = vmatpush.bf16.msra.mxu0 %v2090
    %2933 = vmatpush.bf16.msra.mxu0 %v2086
    %2934 = vmatpush.bf16.msra.mxu0 %v2082
    %2935 = vmatpush.bf16.msra.mxu0 %v2078
    %2936 = vmatpush.bf16.msra.mxu0 %v2074
    %2937 = vmatpush.bf16.msra.mxu0 %v2070
    %2938 = vmatmul.bf16.gmra.mxu0 %v845
    %v2939 = vpop.f32.mrf.mxu0
    %v2940 = vadd.f32 %v2921, %v2939
    %v2941 = vpop.f32.mrf.mxu0
    %v2942 = vadd.f32 %v2923, %v2941
    %2943 = vmatmul.bf16.gmra.mxu0 %v856
    %v2944 = vpop.f32.mrf.mxu0
    %v2945 = vadd.f32 %v2926, %v2944
    %v2946 = vpop.f32.mrf.mxu0
    %v2947 = vadd.f32 %v2928, %v2946
    %2948 = vdwg.mxu0
    %2949 = vmatpush.bf16.msra.mxu0 %v2130
    %2950 = vmatpush.bf16.msra.mxu0 %v2126
    %2951 = vmatpush.bf16.msra.mxu0 %v2122
    %2952 = vmatpush.bf16.msra.mxu0 %v2118
    %2953 = vmatpush.bf16.msra.mxu0 %v2114
    %2954 = vmatpush.bf16.msra.mxu0 %v2110
    %2955 = vmatpush.bf16.msra.mxu0 %v2106
    %2956 = vmatpush.bf16.msra.mxu0 %v2102
    %2957 = vmatmul.bf16.gmra.mxu0 %v846
    %v2958 = vpop.f32.mrf.mxu0
    %v2959 = vadd.f32 %v2940, %v2958
    %v2960 = vpop.f32.mrf.mxu0
    %v2961 = vadd.f32 %v2942, %v2960
    %2962 = vmatmul.bf16.gmra.mxu0 %v857
    %v2963 = vpop.f32.mrf.mxu0
    %v2964 = vadd.f32 %v2945, %v2963
    %v2965 = vpop.f32.mrf.mxu0
    %v2966 = vadd.f32 %v2947, %v2965
    %2967 = vdwg.mxu0
    %2968 = vmatpush.bf16.msra.mxu0 %v2162
    %2969 = vmatpush.bf16.msra.mxu0 %v2158
    %2970 = vmatpush.bf16.msra.mxu0 %v2154
    %2971 = vmatpush.bf16.msra.mxu0 %v2150
    %2972 = vmatpush.bf16.msra.mxu0 %v2146
    %2973 = vmatpush.bf16.msra.mxu0 %v2142
    %2974 = vmatpush.bf16.msra.mxu0 %v2138
    %2975 = vmatpush.bf16.msra.mxu0 %v2134
    %2976 = vmatmul.bf16.gmra.mxu0 %v847
    %v2977 = vpop.f32.mrf.mxu0
    %v2978 = vadd.f32 %v2959, %v2977
    %v2979 = vpop.f32.mrf.mxu0
    %v2980 = vadd.f32 %v2961, %v2979
    %2981 = vmatmul.bf16.gmra.mxu0 %v858
    %v2982 = vpop.f32.mrf.mxu0
    %v2983 = vadd.f32 %v2964, %v2982
    %v2984 = vpop.f32.mrf.mxu0
    %v2985 = vadd.f32 %v2966, %v2984
    %2986 = vdwg.mxu0
    %2987 = vmatpush.bf16.msra.mxu0 %v2194
    %2988 = vmatpush.bf16.msra.mxu0 %v2190
    %2989 = vmatpush.bf16.msra.mxu0 %v2186
    %2990 = vmatpush.bf16.msra.mxu0 %v2182
    %2991 = vmatpush.bf16.msra.mxu0 %v2178
    %2992 = vmatpush.bf16.msra.mxu0 %v2174
    %2993 = vmatpush.bf16.msra.mxu0 %v2170
    %2994 = vmatpush.bf16.msra.mxu0 %v2166
    %2995 = vmatmul.bf16.gmra.mxu0 %v848
    %v2996 = vpop.f32.mrf.mxu0
    %v2997 = vadd.f32 %v2978, %v2996
    %v2998 = vpop.f32.mrf.mxu0
    %v2999 = vadd.f32 %v2980, %v2998
    %3000 = vmatmul.bf16.gmra.mxu0 %v859
    %v3001 = vpop.f32.mrf.mxu0
    %v3002 = vadd.f32 %v2983, %v3001
    %v3003 = vpop.f32.mrf.mxu0
    %v3004 = vadd.f32 %v2985, %v3003
    %3005 = vdwg.mxu0
    %3006 = vmatpush.bf16.msra.mxu0 %v2226
    %3007 = vmatpush.bf16.msra.mxu0 %v2222
    %3008 = vmatpush.bf16.msra.mxu0 %v2218
    %3009 = vmatpush.bf16.msra.mxu0 %v2214
    %3010 = vmatpush.bf16.msra.mxu0 %v2210
    %3011 = vmatpush.bf16.msra.mxu0 %v2206
    %3012 = vmatpush.bf16.msra.mxu0 %v2202
    %3013 = vmatpush.bf16.msra.mxu0 %v2198
    %3014 = vmatmul.bf16.gmra.mxu0 %v849
    %v3015 = vpop.f32.mrf.mxu0
    %v3016 = vadd.f32 %v2997, %v3015
    %v3017 = vpop.f32.mrf.mxu0
    %v3018 = vadd.f32 %v2999, %v3017
    %3019 = vmatmul.bf16.gmra.mxu0 %v860
    %v3020 = vpop.f32.mrf.mxu0
    %v3021 = vadd.f32 %v3002, %v3020
    %v3022 = vpop.f32.mrf.mxu0
    %v3023 = vadd.f32 %v3004, %v3022
    %3024 = vdwg.mxu0
    %3025 = vmatpush.bf16.msra.mxu0 %v2258
    %3026 = vmatpush.bf16.msra.mxu0 %v2254
    %3027 = vmatpush.bf16.msra.mxu0 %v2250
    %3028 = vmatpush.bf16.msra.mxu0 %v2246
    %3029 = vmatpush.bf16.msra.mxu0 %v2242
    %3030 = vmatpush.bf16.msra.mxu0 %v2238
    %3031 = vmatpush.bf16.msra.mxu0 %v2234
    %3032 = vmatpush.bf16.msra.mxu0 %v2230
    %3033 = vmatmul.bf16.gmra.mxu0 %v850
    %v3034 = vpop.f32.mrf.mxu0
    %v3035 = vadd.f32 %v3016, %v3034
    %v3036 = vpop.f32.mrf.mxu0
    %v3037 = vadd.f32 %v3018, %v3036
    %3038 = vmatmul.bf16.gmra.mxu0 %v861
    %v3039 = vpop.f32.mrf.mxu0
    %v3040 = vadd.f32 %v3021, %v3039
    %v3041 = vpop.f32.mrf.mxu0
    %v3042 = vadd.f32 %v3023, %v3041
    %3043 = vdwg.mxu0
    %3044 = vmatpush.bf16.msra.mxu0 %v2290
    %3045 = vmatpush.bf16.msra.mxu0 %v2286
    %3046 = vmatpush.bf16.msra.mxu0 %v2282
    %3047 = vmatpush.bf16.msra.mxu0 %v2278
    %3048 = vmatpush.bf16.msra.mxu0 %v2274
    %3049 = vmatpush.bf16.msra.mxu0 %v2270
    %3050 = vmatpush.bf16.msra.mxu0 %v2266
    %3051 = vmatpush.bf16.msra.mxu0 %v2262
    %3052 = vmatmul.bf16.gmra.mxu0 %v851
    %v3053 = vpop.f32.mrf.mxu0
    %v3054 = vadd.f32 %v3035, %v3053
    %v3055 = vpop.f32.mrf.mxu0
    %v3056 = vadd.f32 %v3037, %v3055
    %3057 = vmatmul.bf16.gmra.mxu0 %v862
    %v3058 = vpop.f32.mrf.mxu0
    %v3059 = vadd.f32 %v3040, %v3058
    %v3060 = vpop.f32.mrf.mxu0
    %v3061 = vadd.f32 %v3042, %v3060
    %3062 = vdwg.mxu0
    %3063 = vmatpush.bf16.msra.mxu0 %v1971
    %3064 = vmatpush.bf16.msra.mxu0 %v1967
    %3065 = vmatpush.bf16.msra.mxu0 %v1963
    %3066 = vmatpush.bf16.msra.mxu0 %v1959
    %3067 = vmatpush.bf16.msra.mxu0 %v1955
    %3068 = vmatpush.bf16.msra.mxu0 %v1951
    %3069 = vmatpush.bf16.msra.mxu0 %v1947
    %3070 = vmatpush.bf16.msra.mxu0 %v1943
    %3071 = vmatmul.bf16.gmra.mxu0 %v841
    %v3072 = vpop.f32.mrf.mxu0
    %v3073 = vadd.f32 %v767, %v3072
    %v3074 = vpop.f32.mrf.mxu0
    %v3075 = vadd.f32 %v767, %v3074
    %3076 = vmatmul.bf16.gmra.mxu0 %v852
    %v3077 = vpop.f32.mrf.mxu0
    %v3078 = vadd.f32 %v767, %v3077
    %v3079 = vpop.f32.mrf.mxu0
    %v3080 = vadd.f32 %v767, %v3079
    %3081 = vdwg.mxu0
    %3082 = vmatpush.bf16.msra.mxu0 %v2003
    %3083 = vmatpush.bf16.msra.mxu0 %v1999
    %3084 = vmatpush.bf16.msra.mxu0 %v1995
    %3085 = vmatpush.bf16.msra.mxu0 %v1991
    %3086 = vmatpush.bf16.msra.mxu0 %v1987
    %3087 = vmatpush.bf16.msra.mxu0 %v1983
    %3088 = vmatpush.bf16.msra.mxu0 %v1979
    %3089 = vmatpush.bf16.msra.mxu0 %v1975
    %3090 = vmatmul.bf16.gmra.mxu0 %v842
    %v3091 = vpop.f32.mrf.mxu0
    %v3092 = vadd.f32 %v3073, %v3091
    %v3093 = vpop.f32.mrf.mxu0
    %v3094 = vadd.f32 %v3075, %v3093
    %3095 = vmatmul.bf16.gmra.mxu0 %v853
    %v3096 = vpop.f32.mrf.mxu0
    %v3097 = vadd.f32 %v3078, %v3096
    %v3098 = vpop.f32.mrf.mxu0
    %v3099 = vadd.f32 %v3080, %v3098
    %3100 = vdwg.mxu0
    %3101 = vmatpush.bf16.msra.mxu0 %v2035
    %3102 = vmatpush.bf16.msra.mxu0 %v2031
    %3103 = vmatpush.bf16.msra.mxu0 %v2027
    %3104 = vmatpush.bf16.msra.mxu0 %v2023
    %3105 = vmatpush.bf16.msra.mxu0 %v2019
    %3106 = vmatpush.bf16.msra.mxu0 %v2015
    %3107 = vmatpush.bf16.msra.mxu0 %v2011
    %3108 = vmatpush.bf16.msra.mxu0 %v2007
    %3109 = vmatmul.bf16.gmra.mxu0 %v843
    %v3110 = vpop.f32.mrf.mxu0
    %v3111 = vadd.f32 %v3092, %v3110
    %v3112 = vpop.f32.mrf.mxu0
    %v3113 = vadd.f32 %v3094, %v3112
    %3114 = vmatmul.bf16.gmra.mxu0 %v854
    %v3115 = vpop.f32.mrf.mxu0
    %v3116 = vadd.f32 %v3097, %v3115
    %v3117 = vpop.f32.mrf.mxu0
    %v3118 = vadd.f32 %v3099, %v3117
    %3119 = vdwg.mxu0
    %3120 = vmatpush.bf16.msra.mxu0 %v2067
    %3121 = vmatpush.bf16.msra.mxu0 %v2063
    %3122 = vmatpush.bf16.msra.mxu0 %v2059
    %3123 = vmatpush.bf16.msra.mxu0 %v2055
    %3124 = vmatpush.bf16.msra.mxu0 %v2051
    %3125 = vmatpush.bf16.msra.mxu0 %v2047
    %3126 = vmatpush.bf16.msra.mxu0 %v2043
    %3127 = vmatpush.bf16.msra.mxu0 %v2039
    %3128 = vmatmul.bf16.gmra.mxu0 %v844
    %v3129 = vpop.f32.mrf.mxu0
    %v3130 = vadd.f32 %v3111, %v3129
    %v3131 = vpop.f32.mrf.mxu0
    %v3132 = vadd.f32 %v3113, %v3131
    %3133 = vmatmul.bf16.gmra.mxu0 %v855
    %v3134 = vpop.f32.mrf.mxu0
    %v3135 = vadd.f32 %v3116, %v3134
    %v3136 = vpop.f32.mrf.mxu0
    %v3137 = vadd.f32 %v3118, %v3136
    %3138 = vdwg.mxu0
    %3139 = vmatpush.bf16.msra.mxu0 %v2099
    %3140 = vmatpush.bf16.msra.mxu0 %v2095
    %3141 = vmatpush.bf16.msra.mxu0 %v2091
    %3142 = vmatpush.bf16.msra.mxu0 %v2087
    %3143 = vmatpush.bf16.msra.mxu0 %v2083
    %3144 = vmatpush.bf16.msra.mxu0 %v2079
    %3145 = vmatpush.bf16.msra.mxu0 %v2075
    %3146 = vmatpush.bf16.msra.mxu0 %v2071
    %3147 = vmatmul.bf16.gmra.mxu0 %v845
    %v3148 = vpop.f32.mrf.mxu0
    %v3149 = vadd.f32 %v3130, %v3148
    %v3150 = vpop.f32.mrf.mxu0
    %v3151 = vadd.f32 %v3132, %v3150
    %3152 = vmatmul.bf16.gmra.mxu0 %v856
    %v3153 = vpop.f32.mrf.mxu0
    %v3154 = vadd.f32 %v3135, %v3153
    %v3155 = vpop.f32.mrf.mxu0
    %v3156 = vadd.f32 %v3137, %v3155
    %3157 = vdwg.mxu0
    %3158 = vmatpush.bf16.msra.mxu0 %v2131
    %3159 = vmatpush.bf16.msra.mxu0 %v2127
    %3160 = vmatpush.bf16.msra.mxu0 %v2123
    %3161 = vmatpush.bf16.msra.mxu0 %v2119
    %3162 = vmatpush.bf16.msra.mxu0 %v2115
    %3163 = vmatpush.bf16.msra.mxu0 %v2111
    %3164 = vmatpush.bf16.msra.mxu0 %v2107
    %3165 = vmatpush.bf16.msra.mxu0 %v2103
    %3166 = vmatmul.bf16.gmra.mxu0 %v846
    %v3167 = vpop.f32.mrf.mxu0
    %v3168 = vadd.f32 %v3149, %v3167
    %v3169 = vpop.f32.mrf.mxu0
    %v3170 = vadd.f32 %v3151, %v3169
    %3171 = vmatmul.bf16.gmra.mxu0 %v857
    %v3172 = vpop.f32.mrf.mxu0
    %v3173 = vadd.f32 %v3154, %v3172
    %v3174 = vpop.f32.mrf.mxu0
    %v3175 = vadd.f32 %v3156, %v3174
    %3176 = vdwg.mxu0
    %3177 = vmatpush.bf16.msra.mxu0 %v2163
    %3178 = vmatpush.bf16.msra.mxu0 %v2159
    %3179 = vmatpush.bf16.msra.mxu0 %v2155
    %3180 = vmatpush.bf16.msra.mxu0 %v2151
    %3181 = vmatpush.bf16.msra.mxu0 %v2147
    %3182 = vmatpush.bf16.msra.mxu0 %v2143
    %3183 = vmatpush.bf16.msra.mxu0 %v2139
    %3184 = vmatpush.bf16.msra.mxu0 %v2135
    %3185 = vmatmul.bf16.gmra.mxu0 %v847
    %v3186 = vpop.f32.mrf.mxu0
    %v3187 = vadd.f32 %v3168, %v3186
    %v3188 = vpop.f32.mrf.mxu0
    %v3189 = vadd.f32 %v3170, %v3188
    %3190 = vmatmul.bf16.gmra.mxu0 %v858
    %v3191 = vpop.f32.mrf.mxu0
    %v3192 = vadd.f32 %v3173, %v3191
    %v3193 = vpop.f32.mrf.mxu0
    %v3194 = vadd.f32 %v3175, %v3193
    %3195 = vdwg.mxu0
    %3196 = vmatpush.bf16.msra.mxu0 %v2195
    %3197 = vmatpush.bf16.msra.mxu0 %v2191
    %3198 = vmatpush.bf16.msra.mxu0 %v2187
    %3199 = vmatpush.bf16.msra.mxu0 %v2183
    %3200 = vmatpush.bf16.msra.mxu0 %v2179
    %3201 = vmatpush.bf16.msra.mxu0 %v2175
    %3202 = vmatpush.bf16.msra.mxu0 %v2171
    %3203 = vmatpush.bf16.msra.mxu0 %v2167
    %3204 = vmatmul.bf16.gmra.mxu0 %v848
    %v3205 = vpop.f32.mrf.mxu0
    %v3206 = vadd.f32 %v3187, %v3205
    %v3207 = vpop.f32.mrf.mxu0
    %v3208 = vadd.f32 %v3189, %v3207
    %3209 = vmatmul.bf16.gmra.mxu0 %v859
    %v3210 = vpop.f32.mrf.mxu0
    %v3211 = vadd.f32 %v3192, %v3210
    %v3212 = vpop.f32.mrf.mxu0
    %v3213 = vadd.f32 %v3194, %v3212
    %3214 = vdwg.mxu0
    %3215 = vmatpush.bf16.msra.mxu0 %v2227
    %3216 = vmatpush.bf16.msra.mxu0 %v2223
    %3217 = vmatpush.bf16.msra.mxu0 %v2219
    %3218 = vmatpush.bf16.msra.mxu0 %v2215
    %3219 = vmatpush.bf16.msra.mxu0 %v2211
    %3220 = vmatpush.bf16.msra.mxu0 %v2207
    %3221 = vmatpush.bf16.msra.mxu0 %v2203
    %3222 = vmatpush.bf16.msra.mxu0 %v2199
    %3223 = vmatmul.bf16.gmra.mxu0 %v849
    %v3224 = vpop.f32.mrf.mxu0
    %v3225 = vadd.f32 %v3206, %v3224
    %v3226 = vpop.f32.mrf.mxu0
    %v3227 = vadd.f32 %v3208, %v3226
    %3228 = vmatmul.bf16.gmra.mxu0 %v860
    %v3229 = vpop.f32.mrf.mxu0
    %v3230 = vadd.f32 %v3211, %v3229
    %v3231 = vpop.f32.mrf.mxu0
    %v3232 = vadd.f32 %v3213, %v3231
    %3233 = vdwg.mxu0
    %3234 = vmatpush.bf16.msra.mxu0 %v2259
    %3235 = vmatpush.bf16.msra.mxu0 %v2255
    %3236 = vmatpush.bf16.msra.mxu0 %v2251
    %3237 = vmatpush.bf16.msra.mxu0 %v2247
    %3238 = vmatpush.bf16.msra.mxu0 %v2243
    %3239 = vmatpush.bf16.msra.mxu0 %v2239
    %3240 = vmatpush.bf16.msra.mxu0 %v2235
    %3241 = vmatpush.bf16.msra.mxu0 %v2231
    %3242 = vmatmul.bf16.gmra.mxu0 %v850
    %v3243 = vpop.f32.mrf.mxu0
    %v3244 = vadd.f32 %v3225, %v3243
    %v3245 = vpop.f32.mrf.mxu0
    %v3246 = vadd.f32 %v3227, %v3245
    %3247 = vmatmul.bf16.gmra.mxu0 %v861
    %v3248 = vpop.f32.mrf.mxu0
    %v3249 = vadd.f32 %v3230, %v3248
    %v3250 = vpop.f32.mrf.mxu0
    %v3251 = vadd.f32 %v3232, %v3250
    %3252 = vdwg.mxu0
    %3253 = vmatpush.bf16.msra.mxu0 %v2291
    %3254 = vmatpush.bf16.msra.mxu0 %v2287
    %3255 = vmatpush.bf16.msra.mxu0 %v2283
    %3256 = vmatpush.bf16.msra.mxu0 %v2279
    %3257 = vmatpush.bf16.msra.mxu0 %v2275
    %3258 = vmatpush.bf16.msra.mxu0 %v2271
    %3259 = vmatpush.bf16.msra.mxu0 %v2267
    %3260 = vmatpush.bf16.msra.mxu0 %v2263
    %3261 = vmatmul.bf16.gmra.mxu0 %v851
    %v3262 = vpop.f32.mrf.mxu0
    %v3263 = vadd.f32 %v3244, %v3262
    %v3264 = vpop.f32.mrf.mxu0
    %v3265 = vadd.f32 %v3246, %v3264
    %3266 = vmatmul.bf16.gmra.mxu0 %v862
    %v3267 = vpop.f32.mrf.mxu0
    %v3268 = vadd.f32 %v3249, %v3267
    %v3269 = vpop.f32.mrf.mxu0
    %v3270 = vadd.f32 %v3251, %v3269
    %3271 = vdwg.mxu0
    %3272 = vmatpush.bf16.msra.mxu0 %v1972
    %3273 = vmatpush.bf16.msra.mxu0 %v1968
    %3274 = vmatpush.bf16.msra.mxu0 %v1964
    %3275 = vmatpush.bf16.msra.mxu0 %v1960
    %3276 = vmatpush.bf16.msra.mxu0 %v1956
    %3277 = vmatpush.bf16.msra.mxu0 %v1952
    %3278 = vmatpush.bf16.msra.mxu0 %v1948
    %3279 = vmatpush.bf16.msra.mxu0 %v1944
    %3280 = vmatmul.bf16.gmra.mxu0 %v841
    %v3281 = vpop.f32.mrf.mxu0
    %v3282 = vadd.f32 %v768, %v3281
    %v3283 = vpop.f32.mrf.mxu0
    %v3284 = vadd.f32 %v768, %v3283
    %3285 = vmatmul.bf16.gmra.mxu0 %v852
    %v3286 = vpop.f32.mrf.mxu0
    %v3287 = vadd.f32 %v768, %v3286
    %v3288 = vpop.f32.mrf.mxu0
    %v3289 = vadd.f32 %v768, %v3288
    %3290 = vdwg.mxu0
    %3291 = vmatpush.bf16.msra.mxu0 %v2004
    %3292 = vmatpush.bf16.msra.mxu0 %v2000
    %3293 = vmatpush.bf16.msra.mxu0 %v1996
    %3294 = vmatpush.bf16.msra.mxu0 %v1992
    %3295 = vmatpush.bf16.msra.mxu0 %v1988
    %3296 = vmatpush.bf16.msra.mxu0 %v1984
    %3297 = vmatpush.bf16.msra.mxu0 %v1980
    %3298 = vmatpush.bf16.msra.mxu0 %v1976
    %3299 = vmatmul.bf16.gmra.mxu0 %v842
    %v3300 = vpop.f32.mrf.mxu0
    %v3301 = vadd.f32 %v3282, %v3300
    %v3302 = vpop.f32.mrf.mxu0
    %v3303 = vadd.f32 %v3284, %v3302
    %3304 = vmatmul.bf16.gmra.mxu0 %v853
    %v3305 = vpop.f32.mrf.mxu0
    %v3306 = vadd.f32 %v3287, %v3305
    %v3307 = vpop.f32.mrf.mxu0
    %v3308 = vadd.f32 %v3289, %v3307
    %3309 = vdwg.mxu0
    %3310 = vmatpush.bf16.msra.mxu0 %v2036
    %3311 = vmatpush.bf16.msra.mxu0 %v2032
    %3312 = vmatpush.bf16.msra.mxu0 %v2028
    %3313 = vmatpush.bf16.msra.mxu0 %v2024
    %3314 = vmatpush.bf16.msra.mxu0 %v2020
    %3315 = vmatpush.bf16.msra.mxu0 %v2016
    %3316 = vmatpush.bf16.msra.mxu0 %v2012
    %3317 = vmatpush.bf16.msra.mxu0 %v2008
    %3318 = vmatmul.bf16.gmra.mxu0 %v843
    %v3319 = vpop.f32.mrf.mxu0
    %v3320 = vadd.f32 %v3301, %v3319
    %v3321 = vpop.f32.mrf.mxu0
    %v3322 = vadd.f32 %v3303, %v3321
    %3323 = vmatmul.bf16.gmra.mxu0 %v854
    %v3324 = vpop.f32.mrf.mxu0
    %v3325 = vadd.f32 %v3306, %v3324
    %v3326 = vpop.f32.mrf.mxu0
    %v3327 = vadd.f32 %v3308, %v3326
    %3328 = vdwg.mxu0
    %3329 = vmatpush.bf16.msra.mxu0 %v2068
    %3330 = vmatpush.bf16.msra.mxu0 %v2064
    %3331 = vmatpush.bf16.msra.mxu0 %v2060
    %3332 = vmatpush.bf16.msra.mxu0 %v2056
    %3333 = vmatpush.bf16.msra.mxu0 %v2052
    %3334 = vmatpush.bf16.msra.mxu0 %v2048
    %3335 = vmatpush.bf16.msra.mxu0 %v2044
    %3336 = vmatpush.bf16.msra.mxu0 %v2040
    %3337 = vmatmul.bf16.gmra.mxu0 %v844
    %v3338 = vpop.f32.mrf.mxu0
    %v3339 = vadd.f32 %v3320, %v3338
    %v3340 = vpop.f32.mrf.mxu0
    %v3341 = vadd.f32 %v3322, %v3340
    %3342 = vmatmul.bf16.gmra.mxu0 %v855
    %v3343 = vpop.f32.mrf.mxu0
    %v3344 = vadd.f32 %v3325, %v3343
    %v3345 = vpop.f32.mrf.mxu0
    %v3346 = vadd.f32 %v3327, %v3345
    %3347 = vdwg.mxu0
    %3348 = vmatpush.bf16.msra.mxu0 %v2100
    %3349 = vmatpush.bf16.msra.mxu0 %v2096
    %3350 = vmatpush.bf16.msra.mxu0 %v2092
    %3351 = vmatpush.bf16.msra.mxu0 %v2088
    %3352 = vmatpush.bf16.msra.mxu0 %v2084
    %3353 = vmatpush.bf16.msra.mxu0 %v2080
    %3354 = vmatpush.bf16.msra.mxu0 %v2076
    %3355 = vmatpush.bf16.msra.mxu0 %v2072
    %3356 = vmatmul.bf16.gmra.mxu0 %v845
    %v3357 = vpop.f32.mrf.mxu0
    %v3358 = vadd.f32 %v3339, %v3357
    %v3359 = vpop.f32.mrf.mxu0
    %v3360 = vadd.f32 %v3341, %v3359
    %3361 = vmatmul.bf16.gmra.mxu0 %v856
    %v3362 = vpop.f32.mrf.mxu0
    %v3363 = vadd.f32 %v3344, %v3362
    %v3364 = vpop.f32.mrf.mxu0
    %v3365 = vadd.f32 %v3346, %v3364
    %3366 = vdwg.mxu0
    %3367 = vmatpush.bf16.msra.mxu0 %v2132
    %3368 = vmatpush.bf16.msra.mxu0 %v2128
    %3369 = vmatpush.bf16.msra.mxu0 %v2124
    %3370 = vmatpush.bf16.msra.mxu0 %v2120
    %3371 = vmatpush.bf16.msra.mxu0 %v2116
    %3372 = vmatpush.bf16.msra.mxu0 %v2112
    %3373 = vmatpush.bf16.msra.mxu0 %v2108
    %3374 = vmatpush.bf16.msra.mxu0 %v2104
    %3375 = vmatmul.bf16.gmra.mxu0 %v846
    %v3376 = vpop.f32.mrf.mxu0
    %v3377 = vadd.f32 %v3358, %v3376
    %v3378 = vpop.f32.mrf.mxu0
    %v3379 = vadd.f32 %v3360, %v3378
    %3380 = vmatmul.bf16.gmra.mxu0 %v857
    %v3381 = vpop.f32.mrf.mxu0
    %v3382 = vadd.f32 %v3363, %v3381
    %v3383 = vpop.f32.mrf.mxu0
    %v3384 = vadd.f32 %v3365, %v3383
    %3385 = vdwg.mxu0
    %3386 = vmatpush.bf16.msra.mxu0 %v2164
    %3387 = vmatpush.bf16.msra.mxu0 %v2160
    %3388 = vmatpush.bf16.msra.mxu0 %v2156
    %3389 = vmatpush.bf16.msra.mxu0 %v2152
    %3390 = vmatpush.bf16.msra.mxu0 %v2148
    %3391 = vmatpush.bf16.msra.mxu0 %v2144
    %3392 = vmatpush.bf16.msra.mxu0 %v2140
    %3393 = vmatpush.bf16.msra.mxu0 %v2136
    %3394 = vmatmul.bf16.gmra.mxu0 %v847
    %v3395 = vpop.f32.mrf.mxu0
    %v3396 = vadd.f32 %v3377, %v3395
    %v3397 = vpop.f32.mrf.mxu0
    %v3398 = vadd.f32 %v3379, %v3397
    %3399 = vmatmul.bf16.gmra.mxu0 %v858
    %v3400 = vpop.f32.mrf.mxu0
    %v3401 = vadd.f32 %v3382, %v3400
    %v3402 = vpop.f32.mrf.mxu0
    %v3403 = vadd.f32 %v3384, %v3402
    %3404 = vdwg.mxu0
    %3405 = vmatpush.bf16.msra.mxu0 %v2196
    %3406 = vmatpush.bf16.msra.mxu0 %v2192
    %3407 = vmatpush.bf16.msra.mxu0 %v2188
    %3408 = vmatpush.bf16.msra.mxu0 %v2184
    %3409 = vmatpush.bf16.msra.mxu0 %v2180
    %3410 = vmatpush.bf16.msra.mxu0 %v2176
    %3411 = vmatpush.bf16.msra.mxu0 %v2172
    %3412 = vmatpush.bf16.msra.mxu0 %v2168
    %3413 = vmatmul.bf16.gmra.mxu0 %v848
    %v3414 = vpop.f32.mrf.mxu0
    %v3415 = vadd.f32 %v3396, %v3414
    %v3416 = vpop.f32.mrf.mxu0
    %v3417 = vadd.f32 %v3398, %v3416
    %3418 = vmatmul.bf16.gmra.mxu0 %v859
    %v3419 = vpop.f32.mrf.mxu0
    %v3420 = vadd.f32 %v3401, %v3419
    %v3421 = vpop.f32.mrf.mxu0
    %v3422 = vadd.f32 %v3403, %v3421
    %3423 = vdwg.mxu0
    %3424 = vmatpush.bf16.msra.mxu0 %v2228
    %3425 = vmatpush.bf16.msra.mxu0 %v2224
    %3426 = vmatpush.bf16.msra.mxu0 %v2220
    %3427 = vmatpush.bf16.msra.mxu0 %v2216
    %3428 = vmatpush.bf16.msra.mxu0 %v2212
    %3429 = vmatpush.bf16.msra.mxu0 %v2208
    %3430 = vmatpush.bf16.msra.mxu0 %v2204
    %3431 = vmatpush.bf16.msra.mxu0 %v2200
    %3432 = vmatmul.bf16.gmra.mxu0 %v849
    %v3433 = vpop.f32.mrf.mxu0
    %v3434 = vadd.f32 %v3415, %v3433
    %v3435 = vpop.f32.mrf.mxu0
    %v3436 = vadd.f32 %v3417, %v3435
    %3437 = vmatmul.bf16.gmra.mxu0 %v860
    %v3438 = vpop.f32.mrf.mxu0
    %v3439 = vadd.f32 %v3420, %v3438
    %v3440 = vpop.f32.mrf.mxu0
    %v3441 = vadd.f32 %v3422, %v3440
    %3442 = vdwg.mxu0
    %3443 = vmatpush.bf16.msra.mxu0 %v2260
    %3444 = vmatpush.bf16.msra.mxu0 %v2256
    %3445 = vmatpush.bf16.msra.mxu0 %v2252
    %3446 = vmatpush.bf16.msra.mxu0 %v2248
    %3447 = vmatpush.bf16.msra.mxu0 %v2244
    %3448 = vmatpush.bf16.msra.mxu0 %v2240
    %3449 = vmatpush.bf16.msra.mxu0 %v2236
    %3450 = vmatpush.bf16.msra.mxu0 %v2232
    %3451 = vmatmul.bf16.gmra.mxu0 %v850
    %v3452 = vpop.f32.mrf.mxu0
    %v3453 = vadd.f32 %v3434, %v3452
    %v3454 = vpop.f32.mrf.mxu0
    %v3455 = vadd.f32 %v3436, %v3454
    %3456 = vmatmul.bf16.gmra.mxu0 %v861
    %v3457 = vpop.f32.mrf.mxu0
    %v3458 = vadd.f32 %v3439, %v3457
    %v3459 = vpop.f32.mrf.mxu0
    %v3460 = vadd.f32 %v3441, %v3459
    %3461 = vdwg.mxu0
    %3462 = vmatpush.bf16.msra.mxu0 %v2292
    %3463 = vmatpush.bf16.msra.mxu0 %v2288
    %3464 = vmatpush.bf16.msra.mxu0 %v2284
    %3465 = vmatpush.bf16.msra.mxu0 %v2280
    %3466 = vmatpush.bf16.msra.mxu0 %v2276
    %3467 = vmatpush.bf16.msra.mxu0 %v2272
    %3468 = vmatpush.bf16.msra.mxu0 %v2268
    %3469 = vmatpush.bf16.msra.mxu0 %v2264
    %3470 = vmatmul.bf16.gmra.mxu0 %v851
    %v3471 = vpop.f32.mrf.mxu0
    %v3472 = vadd.f32 %v3453, %v3471
    %v3473 = vpop.f32.mrf.mxu0
    %v3474 = vadd.f32 %v3455, %v3473
    %3475 = vmatmul.bf16.gmra.mxu0 %v862
    %v3476 = vpop.f32.mrf.mxu0
    %v3477 = vadd.f32 %v3458, %v3476
    %v3478 = vpop.f32.mrf.mxu0
    %v3479 = vadd.f32 %v3460, %v3478
    %3480 = vdwg.mxu0
    %v3481 = vld [vmem:[#allocation14] sm:$0xf]
    %v3482 = vld [vmem:[#allocation15] sm:$0xf]
    %v3483 = vadd.f32 %v2845, %v2847
    %v3484 = vrot.slane %v3483, 4
    %v3485 = vadd.f32 %v3483, %v3484
    %v3486 = vrot.slane %v3485, 2
    %v3487 = vadd.f32 %v3485, %v3486
    %v3488 = vrot.slane %v3487, 1
    %v3489 = vadd.f32 %v3487, %v3488
    %v3490 = vadd.f32 %v3054, %v3056
    %v3491 = vrot.slane %v3490, 4
    %v3492 = vadd.f32 %v3490, %v3491
    %v3493 = vrot.slane %v3492, 2
    %v3494 = vadd.f32 %v3492, %v3493
    %v3495 = vrot.slane %v3494, 1
    %v3496 = vadd.f32 %v3494, %v3495
    %v3497 = vadd.f32 %v3263, %v3265
    %v3498 = vrot.slane %v3497, 4
    %v3499 = vadd.f32 %v3497, %v3498
    %v3500 = vrot.slane %v3499, 2
    %v3501 = vadd.f32 %v3499, %v3500
    %v3502 = vrot.slane %v3501, 1
    %v3503 = vadd.f32 %v3501, %v3502
    %v3504 = vadd.f32 %v3472, %v3474
    %v3505 = vrot.slane %v3504, 4
    %v3506 = vadd.f32 %v3504, %v3505
    %v3507 = vrot.slane %v3506, 2
    %v3508 = vadd.f32 %v3506, %v3507
    %v3509 = vrot.slane %v3508, 1
    %v3510 = vadd.f32 %v3508, %v3509
    %v3511 = vld [vmem:[#allocation12] sm:$0xff]
    %v3512 = vld [vmem:[#allocation12 + $0x8] sm:$0xff]
    %v3513 = vld [vmem:[#allocation12 + $0x10] sm:$0xff]
    %v3514 = vld [vmem:[#allocation12 + $0x18] sm:$0xff]
    %v3515 = vld [vmem:[#allocation12 + $0x20] sm:$0xff]
    %v3516 = vld [vmem:[#allocation12 + $0x28] sm:$0xff]
    %v3517 = vld [vmem:[#allocation12 + $0x30] sm:$0xff]
    %v3518 = vld [vmem:[#allocation12 + $0x38] sm:$0xff]
    %v3519 = vld [vmem:[#allocation12 + $0x40] sm:$0xff]
    %v3520 = vld [vmem:[#allocation12 + $0x48] sm:$0xff]
    %v3521 = vld [vmem:[#allocation12 + $0x50] sm:$0xff]
    %v3522 = vld [vmem:[#allocation12 + $0x58] sm:$0xff]
    %v3523 = vld [vmem:[#allocation12 + $0x60] sm:$0xff]
    %v3524 = vld [vmem:[#allocation12 + $0x68] sm:$0xff]
    %v3525 = vld [vmem:[#allocation12 + $0x70] sm:$0xff]
    %v3526 = vld [vmem:[#allocation12 + $0x78] sm:$0xff]
    %v3527 = vld [vmem:[#allocation12 + $0x80] sm:$0xff]
    %v3528 = vld [vmem:[#allocation12 + $0x88] sm:$0xff]
    %v3529 = vld [vmem:[#allocation12 + $0x90] sm:$0xff]
    %v3530 = vld [vmem:[#allocation12 + $0x98] sm:$0xff]
    %v3531 = vld [vmem:[#allocation12 + $0xa0] sm:$0xff]
    %v3532 = vld [vmem:[#allocation12 + $0xa8] sm:$0xff]
    %v3533 = vld [vmem:[#allocation12 + $0xb0] sm:$0xff]
    %v3534 = vld [vmem:[#allocation12 + $0xb8] sm:$0xff]
    %v3535 = vld [vmem:[#allocation12 + $0xc0] sm:$0xff]
    %v3536 = vld [vmem:[#allocation12 + $0xc8] sm:$0xff]
    %v3537 = vld [vmem:[#allocation12 + $0xd0] sm:$0xff]
    %v3538 = vld [vmem:[#allocation12 + $0xd8] sm:$0xff]
    %v3539 = vld [vmem:[#allocation12 + $0xe0] sm:$0xff]
    %v3540 = vld [vmem:[#allocation12 + $0xe8] sm:$0xff]
    %v3541 = vld [vmem:[#allocation12 + $0xf0] sm:$0xff]
    %v3542 = vld [vmem:[#allocation12 + $0xf8] sm:$0xff]
    %v3543 = vld [vmem:[#allocation12 + $0x100] sm:$0xff]
    %v3544 = vld [vmem:[#allocation12 + $0x108] sm:$0xff]
    %v3545 = vld [vmem:[#allocation12 + $0x110] sm:$0xff]
    %v3546 = vld [vmem:[#allocation12 + $0x118] sm:$0xff]
    %v3547 = vld [vmem:[#allocation12 + $0x120] sm:$0xff]
    %v3548 = vld [vmem:[#allocation12 + $0x128] sm:$0xff]
    %v3549 = vld [vmem:[#allocation12 + $0x130] sm:$0xff]
    %v3550 = vld [vmem:[#allocation12 + $0x138] sm:$0xff]
    %v3551 = vld [vmem:[#allocation12 + $0x140] sm:$0xff]
    %v3552 = vld [vmem:[#allocation12 + $0x148] sm:$0xff]
    %v3553 = vld [vmem:[#allocation12 + $0x150] sm:$0xff]
    %v3554 = vld [vmem:[#allocation12 + $0x158] sm:$0xff]
    %v3555 = vld [vmem:[#allocation12 + $0x160] sm:$0xff]
    %v3556 = vld [vmem:[#allocation12 + $0x168] sm:$0xff]
    %v3557 = vld [vmem:[#allocation12 + $0x170] sm:$0xff]
    %v3558 = vld [vmem:[#allocation12 + $0x178] sm:$0xff]
    %v3559 = vld [vmem:[#allocation12 + $0x180] sm:$0xff]
    %v3560 = vld [vmem:[#allocation12 + $0x188] sm:$0xff]
    %v3561 = vld [vmem:[#allocation12 + $0x190] sm:$0xff]
    %v3562 = vld [vmem:[#allocation12 + $0x198] sm:$0xff]
    %v3563 = vld [vmem:[#allocation12 + $0x1a0] sm:$0xff]
    %v3564 = vld [vmem:[#allocation12 + $0x1a8] sm:$0xff]
    %v3565 = vld [vmem:[#allocation12 + $0x1b0] sm:$0xff]
    %v3566 = vld [vmem:[#allocation12 + $0x1b8] sm:$0xff]
    %v3567 = vld [vmem:[#allocation12 + $0x1c0] sm:$0xff]
    %v3568 = vld [vmem:[#allocation12 + $0x1c8] sm:$0xff]
    %v3569 = vld [vmem:[#allocation12 + $0x1d0] sm:$0xff]
    %v3570 = vld [vmem:[#allocation12 + $0x1d8] sm:$0xff]
    %v3571 = vld [vmem:[#allocation12 + $0x1e0] sm:$0xff]
    %v3572 = vld [vmem:[#allocation12 + $0x1e8] sm:$0xff]
    %v3573 = vld [vmem:[#allocation12 + $0x1f0] sm:$0xff]
    %v3574 = vld [vmem:[#allocation12 + $0x1f8] sm:$0xff]
    %v3575 = vld [vmem:[#allocation12 + $0x200] sm:$0xff]
    %v3576 = vld [vmem:[#allocation12 + $0x208] sm:$0xff]
    %v3577 = vld [vmem:[#allocation12 + $0x210] sm:$0xff]
    %v3578 = vld [vmem:[#allocation12 + $0x218] sm:$0xff]
    %v3579 = vld [vmem:[#allocation12 + $0x220] sm:$0xff]
    %v3580 = vld [vmem:[#allocation12 + $0x228] sm:$0xff]
    %v3581 = vld [vmem:[#allocation12 + $0x230] sm:$0xff]
    %v3582 = vld [vmem:[#allocation12 + $0x238] sm:$0xff]
    %v3583 = vld [vmem:[#allocation12 + $0x240] sm:$0xff]
    %v3584 = vld [vmem:[#allocation12 + $0x248] sm:$0xff]
    %v3585 = vld [vmem:[#allocation12 + $0x250] sm:$0xff]
    %v3586 = vld [vmem:[#allocation12 + $0x258] sm:$0xff]
    %v3587 = vld [vmem:[#allocation12 + $0x260] sm:$0xff]
    %v3588 = vld [vmem:[#allocation12 + $0x268] sm:$0xff]
    %v3589 = vld [vmem:[#allocation12 + $0x270] sm:$0xff]
    %v3590 = vld [vmem:[#allocation12 + $0x278] sm:$0xff]
    %v3591 = vld [vmem:[#allocation12 + $0x280] sm:$0xff]
    %v3592 = vld [vmem:[#allocation12 + $0x288] sm:$0xff]
    %v3593 = vld [vmem:[#allocation12 + $0x290] sm:$0xff]
    %v3594 = vld [vmem:[#allocation12 + $0x298] sm:$0xff]
    %v3595 = vld [vmem:[#allocation12 + $0x2a0] sm:$0xff]
    %v3596 = vld [vmem:[#allocation12 + $0x2a8] sm:$0xff]
    %v3597 = vld [vmem:[#allocation12 + $0x2b0] sm:$0xff]
    %v3598 = vld [vmem:[#allocation12 + $0x2b8] sm:$0xff]
    %v3599 = vld [vmem:[#allocation12 + $0x2c0] sm:$0xff]
    %v3600 = vld [vmem:[#allocation12 + $0x2c8] sm:$0xff]
    %v3601 = vld [vmem:[#allocation12 + $0x2d0] sm:$0xff]
    %v3602 = vld [vmem:[#allocation12 + $0x2d8] sm:$0xff]
    %v3603 = vld [vmem:[#allocation12 + $0x2e0] sm:$0xff]
    %v3604 = vld [vmem:[#allocation12 + $0x2e8] sm:$0xff]
    %v3605 = vld [vmem:[#allocation12 + $0x2f0] sm:$0xff]
    %v3606 = vld [vmem:[#allocation12 + $0x2f8] sm:$0xff]
    %v3607 = vld [vmem:[#allocation12 + $0x300] sm:$0xff]
    %v3608 = vld [vmem:[#allocation12 + $0x308] sm:$0xff]
    %v3609 = vld [vmem:[#allocation12 + $0x310] sm:$0xff]
    %v3610 = vld [vmem:[#allocation12 + $0x318] sm:$0xff]
    %v3611 = vld [vmem:[#allocation12 + $0x320] sm:$0xff]
    %v3612 = vld [vmem:[#allocation12 + $0x328] sm:$0xff]
    %v3613 = vld [vmem:[#allocation12 + $0x330] sm:$0xff]
    %v3614 = vld [vmem:[#allocation12 + $0x338] sm:$0xff]
    %v3615 = vld [vmem:[#allocation12 + $0x340] sm:$0xff]
    %v3616 = vld [vmem:[#allocation12 + $0x348] sm:$0xff]
    %v3617 = vld [vmem:[#allocation12 + $0x350] sm:$0xff]
    %v3618 = vld [vmem:[#allocation12 + $0x358] sm:$0xff]
    %v3619 = vld [vmem:[#allocation12 + $0x360] sm:$0xff]
    %v3620 = vld [vmem:[#allocation12 + $0x368] sm:$0xff]
    %v3621 = vld [vmem:[#allocation12 + $0x370] sm:$0xff]
    %v3622 = vld [vmem:[#allocation12 + $0x378] sm:$0xff]
    %v3623 = vld [vmem:[#allocation12 + $0x380] sm:$0xff]
    %v3624 = vld [vmem:[#allocation12 + $0x388] sm:$0xff]
    %v3625 = vld [vmem:[#allocation12 + $0x390] sm:$0xff]
    %v3626 = vld [vmem:[#allocation12 + $0x398] sm:$0xff]
    %v3627 = vld [vmem:[#allocation12 + $0x3a0] sm:$0xff]
    %v3628 = vld [vmem:[#allocation12 + $0x3a8] sm:$0xff]
    %v3629 = vld [vmem:[#allocation12 + $0x3b0] sm:$0xff]
    %v3630 = vld [vmem:[#allocation12 + $0x3b8] sm:$0xff]
    %v3631 = vld [vmem:[#allocation12 + $0x3c0] sm:$0xff]
    %v3632 = vld [vmem:[#allocation12 + $0x3c8] sm:$0xff]
    %v3633 = vld [vmem:[#allocation12 + $0x3d0] sm:$0xff]
    %v3634 = vld [vmem:[#allocation12 + $0x3d8] sm:$0xff]
    %v3635 = vld [vmem:[#allocation12 + $0x3e0] sm:$0xff]
    %v3636 = vld [vmem:[#allocation12 + $0x3e8] sm:$0xff]
    %v3637 = vld [vmem:[#allocation12 + $0x3f0] sm:$0xff]
    %v3638 = vld [vmem:[#allocation12 + $0x3f8] sm:$0xff]
    %v3639 = vld [vmem:[#allocation12 + $0x400] sm:$0xff]
    %v3640 = vld [vmem:[#allocation12 + $0x408] sm:$0xff]
    %v3641 = vld [vmem:[#allocation12 + $0x410] sm:$0xff]
    %v3642 = vld [vmem:[#allocation12 + $0x418] sm:$0xff]
    %v3643 = vld [vmem:[#allocation12 + $0x420] sm:$0xff]
    %v3644 = vld [vmem:[#allocation12 + $0x428] sm:$0xff]
    %v3645 = vld [vmem:[#allocation12 + $0x430] sm:$0xff]
    %v3646 = vld [vmem:[#allocation12 + $0x438] sm:$0xff]
    %v3647 = vld [vmem:[#allocation12 + $0x440] sm:$0xff]
    %v3648 = vld [vmem:[#allocation12 + $0x448] sm:$0xff]
    %v3649 = vld [vmem:[#allocation12 + $0x450] sm:$0xff]
    %v3650 = vld [vmem:[#allocation12 + $0x458] sm:$0xff]
    %v3651 = vld [vmem:[#allocation12 + $0x460] sm:$0xff]
    %v3652 = vld [vmem:[#allocation12 + $0x468] sm:$0xff]
    %v3653 = vld [vmem:[#allocation12 + $0x470] sm:$0xff]
    %v3654 = vld [vmem:[#allocation12 + $0x478] sm:$0xff]
    %v3655 = vld [vmem:[#allocation12 + $0x480] sm:$0xff]
    %v3656 = vld [vmem:[#allocation12 + $0x488] sm:$0xff]
    %v3657 = vld [vmem:[#allocation12 + $0x490] sm:$0xff]
    %v3658 = vld [vmem:[#allocation12 + $0x498] sm:$0xff]
    %v3659 = vld [vmem:[#allocation12 + $0x4a0] sm:$0xff]
    %v3660 = vld [vmem:[#allocation12 + $0x4a8] sm:$0xff]
    %v3661 = vld [vmem:[#allocation12 + $0x4b0] sm:$0xff]
    %v3662 = vld [vmem:[#allocation12 + $0x4b8] sm:$0xff]
    %v3663 = vld [vmem:[#allocation12 + $0x4c0] sm:$0xff]
    %v3664 = vld [vmem:[#allocation12 + $0x4c8] sm:$0xff]
    %v3665 = vld [vmem:[#allocation12 + $0x4d0] sm:$0xff]
    %v3666 = vld [vmem:[#allocation12 + $0x4d8] sm:$0xff]
    %v3667 = vld [vmem:[#allocation12 + $0x4e0] sm:$0xff]
    %v3668 = vld [vmem:[#allocation12 + $0x4e8] sm:$0xff]
    %v3669 = vld [vmem:[#allocation12 + $0x4f0] sm:$0xff]
    %v3670 = vld [vmem:[#allocation12 + $0x4f8] sm:$0xff]
    %v3671 = vld [vmem:[#allocation12 + $0x500] sm:$0xff]
    %v3672 = vld [vmem:[#allocation12 + $0x508] sm:$0xff]
    %v3673 = vld [vmem:[#allocation12 + $0x510] sm:$0xff]
    %v3674 = vld [vmem:[#allocation12 + $0x518] sm:$0xff]
    %v3675 = vld [vmem:[#allocation12 + $0x520] sm:$0xff]
    %v3676 = vld [vmem:[#allocation12 + $0x528] sm:$0xff]
    %v3677 = vld [vmem:[#allocation12 + $0x530] sm:$0xff]
    %v3678 = vld [vmem:[#allocation12 + $0x538] sm:$0xff]
    %v3679 = vld [vmem:[#allocation12 + $0x540] sm:$0xff]
    %v3680 = vld [vmem:[#allocation12 + $0x548] sm:$0xff]
    %v3681 = vld [vmem:[#allocation12 + $0x550] sm:$0xff]
    %v3682 = vld [vmem:[#allocation12 + $0x558] sm:$0xff]
    %v3683 = vld [vmem:[#allocation12 + $0x560] sm:$0xff]
    %v3684 = vld [vmem:[#allocation12 + $0x568] sm:$0xff]
    %v3685 = vld [vmem:[#allocation12 + $0x570] sm:$0xff]
    %v3686 = vld [vmem:[#allocation12 + $0x578] sm:$0xff]
    %v3687 = vld [vmem:[#allocation12 + $0x580] sm:$0xff]
    %v3688 = vld [vmem:[#allocation12 + $0x588] sm:$0xff]
    %v3689 = vld [vmem:[#allocation12 + $0x590] sm:$0xff]
    %v3690 = vld [vmem:[#allocation12 + $0x598] sm:$0xff]
    %v3691 = vld [vmem:[#allocation12 + $0x5a0] sm:$0xff]
    %v3692 = vld [vmem:[#allocation12 + $0x5a8] sm:$0xff]
    %v3693 = vld [vmem:[#allocation12 + $0x5b0] sm:$0xff]
    %v3694 = vld [vmem:[#allocation12 + $0x5b8] sm:$0xff]
    %v3695 = vld [vmem:[#allocation12 + $0x5c0] sm:$0xff]
    %v3696 = vld [vmem:[#allocation12 + $0x5c8] sm:$0xff]
    %v3697 = vld [vmem:[#allocation12 + $0x5d0] sm:$0xff]
    %v3698 = vld [vmem:[#allocation12 + $0x5d8] sm:$0xff]
    %v3699 = vld [vmem:[#allocation12 + $0x5e0] sm:$0xff]
    %v3700 = vld [vmem:[#allocation12 + $0x5e8] sm:$0xff]
    %v3701 = vld [vmem:[#allocation12 + $0x5f0] sm:$0xff]
    %v3702 = vld [vmem:[#allocation12 + $0x5f8] sm:$0xff]
    %v3703 = vld [vmem:[#allocation12 + $0x600] sm:$0xff]
    %v3704 = vld [vmem:[#allocation12 + $0x608] sm:$0xff]
    %v3705 = vld [vmem:[#allocation12 + $0x610] sm:$0xff]
    %v3706 = vld [vmem:[#allocation12 + $0x618] sm:$0xff]
    %v3707 = vld [vmem:[#allocation12 + $0x620] sm:$0xff]
    %v3708 = vld [vmem:[#allocation12 + $0x628] sm:$0xff]
    %v3709 = vld [vmem:[#allocation12 + $0x630] sm:$0xff]
    %v3710 = vld [vmem:[#allocation12 + $0x638] sm:$0xff]
    %v3711 = vld [vmem:[#allocation12 + $0x640] sm:$0xff]
    %v3712 = vld [vmem:[#allocation12 + $0x648] sm:$0xff]
    %v3713 = vld [vmem:[#allocation12 + $0x650] sm:$0xff]
    %v3714 = vld [vmem:[#allocation12 + $0x658] sm:$0xff]
    %v3715 = vld [vmem:[#allocation12 + $0x660] sm:$0xff]
    %v3716 = vld [vmem:[#allocation12 + $0x668] sm:$0xff]
    %v3717 = vld [vmem:[#allocation12 + $0x670] sm:$0xff]
    %v3718 = vld [vmem:[#allocation12 + $0x678] sm:$0xff]
    %v3719 = vld [vmem:[#allocation12 + $0x680] sm:$0xff]
    %v3720 = vld [vmem:[#allocation12 + $0x688] sm:$0xff]
    %v3721 = vld [vmem:[#allocation12 + $0x690] sm:$0xff]
    %v3722 = vld [vmem:[#allocation12 + $0x698] sm:$0xff]
    %v3723 = vld [vmem:[#allocation12 + $0x6a0] sm:$0xff]
    %v3724 = vld [vmem:[#allocation12 + $0x6a8] sm:$0xff]
    %v3725 = vld [vmem:[#allocation12 + $0x6b0] sm:$0xff]
    %v3726 = vld [vmem:[#allocation12 + $0x6b8] sm:$0xff]
    %v3727 = vld [vmem:[#allocation12 + $0x6c0] sm:$0xff]
    %v3728 = vld [vmem:[#allocation12 + $0x6c8] sm:$0xff]
    %v3729 = vld [vmem:[#allocation12 + $0x6d0] sm:$0xff]
    %v3730 = vld [vmem:[#allocation12 + $0x6d8] sm:$0xff]
    %v3731 = vld [vmem:[#allocation12 + $0x6e0] sm:$0xff]
    %v3732 = vld [vmem:[#allocation12 + $0x6e8] sm:$0xff]
    %v3733 = vld [vmem:[#allocation12 + $0x6f0] sm:$0xff]
    %v3734 = vld [vmem:[#allocation12 + $0x6f8] sm:$0xff]
    %v3735 = vld [vmem:[#allocation12 + $0x700] sm:$0xff]
    %v3736 = vld [vmem:[#allocation12 + $0x708] sm:$0xff]
    %v3737 = vld [vmem:[#allocation12 + $0x710] sm:$0xff]
    %v3738 = vld [vmem:[#allocation12 + $0x718] sm:$0xff]
    %v3739 = vld [vmem:[#allocation12 + $0x720] sm:$0xff]
    %v3740 = vld [vmem:[#allocation12 + $0x728] sm:$0xff]
    %v3741 = vld [vmem:[#allocation12 + $0x730] sm:$0xff]
    %v3742 = vld [vmem:[#allocation12 + $0x738] sm:$0xff]
    %v3743 = vld [vmem:[#allocation12 + $0x740] sm:$0xff]
    %v3744 = vld [vmem:[#allocation12 + $0x748] sm:$0xff]
    %v3745 = vld [vmem:[#allocation12 + $0x750] sm:$0xff]
    %v3746 = vld [vmem:[#allocation12 + $0x758] sm:$0xff]
    %v3747 = vld [vmem:[#allocation12 + $0x760] sm:$0xff]
    %v3748 = vld [vmem:[#allocation12 + $0x768] sm:$0xff]
    %v3749 = vld [vmem:[#allocation12 + $0x770] sm:$0xff]
    %v3750 = vld [vmem:[#allocation12 + $0x778] sm:$0xff]
    %v3751 = vld [vmem:[#allocation12 + $0x780] sm:$0xff]
    %v3752 = vld [vmem:[#allocation12 + $0x788] sm:$0xff]
    %v3753 = vld [vmem:[#allocation12 + $0x790] sm:$0xff]
    %v3754 = vld [vmem:[#allocation12 + $0x798] sm:$0xff]
    %v3755 = vld [vmem:[#allocation12 + $0x7a0] sm:$0xff]
    %v3756 = vld [vmem:[#allocation12 + $0x7a8] sm:$0xff]
    %v3757 = vld [vmem:[#allocation12 + $0x7b0] sm:$0xff]
    %v3758 = vld [vmem:[#allocation12 + $0x7b8] sm:$0xff]
    %v3759 = vld [vmem:[#allocation12 + $0x7c0] sm:$0xff]
    %v3760 = vld [vmem:[#allocation12 + $0x7c8] sm:$0xff]
    %v3761 = vld [vmem:[#allocation12 + $0x7d0] sm:$0xff]
    %v3762 = vld [vmem:[#allocation12 + $0x7d8] sm:$0xff]
    %v3763 = vld [vmem:[#allocation12 + $0x7e0] sm:$0xff]
    %v3764 = vld [vmem:[#allocation12 + $0x7e8] sm:$0xff]
    %v3765 = vld [vmem:[#allocation12 + $0x7f0] sm:$0xff]
    %v3766 = vld [vmem:[#allocation12 + $0x7f8] sm:$0xff]
    %3767 = vmatpush.msra.mxu0 %v3571
    %3768 = vmatpush.msra.mxu0 %v3567
    %3769 = vmatpush.msra.mxu0 %v3563
    %3770 = vmatpush.msra.mxu0 %v3559
    %3771 = vmatpush.msra.mxu0 %v3555
    %3772 = vmatpush.msra.mxu0 %v3551
    %3773 = vmatpush.msra.mxu0 %v3547
    %3774 = vmatpush.msra.mxu0 %v3543
    %3775 = vmatpush.msra.mxu0 %v3539
    %3776 = vmatpush.msra.mxu0 %v3535
    %3777 = vmatpush.msra.mxu0 %v3531
    %3778 = vmatpush.msra.mxu0 %v3527
    %3779 = vmatpush.msra.mxu0 %v3523
    %3780 = vmatpush.msra.mxu0 %v3519
    %3781 = vmatpush.msra.mxu0 %v3515
    %3782 = vmatpush.msra.mxu0 %v3511
    %3783 = vmatmul.f32.gmra.mxu0 %v3489
    %v3784 = vpop.f32.mrf.mxu0
    %v3785 = vadd.f32 0.0, %v3784
    %3786 = vdwg.mxu0
    %3787 = vmatpush.msra.mxu0 %v3635
    %3788 = vmatpush.msra.mxu0 %v3631
    %3789 = vmatpush.msra.mxu0 %v3627
    %3790 = vmatpush.msra.mxu0 %v3623
    %3791 = vmatpush.msra.mxu0 %v3619
    %3792 = vmatpush.msra.mxu0 %v3615
    %3793 = vmatpush.msra.mxu0 %v3611
    %3794 = vmatpush.msra.mxu0 %v3607
    %3795 = vmatpush.msra.mxu0 %v3603
    %3796 = vmatpush.msra.mxu0 %v3599
    %3797 = vmatpush.msra.mxu0 %v3595
    %3798 = vmatpush.msra.mxu0 %v3591
    %3799 = vmatpush.msra.mxu0 %v3587
    %3800 = vmatpush.msra.mxu0 %v3583
    %3801 = vmatpush.msra.mxu0 %v3579
    %3802 = vmatpush.msra.mxu0 %v3575
    %3803 = vmatmul.f32.gmra.mxu0 %v3496
    %v3804 = vpop.f32.mrf.mxu0
    %v3805 = vadd.f32 %v3785, %v3804
    %3806 = vdwg.mxu0
    %3807 = vmatpush.msra.mxu0 %v3699
    %3808 = vmatpush.msra.mxu0 %v3695
    %3809 = vmatpush.msra.mxu0 %v3691
    %3810 = vmatpush.msra.mxu0 %v3687
    %3811 = vmatpush.msra.mxu0 %v3683
    %3812 = vmatpush.msra.mxu0 %v3679
    %3813 = vmatpush.msra.mxu0 %v3675
    %3814 = vmatpush.msra.mxu0 %v3671
    %3815 = vmatpush.msra.mxu0 %v3667
    %3816 = vmatpush.msra.mxu0 %v3663
    %3817 = vmatpush.msra.mxu0 %v3659
    %3818 = vmatpush.msra.mxu0 %v3655
    %3819 = vmatpush.msra.mxu0 %v3651
    %3820 = vmatpush.msra.mxu0 %v3647
    %3821 = vmatpush.msra.mxu0 %v3643
    %3822 = vmatpush.msra.mxu0 %v3639
    %3823 = vmatmul.f32.gmra.mxu0 %v3503
    %v3824 = vpop.f32.mrf.mxu0
    %v3825 = vadd.f32 %v3805, %v3824
    %3826 = vdwg.mxu0
    %3827 = vmatpush.msra.mxu0 %v3763
    %3828 = vmatpush.msra.mxu0 %v3759
    %3829 = vmatpush.msra.mxu0 %v3755
    %3830 = vmatpush.msra.mxu0 %v3751
    %3831 = vmatpush.msra.mxu0 %v3747
    %3832 = vmatpush.msra.mxu0 %v3743
    %3833 = vmatpush.msra.mxu0 %v3739
    %3834 = vmatpush.msra.mxu0 %v3735
    %3835 = vmatpush.msra.mxu0 %v3731
    %3836 = vmatpush.msra.mxu0 %v3727
    %3837 = vmatpush.msra.mxu0 %v3723
    %3838 = vmatpush.msra.mxu0 %v3719
    %3839 = vmatpush.msra.mxu0 %v3715
    %3840 = vmatpush.msra.mxu0 %v3711
    %3841 = vmatpush.msra.mxu0 %v3707
    %3842 = vmatpush.msra.mxu0 %v3703
    %3843 = vmatmul.f32.gmra.mxu0 %v3510
    %v3844 = vpop.f32.mrf.mxu0
    %v3845 = vadd.f32 %v3825, %v3844
    %3846 = vdwg.mxu0
    %3847 = vmatpush.msra.mxu0 %v3572
    %3848 = vmatpush.msra.mxu0 %v3568
    %3849 = vmatpush.msra.mxu0 %v3564
    %3850 = vmatpush.msra.mxu0 %v3560
    %3851 = vmatpush.msra.mxu0 %v3556
    %3852 = vmatpush.msra.mxu0 %v3552
    %3853 = vmatpush.msra.mxu0 %v3548
    %3854 = vmatpush.msra.mxu0 %v3544
    %3855 = vmatpush.msra.mxu0 %v3540
    %3856 = vmatpush.msra.mxu0 %v3536
    %3857 = vmatpush.msra.mxu0 %v3532
    %3858 = vmatpush.msra.mxu0 %v3528
    %3859 = vmatpush.msra.mxu0 %v3524
    %3860 = vmatpush.msra.mxu0 %v3520
    %3861 = vmatpush.msra.mxu0 %v3516
    %3862 = vmatpush.msra.mxu0 %v3512
    %3863 = vmatmul.f32.gmra.mxu0 %v3489
    %v3864 = vpop.f32.mrf.mxu0
    %v3865 = vadd.f32 0.0, %v3864
    %3866 = vdwg.mxu0
    %3867 = vmatpush.msra.mxu0 %v3636
    %3868 = vmatpush.msra.mxu0 %v3632
    %3869 = vmatpush.msra.mxu0 %v3628
    %3870 = vmatpush.msra.mxu0 %v3624
    %3871 = vmatpush.msra.mxu0 %v3620
    %3872 = vmatpush.msra.mxu0 %v3616
    %3873 = vmatpush.msra.mxu0 %v3612
    %3874 = vmatpush.msra.mxu0 %v3608
    %3875 = vmatpush.msra.mxu0 %v3604
    %3876 = vmatpush.msra.mxu0 %v3600
    %3877 = vmatpush.msra.mxu0 %v3596
    %3878 = vmatpush.msra.mxu0 %v3592
    %3879 = vmatpush.msra.mxu0 %v3588
    %3880 = vmatpush.msra.mxu0 %v3584
    %3881 = vmatpush.msra.mxu0 %v3580
    %3882 = vmatpush.msra.mxu0 %v3576
    %3883 = vmatmul.f32.gmra.mxu0 %v3496
    %v3884 = vpop.f32.mrf.mxu0
    %v3885 = vadd.f32 %v3865, %v3884
    %3886 = vdwg.mxu0
    %3887 = vmatpush.msra.mxu0 %v3700
    %3888 = vmatpush.msra.mxu0 %v3696
    %3889 = vmatpush.msra.mxu0 %v3692
    %3890 = vmatpush.msra.mxu0 %v3688
    %3891 = vmatpush.msra.mxu0 %v3684
    %3892 = vmatpush.msra.mxu0 %v3680
    %3893 = vmatpush.msra.mxu0 %v3676
    %3894 = vmatpush.msra.mxu0 %v3672
    %3895 = vmatpush.msra.mxu0 %v3668
    %3896 = vmatpush.msra.mxu0 %v3664
    %3897 = vmatpush.msra.mxu0 %v3660
    %3898 = vmatpush.msra.mxu0 %v3656
    %3899 = vmatpush.msra.mxu0 %v3652
    %3900 = vmatpush.msra.mxu0 %v3648
    %3901 = vmatpush.msra.mxu0 %v3644
    %3902 = vmatpush.msra.mxu0 %v3640
    %3903 = vmatmul.f32.gmra.mxu0 %v3503
    %v3904 = vpop.f32.mrf.mxu0
    %v3905 = vadd.f32 %v3885, %v3904
    %3906 = vdwg.mxu0
    %3907 = vmatpush.msra.mxu0 %v3764
    %3908 = vmatpush.msra.mxu0 %v3760
    %3909 = vmatpush.msra.mxu0 %v3756
    %3910 = vmatpush.msra.mxu0 %v3752
    %3911 = vmatpush.msra.mxu0 %v3748
    %3912 = vmatpush.msra.mxu0 %v3744
    %3913 = vmatpush.msra.mxu0 %v3740
    %3914 = vmatpush.msra.mxu0 %v3736
    %3915 = vmatpush.msra.mxu0 %v3732
    %3916 = vmatpush.msra.mxu0 %v3728
    %3917 = vmatpush.msra.mxu0 %v3724
    %3918 = vmatpush.msra.mxu0 %v3720
    %3919 = vmatpush.msra.mxu0 %v3716
    %3920 = vmatpush.msra.mxu0 %v3712
    %3921 = vmatpush.msra.mxu0 %v3708
    %3922 = vmatpush.msra.mxu0 %v3704
    %3923 = vmatmul.f32.gmra.mxu0 %v3510
    %v3924 = vpop.f32.mrf.mxu0
    %v3925 = vadd.f32 %v3905, %v3924
    %3926 = vdwg.mxu0
    %3927 = vmatpush.msra.mxu0 %v3573
    %3928 = vmatpush.msra.mxu0 %v3569
    %3929 = vmatpush.msra.mxu0 %v3565
    %3930 = vmatpush.msra.mxu0 %v3561
    %3931 = vmatpush.msra.mxu0 %v3557
    %3932 = vmatpush.msra.mxu0 %v3553
    %3933 = vmatpush.msra.mxu0 %v3549
    %3934 = vmatpush.msra.mxu0 %v3545
    %3935 = vmatpush.msra.mxu0 %v3541
    %3936 = vmatpush.msra.mxu0 %v3537
    %3937 = vmatpush.msra.mxu0 %v3533
    %3938 = vmatpush.msra.mxu0 %v3529
    %3939 = vmatpush.msra.mxu0 %v3525
    %3940 = vmatpush.msra.mxu0 %v3521
    %3941 = vmatpush.msra.mxu0 %v3517
    %3942 = vmatpush.msra.mxu0 %v3513
    %3943 = vmatmul.f32.gmra.mxu0 %v3489
    %v3944 = vpop.f32.mrf.mxu0
    %v3945 = vadd.f32 0.0, %v3944
    %3946 = vdwg.mxu0
    %3947 = vmatpush.msra.mxu0 %v3637
    %3948 = vmatpush.msra.mxu0 %v3633
    %3949 = vmatpush.msra.mxu0 %v3629
    %3950 = vmatpush.msra.mxu0 %v3625
    %3951 = vmatpush.msra.mxu0 %v3621
    %3952 = vmatpush.msra.mxu0 %v3617
    %3953 = vmatpush.msra.mxu0 %v3613
    %3954 = vmatpush.msra.mxu0 %v3609
    %3955 = vmatpush.msra.mxu0 %v3605
    %3956 = vmatpush.msra.mxu0 %v3601
    %3957 = vmatpush.msra.mxu0 %v3597
    %3958 = vmatpush.msra.mxu0 %v3593
    %3959 = vmatpush.msra.mxu0 %v3589
    %3960 = vmatpush.msra.mxu0 %v3585
    %3961 = vmatpush.msra.mxu0 %v3581
    %3962 = vmatpush.msra.mxu0 %v3577
    %3963 = vmatmul.f32.gmra.mxu0 %v3496
    %v3964 = vpop.f32.mrf.mxu0
    %v3965 = vadd.f32 %v3945, %v3964
    %3966 = vdwg.mxu0
    %3967 = vmatpush.msra.mxu0 %v3701
    %3968 = vmatpush.msra.mxu0 %v3697
    %3969 = vmatpush.msra.mxu0 %v3693
    %3970 = vmatpush.msra.mxu0 %v3689
    %3971 = vmatpush.msra.mxu0 %v3685
    %3972 = vmatpush.msra.mxu0 %v3681
    %3973 = vmatpush.msra.mxu0 %v3677
    %3974 = vmatpush.msra.mxu0 %v3673
    %3975 = vmatpush.msra.mxu0 %v3669
    %3976 = vmatpush.msra.mxu0 %v3665
    %3977 = vmatpush.msra.mxu0 %v3661
    %3978 = vmatpush.msra.mxu0 %v3657
    %3979 = vmatpush.msra.mxu0 %v3653
    %3980 = vmatpush.msra.mxu0 %v3649
    %3981 = vmatpush.msra.mxu0 %v3645
    %3982 = vmatpush.msra.mxu0 %v3641
    %3983 = vmatmul.f32.gmra.mxu0 %v3503
    %v3984 = vpop.f32.mrf.mxu0
    %v3985 = vadd.f32 %v3965, %v3984
    %3986 = vdwg.mxu0
    %3987 = vmatpush.msra.mxu0 %v3765
    %3988 = vmatpush.msra.mxu0 %v3761
    %3989 = vmatpush.msra.mxu0 %v3757
    %3990 = vmatpush.msra.mxu0 %v3753
    %3991 = vmatpush.msra.mxu0 %v3749
    %3992 = vmatpush.msra.mxu0 %v3745
    %3993 = vmatpush.msra.mxu0 %v3741
    %3994 = vmatpush.msra.mxu0 %v3737
    %3995 = vmatpush.msra.mxu0 %v3733
    %3996 = vmatpush.msra.mxu0 %v3729
    %3997 = vmatpush.msra.mxu0 %v3725
    %3998 = vmatpush.msra.mxu0 %v3721
    %3999 = vmatpush.msra.mxu0 %v3717
    %4000 = vmatpush.msra.mxu0 %v3713
    %4001 = vmatpush.msra.mxu0 %v3709
    %4002 = vmatpush.msra.mxu0 %v3705
    %4003 = vmatmul.f32.gmra.mxu0 %v3510
    %v4004 = vpop.f32.mrf.mxu0
    %v4005 = vadd.f32 %v3985, %v4004
    %4006 = vdwg.mxu0
    %4007 = vmatpush.msra.mxu0 %v3574
    %4008 = vmatpush.msra.mxu0 %v3570
    %4009 = vmatpush.msra.mxu0 %v3566
    %4010 = vmatpush.msra.mxu0 %v3562
    %4011 = vmatpush.msra.mxu0 %v3558
    %4012 = vmatpush.msra.mxu0 %v3554
    %4013 = vmatpush.msra.mxu0 %v3550
    %4014 = vmatpush.msra.mxu0 %v3546
    %4015 = vmatpush.msra.mxu0 %v3542
    %4016 = vmatpush.msra.mxu0 %v3538
    %4017 = vmatpush.msra.mxu0 %v3534
    %4018 = vmatpush.msra.mxu0 %v3530
    %4019 = vmatpush.msra.mxu0 %v3526
    %4020 = vmatpush.msra.mxu0 %v3522
    %4021 = vmatpush.msra.mxu0 %v3518
    %4022 = vmatpush.msra.mxu0 %v3514
    %4023 = vmatmul.f32.gmra.mxu0 %v3489
    %v4024 = vpop.f32.mrf.mxu0
    %v4025 = vadd.f32 0.0, %v4024
    %4026 = vdwg.mxu0
    %4027 = vmatpush.msra.mxu0 %v3638
    %4028 = vmatpush.msra.mxu0 %v3634
    %4029 = vmatpush.msra.mxu0 %v3630
    %4030 = vmatpush.msra.mxu0 %v3626
    %4031 = vmatpush.msra.mxu0 %v3622
    %4032 = vmatpush.msra.mxu0 %v3618
    %4033 = vmatpush.msra.mxu0 %v3614
    %4034 = vmatpush.msra.mxu0 %v3610
    %4035 = vmatpush.msra.mxu0 %v3606
    %4036 = vmatpush.msra.mxu0 %v3602
    %4037 = vmatpush.msra.mxu0 %v3598
    %4038 = vmatpush.msra.mxu0 %v3594
    %4039 = vmatpush.msra.mxu0 %v3590
    %4040 = vmatpush.msra.mxu0 %v3586
    %4041 = vmatpush.msra.mxu0 %v3582
    %4042 = vmatpush.msra.mxu0 %v3578
    %4043 = vmatmul.f32.gmra.mxu0 %v3496
    %v4044 = vpop.f32.mrf.mxu0
    %v4045 = vadd.f32 %v4025, %v4044
    %4046 = vdwg.mxu0
    %4047 = vmatpush.msra.mxu0 %v3702
    %4048 = vmatpush.msra.mxu0 %v3698
    %4049 = vmatpush.msra.mxu0 %v3694
    %4050 = vmatpush.msra.mxu0 %v3690
    %4051 = vmatpush.msra.mxu0 %v3686
    %4052 = vmatpush.msra.mxu0 %v3682
    %4053 = vmatpush.msra.mxu0 %v3678
    %4054 = vmatpush.msra.mxu0 %v3674
    %4055 = vmatpush.msra.mxu0 %v3670
    %4056 = vmatpush.msra.mxu0 %v3666
    %4057 = vmatpush.msra.mxu0 %v3662
    %4058 = vmatpush.msra.mxu0 %v3658
    %4059 = vmatpush.msra.mxu0 %v3654
    %4060 = vmatpush.msra.mxu0 %v3650
    %4061 = vmatpush.msra.mxu0 %v3646
    %4062 = vmatpush.msra.mxu0 %v3642
    %4063 = vmatmul.f32.gmra.mxu0 %v3503
    %v4064 = vpop.f32.mrf.mxu0
    %v4065 = vadd.f32 %v4045, %v4064
    %4066 = vdwg.mxu0
    %4067 = vmatpush.msra.mxu0 %v3766
    %4068 = vmatpush.msra.mxu0 %v3762
    %4069 = vmatpush.msra.mxu0 %v3758
    %4070 = vmatpush.msra.mxu0 %v3754
    %4071 = vmatpush.msra.mxu0 %v3750
    %4072 = vmatpush.msra.mxu0 %v3746
    %4073 = vmatpush.msra.mxu0 %v3742
    %4074 = vmatpush.msra.mxu0 %v3738
    %4075 = vmatpush.msra.mxu0 %v3734
    %4076 = vmatpush.msra.mxu0 %v3730
    %4077 = vmatpush.msra.mxu0 %v3726
    %4078 = vmatpush.msra.mxu0 %v3722
    %4079 = vmatpush.msra.mxu0 %v3718
    %4080 = vmatpush.msra.mxu0 %v3714
    %4081 = vmatpush.msra.mxu0 %v3710
    %4082 = vmatpush.msra.mxu0 %v3706
    %4083 = vmatmul.f32.gmra.mxu0 %v3510
    %v4084 = vpop.f32.mrf.mxu0
    %v4085 = vadd.f32 %v4065, %v4084
    %4086 = vdwg.mxu0
    %v4087 = vperm.slane %v3845, 0
    %v4088 = vperm.slane %v3925, 0
    %v4089 = vperm.slane %v4005, 0
    %v4090 = vperm.slane %v4085, 0
    %v4091 = vsub.f32 %v2845, %v4087
    %v4092 = vsub.f32 %v3054, %v4088
    %v4093 = vsub.f32 %v3263, %v4089
    %v4094 = vsub.f32 %v3472, %v4090
    %v4095 = vsub.f32 %v2847, %v4087
    %v4096 = vsub.f32 %v3056, %v4088
    %v4097 = vsub.f32 %v3265, %v4089
    %v4098 = vsub.f32 %v3474, %v4090
    %v4099 = vmul.f32 %v4091, %v4091
    %v4100 = vmul.f32 %v4092, %v4092
    %v4101 = vmul.f32 %v4093, %v4093
    %v4102 = vmul.f32 %v4094, %v4094
    %v4103 = vmul.f32 %v4095, %v4095
    %v4104 = vmul.f32 %v4096, %v4096
    %v4105 = vmul.f32 %v4097, %v4097
    %v4106 = vmul.f32 %v4098, %v4098
    %v4107 = vadd.f32 %v4099, %v4103
    %v4108 = vrot.slane %v4107, 4
    %v4109 = vadd.f32 %v4107, %v4108
    %v4110 = vrot.slane %v4109, 2
    %v4111 = vadd.f32 %v4109, %v4110
    %v4112 = vrot.slane %v4111, 1
    %v4113 = vadd.f32 %v4111, %v4112
    %v4114 = vadd.f32 %v4100, %v4104
    %v4115 = vrot.slane %v4114, 4
    %v4116 = vadd.f32 %v4114, %v4115
    %v4117 = vrot.slane %v4116, 2
    %v4118 = vadd.f32 %v4116, %v4117
    %v4119 = vrot.slane %v4118, 1
    %v4120 = vadd.f32 %v4118, %v4119
    %v4121 = vadd.f32 %v4101, %v4105
    %v4122 = vrot.slane %v4121, 4
    %v4123 = vadd.f32 %v4121, %v4122
    %v4124 = vrot.slane %v4123, 2
    %v4125 = vadd.f32 %v4123, %v4124
    %v4126 = vrot.slane %v4125, 1
    %v4127 = vadd.f32 %v4125, %v4126
    %v4128 = vadd.f32 %v4102, %v4106
    %v4129 = vrot.slane %v4128, 4
    %v4130 = vadd.f32 %v4128, %v4129
    %v4131 = vrot.slane %v4130, 2
    %v4132 = vadd.f32 %v4130, %v4131
    %v4133 = vrot.slane %v4132, 1
    %v4134 = vadd.f32 %v4132, %v4133
    %4135 = vmatpush.msra.mxu0 %v3571
    %4136 = vmatpush.msra.mxu0 %v3567
    %4137 = vmatpush.msra.mxu0 %v3563
    %4138 = vmatpush.msra.mxu0 %v3559
    %4139 = vmatpush.msra.mxu0 %v3555
    %4140 = vmatpush.msra.mxu0 %v3551
    %4141 = vmatpush.msra.mxu0 %v3547
    %4142 = vmatpush.msra.mxu0 %v3543
    %4143 = vmatpush.msra.mxu0 %v3539
    %4144 = vmatpush.msra.mxu0 %v3535
    %4145 = vmatpush.msra.mxu0 %v3531
    %4146 = vmatpush.msra.mxu0 %v3527
    %4147 = vmatpush.msra.mxu0 %v3523
    %4148 = vmatpush.msra.mxu0 %v3519
    %4149 = vmatpush.msra.mxu0 %v3515
    %4150 = vmatpush.msra.mxu0 %v3511
    %4151 = vmatmul.f32.gmra.mxu0 %v4113
    %v4152 = vpop.f32.mrf.mxu0
    %v4153 = vadd.f32 1e-05, %v4152
    %4154 = vdwg.mxu0
    %4155 = vmatpush.msra.mxu0 %v3635
    %4156 = vmatpush.msra.mxu0 %v3631
    %4157 = vmatpush.msra.mxu0 %v3627
    %4158 = vmatpush.msra.mxu0 %v3623
    %4159 = vmatpush.msra.mxu0 %v3619
    %4160 = vmatpush.msra.mxu0 %v3615
    %4161 = vmatpush.msra.mxu0 %v3611
    %4162 = vmatpush.msra.mxu0 %v3607
    %4163 = vmatpush.msra.mxu0 %v3603
    %4164 = vmatpush.msra.mxu0 %v3599
    %4165 = vmatpush.msra.mxu0 %v3595
    %4166 = vmatpush.msra.mxu0 %v3591
    %4167 = vmatpush.msra.mxu0 %v3587
    %4168 = vmatpush.msra.mxu0 %v3583
    %4169 = vmatpush.msra.mxu0 %v3579
    %4170 = vmatpush.msra.mxu0 %v3575
    %4171 = vmatmul.f32.gmra.mxu0 %v4120
    %v4172 = vpop.f32.mrf.mxu0
    %v4173 = vadd.f32 %v4153, %v4172
    %4174 = vdwg.mxu0
    %4175 = vmatpush.msra.mxu0 %v3699
    %4176 = vmatpush.msra.mxu0 %v3695
    %4177 = vmatpush.msra.mxu0 %v3691
    %4178 = vmatpush.msra.mxu0 %v3687
    %4179 = vmatpush.msra.mxu0 %v3683
    %4180 = vmatpush.msra.mxu0 %v3679
    %4181 = vmatpush.msra.mxu0 %v3675
    %4182 = vmatpush.msra.mxu0 %v3671
    %4183 = vmatpush.msra.mxu0 %v3667
    %4184 = vmatpush.msra.mxu0 %v3663
    %4185 = vmatpush.msra.mxu0 %v3659
    %4186 = vmatpush.msra.mxu0 %v3655
    %4187 = vmatpush.msra.mxu0 %v3651
    %4188 = vmatpush.msra.mxu0 %v3647
    %4189 = vmatpush.msra.mxu0 %v3643
    %4190 = vmatpush.msra.mxu0 %v3639
    %4191 = vmatmul.f32.gmra.mxu0 %v4127
    %v4192 = vpop.f32.mrf.mxu0
    %v4193 = vadd.f32 %v4173, %v4192
    %4194 = vdwg.mxu0
    %4195 = vmatpush.msra.mxu0 %v3763
    %4196 = vmatpush.msra.mxu0 %v3759
    %4197 = vmatpush.msra.mxu0 %v3755
    %4198 = vmatpush.msra.mxu0 %v3751
    %4199 = vmatpush.msra.mxu0 %v3747
    %4200 = vmatpush.msra.mxu0 %v3743
    %4201 = vmatpush.msra.mxu0 %v3739
    %4202 = vmatpush.msra.mxu0 %v3735
    %4203 = vmatpush.msra.mxu0 %v3731
    %4204 = vmatpush.msra.mxu0 %v3727
    %4205 = vmatpush.msra.mxu0 %v3723
    %4206 = vmatpush.msra.mxu0 %v3719
    %4207 = vmatpush.msra.mxu0 %v3715
    %4208 = vmatpush.msra.mxu0 %v3711
    %4209 = vmatpush.msra.mxu0 %v3707
    %4210 = vmatpush.msra.mxu0 %v3703
    %4211 = vmatmul.f32.gmra.mxu0 %v4134
    %v4212 = vpop.f32.mrf.mxu0
    %v4213 = vadd.f32 %v4193, %v4212
    %4214 = vdwg.mxu0
    %4215 = vmatpush.msra.mxu0 %v3572
    %4216 = vmatpush.msra.mxu0 %v3568
    %4217 = vmatpush.msra.mxu0 %v3564
    %4218 = vmatpush.msra.mxu0 %v3560
    %4219 = vmatpush.msra.mxu0 %v3556
    %4220 = vmatpush.msra.mxu0 %v3552
    %4221 = vmatpush.msra.mxu0 %v3548
    %4222 = vmatpush.msra.mxu0 %v3544
    %4223 = vmatpush.msra.mxu0 %v3540
    %4224 = vmatpush.msra.mxu0 %v3536
    %4225 = vmatpush.msra.mxu0 %v3532
    %4226 = vmatpush.msra.mxu0 %v3528
    %4227 = vmatpush.msra.mxu0 %v3524
    %4228 = vmatpush.msra.mxu0 %v3520
    %4229 = vmatpush.msra.mxu0 %v3516
    %4230 = vmatpush.msra.mxu0 %v3512
    %4231 = vmatmul.f32.gmra.mxu0 %v4113
    %v4232 = vpop.f32.mrf.mxu0
    %v4233 = vadd.f32 1e-05, %v4232
    %4234 = vdwg.mxu0
    %4235 = vmatpush.msra.mxu0 %v3636
    %4236 = vmatpush.msra.mxu0 %v3632
    %4237 = vmatpush.msra.mxu0 %v3628
    %4238 = vmatpush.msra.mxu0 %v3624
    %4239 = vmatpush.msra.mxu0 %v3620
    %4240 = vmatpush.msra.mxu0 %v3616
    %4241 = vmatpush.msra.mxu0 %v3612
    %4242 = vmatpush.msra.mxu0 %v3608
    %4243 = vmatpush.msra.mxu0 %v3604
    %4244 = vmatpush.msra.mxu0 %v3600
    %4245 = vmatpush.msra.mxu0 %v3596
    %4246 = vmatpush.msra.mxu0 %v3592
    %4247 = vmatpush.msra.mxu0 %v3588
    %4248 = vmatpush.msra.mxu0 %v3584
    %4249 = vmatpush.msra.mxu0 %v3580
    %4250 = vmatpush.msra.mxu0 %v3576
    %4251 = vmatmul.f32.gmra.mxu0 %v4120
    %v4252 = vpop.f32.mrf.mxu0
    %v4253 = vadd.f32 %v4233, %v4252
    %4254 = vdwg.mxu0
    %4255 = vmatpush.msra.mxu0 %v3700
    %4256 = vmatpush.msra.mxu0 %v3696
    %4257 = vmatpush.msra.mxu0 %v3692
    %4258 = vmatpush.msra.mxu0 %v3688
    %4259 = vmatpush.msra.mxu0 %v3684
    %4260 = vmatpush.msra.mxu0 %v3680
    %4261 = vmatpush.msra.mxu0 %v3676
    %4262 = vmatpush.msra.mxu0 %v3672
    %4263 = vmatpush.msra.mxu0 %v3668
    %4264 = vmatpush.msra.mxu0 %v3664
    %4265 = vmatpush.msra.mxu0 %v3660
    %4266 = vmatpush.msra.mxu0 %v3656
    %4267 = vmatpush.msra.mxu0 %v3652
    %4268 = vmatpush.msra.mxu0 %v3648
    %4269 = vmatpush.msra.mxu0 %v3644
    %4270 = vmatpush.msra.mxu0 %v3640
    %4271 = vmatmul.f32.gmra.mxu0 %v4127
    %v4272 = vpop.f32.mrf.mxu0
    %v4273 = vadd.f32 %v4253, %v4272
    %4274 = vdwg.mxu0
    %4275 = vmatpush.msra.mxu0 %v3764
    %4276 = vmatpush.msra.mxu0 %v3760
    %4277 = vmatpush.msra.mxu0 %v3756
    %4278 = vmatpush.msra.mxu0 %v3752
    %4279 = vmatpush.msra.mxu0 %v3748
    %4280 = vmatpush.msra.mxu0 %v3744
    %4281 = vmatpush.msra.mxu0 %v3740
    %4282 = vmatpush.msra.mxu0 %v3736
    %4283 = vmatpush.msra.mxu0 %v3732
    %4284 = vmatpush.msra.mxu0 %v3728
    %4285 = vmatpush.msra.mxu0 %v3724
    %4286 = vmatpush.msra.mxu0 %v3720
    %4287 = vmatpush.msra.mxu0 %v3716
    %4288 = vmatpush.msra.mxu0 %v3712
    %4289 = vmatpush.msra.mxu0 %v3708
    %4290 = vmatpush.msra.mxu0 %v3704
    %4291 = vmatmul.f32.gmra.mxu0 %v4134
    %v4292 = vpop.f32.mrf.mxu0
    %v4293 = vadd.f32 %v4273, %v4292
    %4294 = vdwg.mxu0
    %4295 = vmatpush.msra.mxu0 %v3573
    %4296 = vmatpush.msra.mxu0 %v3569
    %4297 = vmatpush.msra.mxu0 %v3565
    %4298 = vmatpush.msra.mxu0 %v3561
    %4299 = vmatpush.msra.mxu0 %v3557
    %4300 = vmatpush.msra.mxu0 %v3553
    %4301 = vmatpush.msra.mxu0 %v3549
    %4302 = vmatpush.msra.mxu0 %v3545
    %4303 = vmatpush.msra.mxu0 %v3541
    %4304 = vmatpush.msra.mxu0 %v3537
    %4305 = vmatpush.msra.mxu0 %v3533
    %4306 = vmatpush.msra.mxu0 %v3529
    %4307 = vmatpush.msra.mxu0 %v3525
    %4308 = vmatpush.msra.mxu0 %v3521
    %4309 = vmatpush.msra.mxu0 %v3517
    %4310 = vmatpush.msra.mxu0 %v3513
    %4311 = vmatmul.f32.gmra.mxu0 %v4113
    %v4312 = vpop.f32.mrf.mxu0
    %v4313 = vadd.f32 1e-05, %v4312
    %4314 = vdwg.mxu0
    %4315 = vmatpush.msra.mxu0 %v3637
    %4316 = vmatpush.msra.mxu0 %v3633
    %4317 = vmatpush.msra.mxu0 %v3629
    %4318 = vmatpush.msra.mxu0 %v3625
    %4319 = vmatpush.msra.mxu0 %v3621
    %4320 = vmatpush.msra.mxu0 %v3617
    %4321 = vmatpush.msra.mxu0 %v3613
    %4322 = vmatpush.msra.mxu0 %v3609
    %4323 = vmatpush.msra.mxu0 %v3605
    %4324 = vmatpush.msra.mxu0 %v3601
    %4325 = vmatpush.msra.mxu0 %v3597
    %4326 = vmatpush.msra.mxu0 %v3593
    %4327 = vmatpush.msra.mxu0 %v3589
    %4328 = vmatpush.msra.mxu0 %v3585
    %4329 = vmatpush.msra.mxu0 %v3581
    %4330 = vmatpush.msra.mxu0 %v3577
    %4331 = vmatmul.f32.gmra.mxu0 %v4120
    %v4332 = vpop.f32.mrf.mxu0
    %v4333 = vadd.f32 %v4313, %v4332
    %4334 = vdwg.mxu0
    %4335 = vmatpush.msra.mxu0 %v3701
    %4336 = vmatpush.msra.mxu0 %v3697
    %4337 = vmatpush.msra.mxu0 %v3693
    %4338 = vmatpush.msra.mxu0 %v3689
    %4339 = vmatpush.msra.mxu0 %v3685
    %4340 = vmatpush.msra.mxu0 %v3681
    %4341 = vmatpush.msra.mxu0 %v3677
    %4342 = vmatpush.msra.mxu0 %v3673
    %4343 = vmatpush.msra.mxu0 %v3669
    %4344 = vmatpush.msra.mxu0 %v3665
    %4345 = vmatpush.msra.mxu0 %v3661
    %4346 = vmatpush.msra.mxu0 %v3657
    %4347 = vmatpush.msra.mxu0 %v3653
    %4348 = vmatpush.msra.mxu0 %v3649
    %4349 = vmatpush.msra.mxu0 %v3645
    %4350 = vmatpush.msra.mxu0 %v3641
    %4351 = vmatmul.f32.gmra.mxu0 %v4127
    %v4352 = vpop.f32.mrf.mxu0
    %v4353 = vadd.f32 %v4333, %v4352
    %4354 = vdwg.mxu0
    %4355 = vmatpush.msra.mxu0 %v3765
    %4356 = vmatpush.msra.mxu0 %v3761
    %4357 = vmatpush.msra.mxu0 %v3757
    %4358 = vmatpush.msra.mxu0 %v3753
    %4359 = vmatpush.msra.mxu0 %v3749
    %4360 = vmatpush.msra.mxu0 %v3745
    %4361 = vmatpush.msra.mxu0 %v3741
    %4362 = vmatpush.msra.mxu0 %v3737
    %4363 = vmatpush.msra.mxu0 %v3733
    %4364 = vmatpush.msra.mxu0 %v3729
    %4365 = vmatpush.msra.mxu0 %v3725
    %4366 = vmatpush.msra.mxu0 %v3721
    %4367 = vmatpush.msra.mxu0 %v3717
    %4368 = vmatpush.msra.mxu0 %v3713
    %4369 = vmatpush.msra.mxu0 %v3709
    %4370 = vmatpush.msra.mxu0 %v3705
    %4371 = vmatmul.f32.gmra.mxu0 %v4134
    %v4372 = vpop.f32.mrf.mxu0
    %v4373 = vadd.f32 %v4353, %v4372
    %4374 = vdwg.mxu0
    %4375 = vmatpush.msra.mxu0 %v3574
    %4376 = vmatpush.msra.mxu0 %v3570
    %4377 = vmatpush.msra.mxu0 %v3566
    %4378 = vmatpush.msra.mxu0 %v3562
    %4379 = vmatpush.msra.mxu0 %v3558
    %4380 = vmatpush.msra.mxu0 %v3554
    %4381 = vmatpush.msra.mxu0 %v3550
    %4382 = vmatpush.msra.mxu0 %v3546
    %4383 = vmatpush.msra.mxu0 %v3542
    %4384 = vmatpush.msra.mxu0 %v3538
    %4385 = vmatpush.msra.mxu0 %v3534
    %4386 = vmatpush.msra.mxu0 %v3530
    %4387 = vmatpush.msra.mxu0 %v3526
    %4388 = vmatpush.msra.mxu0 %v3522
    %4389 = vmatpush.msra.mxu0 %v3518
    %4390 = vmatpush.msra.mxu0 %v3514
    %4391 = vmatmul.f32.gmra.mxu0 %v4113
    %v4392 = vpop.f32.mrf.mxu0
    %v4393 = vadd.f32 1e-05, %v4392
    %4394 = vdwg.mxu0
    %4395 = vmatpush.msra.mxu0 %v3638
    %4396 = vmatpush.msra.mxu0 %v3634
    %4397 = vmatpush.msra.mxu0 %v3630
    %4398 = vmatpush.msra.mxu0 %v3626
    %4399 = vmatpush.msra.mxu0 %v3622
    %4400 = vmatpush.msra.mxu0 %v3618
    %4401 = vmatpush.msra.mxu0 %v3614
    %4402 = vmatpush.msra.mxu0 %v3610
    %4403 = vmatpush.msra.mxu0 %v3606
    %4404 = vmatpush.msra.mxu0 %v3602
    %4405 = vmatpush.msra.mxu0 %v3598
    %4406 = vmatpush.msra.mxu0 %v3594
    %4407 = vmatpush.msra.mxu0 %v3590
    %4408 = vmatpush.msra.mxu0 %v3586
    %4409 = vmatpush.msra.mxu0 %v3582
    %4410 = vmatpush.msra.mxu0 %v3578
    %4411 = vmatmul.f32.gmra.mxu0 %v4120
    %v4412 = vpop.f32.mrf.mxu0
    %v4413 = vadd.f32 %v4393, %v4412
    %4414 = vdwg.mxu0
    %4415 = vmatpush.msra.mxu0 %v3702
    %4416 = vmatpush.msra.mxu0 %v3698
    %4417 = vmatpush.msra.mxu0 %v3694
    %4418 = vmatpush.msra.mxu0 %v3690
    %4419 = vmatpush.msra.mxu0 %v3686
    %4420 = vmatpush.msra.mxu0 %v3682
    %4421 = vmatpush.msra.mxu0 %v3678
    %4422 = vmatpush.msra.mxu0 %v3674
    %4423 = vmatpush.msra.mxu0 %v3670
    %4424 = vmatpush.msra.mxu0 %v3666
    %4425 = vmatpush.msra.mxu0 %v3662
    %4426 = vmatpush.msra.mxu0 %v3658
    %4427 = vmatpush.msra.mxu0 %v3654
    %4428 = vmatpush.msra.mxu0 %v3650
    %4429 = vmatpush.msra.mxu0 %v3646
    %4430 = vmatpush.msra.mxu0 %v3642
    %4431 = vmatmul.f32.gmra.mxu0 %v4127
    %v4432 = vpop.f32.mrf.mxu0
    %v4433 = vadd.f32 %v4413, %v4432
    %4434 = vdwg.mxu0
    %4435 = vmatpush.msra.mxu0 %v3766
    %4436 = vmatpush.msra.mxu0 %v3762
    %4437 = vmatpush.msra.mxu0 %v3758
    %4438 = vmatpush.msra.mxu0 %v3754
    %4439 = vmatpush.msra.mxu0 %v3750
    %4440 = vmatpush.msra.mxu0 %v3746
    %4441 = vmatpush.msra.mxu0 %v3742
    %4442 = vmatpush.msra.mxu0 %v3738
    %4443 = vmatpush.msra.mxu0 %v3734
    %4444 = vmatpush.msra.mxu0 %v3730
    %4445 = vmatpush.msra.mxu0 %v3726
    %4446 = vmatpush.msra.mxu0 %v3722
    %4447 = vmatpush.msra.mxu0 %v3718
    %4448 = vmatpush.msra.mxu0 %v3714
    %4449 = vmatpush.msra.mxu0 %v3710
    %4450 = vmatpush.msra.mxu0 %v3706
    %4451 = vmatmul.f32.gmra.mxu0 %v4134
    %v4452 = vpop.f32.mrf.mxu0
    %v4453 = vadd.f32 %v4433, %v4452
    %4454 = vdwg.mxu0
    %v4455 = vrsqrt.pop %v4213
    %v4456 = vmul.f32 %v4455, %v4213
    %v4457 = vmul.f32 %v4456, %v4455
    %v4458 = vmul.f32 0.5, %v4457
    %v4459 = vsub.f32 1.5, %v4458
    %v4460 = vmul.f32 %v4455, %v4459
    %vm4461 = vweird.f32 %v4213
    %vm4462 = vweird.f32 %v4455
    %vm4463 = vmor %vm4461, %vm4462
    %v4464 = vsel %vm4463, %v4455, %v4460
    %v4465 = vrsqrt.pop %v4293
    %v4466 = vmul.f32 %v4465, %v4293
    %v4467 = vmul.f32 %v4466, %v4465
    %v4468 = vmul.f32 0.5, %v4467
    %v4469 = vsub.f32 1.5, %v4468
    %v4470 = vmul.f32 %v4465, %v4469
    %vm4471 = vweird.f32 %v4293
    %vm4472 = vweird.f32 %v4465
    %vm4473 = vmor %vm4471, %vm4472
    %v4474 = vsel %vm4473, %v4465, %v4470
    %v4475 = vrsqrt.pop %v4373
    %v4476 = vmul.f32 %v4475, %v4373
    %v4477 = vmul.f32 %v4476, %v4475
    %v4478 = vmul.f32 0.5, %v4477
    %v4479 = vsub.f32 1.5, %v4478
    %v4480 = vmul.f32 %v4475, %v4479
    %vm4481 = vweird.f32 %v4373
    %vm4482 = vweird.f32 %v4475
    %vm4483 = vmor %vm4481, %vm4482
    %v4484 = vsel %vm4483, %v4475, %v4480
    %v4485 = vrsqrt.pop %v4453
    %v4486 = vmul.f32 %v4485, %v4453
    %v4487 = vmul.f32 %v4486, %v4485
    %v4488 = vmul.f32 0.5, %v4487
    %v4489 = vsub.f32 1.5, %v4488
    %v4490 = vmul.f32 %v4485, %v4489
    %vm4491 = vweird.f32 %v4453
    %vm4492 = vweird.f32 %v4485
    %vm4493 = vmor %vm4491, %vm4492
    %v4494 = vsel %vm4493, %v4485, %v4490
    %v4495 = vperm.slane %v4464, 0
    %v4496 = vperm.slane %v4474, 0
    %v4497 = vperm.slane %v4484, 0
    %v4498 = vperm.slane %v4494, 0
    %v4499 = vmul.f32 %v4091, %v4495
    %v4500 = vmul.f32 %v4092, %v4496
    %v4501 = vmul.f32 %v4093, %v4497
    %v4502 = vmul.f32 %v4094, %v4498
    %v4503 = vmul.f32 %v4095, %v4495
    %v4504 = vmul.f32 %v4096, %v4496
    %v4505 = vmul.f32 %v4097, %v4497
    %v4506 = vmul.f32 %v4098, %v4498
    %v4508 = vperm.slane %v3481, 0
    %v4509 = vperm.slane %v3481, 1
    %v4510 = vperm.slane %v3481, 2
    %v4511 = vperm.slane %v3481, 3
    %v4516 = vmul.f32 %v4499, %v4508
    %v4517 = vmul.f32 %v4500, %v4509
    %v4518 = vmul.f32 %v4501, %v4510
    %v4519 = vmul.f32 %v4502, %v4511
    %v4520 = vmul.f32 %v4503, %v4508
    %v4521 = vmul.f32 %v4504, %v4509
    %v4522 = vmul.f32 %v4505, %v4510
    %v4523 = vmul.f32 %v4506, %v4511
    %v4525 = vperm.slane %v3482, 0
    %v4526 = vperm.slane %v3482, 1
    %v4527 = vperm.slane %v3482, 2
    %v4528 = vperm.slane %v3482, 3
    %v4533 = vadd.f32 %v4516, %v4525
    %v4534 = vadd.f32 %v4517, %v4526
    %v4535 = vadd.f32 %v4518, %v4527
    %v4536 = vadd.f32 %v4519, %v4528
    %v4537 = vadd.f32 %v4520, %v4525
    %v4538 = vadd.f32 %v4521, %v4526
    %v4539 = vadd.f32 %v4522, %v4527
    %v4540 = vadd.f32 %v4523, %v4528
    %vm4541 = vcmp.ge.f32.partialorder %v4533, 0.0
    %vm4542 = vcmp.ge.f32.partialorder %v4534, 0.0
    %vm4543 = vcmp.ge.f32.partialorder %v4535, 0.0
    %vm4544 = vcmp.ge.f32.partialorder %v4536, 0.0
    %vm4545 = vcmp.ge.f32.partialorder %v4537, 0.0
    %vm4546 = vcmp.ge.f32.partialorder %v4538, 0.0
    %vm4547 = vcmp.ge.f32.partialorder %v4539, 0.0
    %vm4548 = vcmp.ge.f32.partialorder %v4540, 0.0
    %v4549 = vmul.f32 %v4533, 0.2
    %v4550 = vmul.f32 %v4534, 0.2
    %v4551 = vmul.f32 %v4535, 0.2
    %v4552 = vmul.f32 %v4536, 0.2
    %v4553 = vmul.f32 %v4537, 0.2
    %v4554 = vmul.f32 %v4538, 0.2
    %v4555 = vmul.f32 %v4539, 0.2
    %v4556 = vmul.f32 %v4540, 0.2
    %v4557 = vsel %vm4541, %v4533, %v4549
    %v4558 = vsel %vm4542, %v4534, %v4550
    %v4559 = vsel %vm4543, %v4535, %v4551
    %v4560 = vsel %vm4544, %v4536, %v4552
    %v4561 = vsel %vm4545, %v4537, %v4553
    %v4562 = vsel %vm4546, %v4538, %v4554
    %v4563 = vsel %vm4547, %v4539, %v4555
    %v4564 = vsel %vm4548, %v4540, %v4556
    %v4565 = vadd.f32 %v2850, %v2852
    %v4566 = vrot.slane %v4565, 4
    %v4567 = vadd.f32 %v4565, %v4566
    %v4568 = vrot.slane %v4567, 2
    %v4569 = vadd.f32 %v4567, %v4568
    %v4570 = vrot.slane %v4569, 1
    %v4571 = vadd.f32 %v4569, %v4570
    %v4572 = vadd.f32 %v3059, %v3061
    %v4573 = vrot.slane %v4572, 4
    %v4574 = vadd.f32 %v4572, %v4573
    %v4575 = vrot.slane %v4574, 2
    %v4576 = vadd.f32 %v4574, %v4575
    %v4577 = vrot.slane %v4576, 1
    %v4578 = vadd.f32 %v4576, %v4577
    %v4579 = vadd.f32 %v3268, %v3270
    %v4580 = vrot.slane %v4579, 4
    %v4581 = vadd.f32 %v4579, %v4580
    %v4582 = vrot.slane %v4581, 2
    %v4583 = vadd.f32 %v4581, %v4582
    %v4584 = vrot.slane %v4583, 1
    %v4585 = vadd.f32 %v4583, %v4584
    %v4586 = vadd.f32 %v3477, %v3479
    %v4587 = vrot.slane %v4586, 4
    %v4588 = vadd.f32 %v4586, %v4587
    %v4589 = vrot.slane %v4588, 2
    %v4590 = vadd.f32 %v4588, %v4589
    %v4591 = vrot.slane %v4590, 1
    %v4592 = vadd.f32 %v4590, %v4591
    %4593 = vmatpush.msra.mxu0 %v3571
    %4594 = vmatpush.msra.mxu0 %v3567
    %4595 = vmatpush.msra.mxu0 %v3563
    %4596 = vmatpush.msra.mxu0 %v3559
    %4597 = vmatpush.msra.mxu0 %v3555
    %4598 = vmatpush.msra.mxu0 %v3551
    %4599 = vmatpush.msra.mxu0 %v3547
    %4600 = vmatpush.msra.mxu0 %v3543
    %4601 = vmatpush.msra.mxu0 %v3539
    %4602 = vmatpush.msra.mxu0 %v3535
    %4603 = vmatpush.msra.mxu0 %v3531
    %4604 = vmatpush.msra.mxu0 %v3527
    %4605 = vmatpush.msra.mxu0 %v3523
    %4606 = vmatpush.msra.mxu0 %v3519
    %4607 = vmatpush.msra.mxu0 %v3515
    %4608 = vmatpush.msra.mxu0 %v3511
    %4609 = vmatmul.f32.gmra.mxu0 %v4571
    %v4610 = vpop.f32.mrf.mxu0
    %v4611 = vadd.f32 0.0, %v4610
    %4612 = vdwg.mxu0
    %4613 = vmatpush.msra.mxu0 %v3635
    %4614 = vmatpush.msra.mxu0 %v3631
    %4615 = vmatpush.msra.mxu0 %v3627
    %4616 = vmatpush.msra.mxu0 %v3623
    %4617 = vmatpush.msra.mxu0 %v3619
    %4618 = vmatpush.msra.mxu0 %v3615
    %4619 = vmatpush.msra.mxu0 %v3611
    %4620 = vmatpush.msra.mxu0 %v3607
    %4621 = vmatpush.msra.mxu0 %v3603
    %4622 = vmatpush.msra.mxu0 %v3599
    %4623 = vmatpush.msra.mxu0 %v3595
    %4624 = vmatpush.msra.mxu0 %v3591
    %4625 = vmatpush.msra.mxu0 %v3587
    %4626 = vmatpush.msra.mxu0 %v3583
    %4627 = vmatpush.msra.mxu0 %v3579
    %4628 = vmatpush.msra.mxu0 %v3575
    %4629 = vmatmul.f32.gmra.mxu0 %v4578
    %v4630 = vpop.f32.mrf.mxu0
    %v4631 = vadd.f32 %v4611, %v4630
    %4632 = vdwg.mxu0
    %4633 = vmatpush.msra.mxu0 %v3699
    %4634 = vmatpush.msra.mxu0 %v3695
    %4635 = vmatpush.msra.mxu0 %v3691
    %4636 = vmatpush.msra.mxu0 %v3687
    %4637 = vmatpush.msra.mxu0 %v3683
    %4638 = vmatpush.msra.mxu0 %v3679
    %4639 = vmatpush.msra.mxu0 %v3675
    %4640 = vmatpush.msra.mxu0 %v3671
    %4641 = vmatpush.msra.mxu0 %v3667
    %4642 = vmatpush.msra.mxu0 %v3663
    %4643 = vmatpush.msra.mxu0 %v3659
    %4644 = vmatpush.msra.mxu0 %v3655
    %4645 = vmatpush.msra.mxu0 %v3651
    %4646 = vmatpush.msra.mxu0 %v3647
    %4647 = vmatpush.msra.mxu0 %v3643
    %4648 = vmatpush.msra.mxu0 %v3639
    %4649 = vmatmul.f32.gmra.mxu0 %v4585
    %v4650 = vpop.f32.mrf.mxu0
    %v4651 = vadd.f32 %v4631, %v4650
    %4652 = vdwg.mxu0
    %4653 = vmatpush.msra.mxu0 %v3763
    %4654 = vmatpush.msra.mxu0 %v3759
    %4655 = vmatpush.msra.mxu0 %v3755
    %4656 = vmatpush.msra.mxu0 %v3751
    %4657 = vmatpush.msra.mxu0 %v3747
    %4658 = vmatpush.msra.mxu0 %v3743
    %4659 = vmatpush.msra.mxu0 %v3739
    %4660 = vmatpush.msra.mxu0 %v3735
    %4661 = vmatpush.msra.mxu0 %v3731
    %4662 = vmatpush.msra.mxu0 %v3727
    %4663 = vmatpush.msra.mxu0 %v3723
    %4664 = vmatpush.msra.mxu0 %v3719
    %4665 = vmatpush.msra.mxu0 %v3715
    %4666 = vmatpush.msra.mxu0 %v3711
    %4667 = vmatpush.msra.mxu0 %v3707
    %4668 = vmatpush.msra.mxu0 %v3703
    %4669 = vmatmul.f32.gmra.mxu0 %v4592
    %v4670 = vpop.f32.mrf.mxu0
    %v4671 = vadd.f32 %v4651, %v4670
    %4672 = vdwg.mxu0
    %4673 = vmatpush.msra.mxu0 %v3572
    %4674 = vmatpush.msra.mxu0 %v3568
    %4675 = vmatpush.msra.mxu0 %v3564
    %4676 = vmatpush.msra.mxu0 %v3560
    %4677 = vmatpush.msra.mxu0 %v3556
    %4678 = vmatpush.msra.mxu0 %v3552
    %4679 = vmatpush.msra.mxu0 %v3548
    %4680 = vmatpush.msra.mxu0 %v3544
    %4681 = vmatpush.msra.mxu0 %v3540
    %4682 = vmatpush.msra.mxu0 %v3536
    %4683 = vmatpush.msra.mxu0 %v3532
    %4684 = vmatpush.msra.mxu0 %v3528
    %4685 = vmatpush.msra.mxu0 %v3524
    %4686 = vmatpush.msra.mxu0 %v3520
    %4687 = vmatpush.msra.mxu0 %v3516
    %4688 = vmatpush.msra.mxu0 %v3512
    %4689 = vmatmul.f32.gmra.mxu0 %v4571
    %v4690 = vpop.f32.mrf.mxu0
    %v4691 = vadd.f32 0.0, %v4690
    %4692 = vdwg.mxu0
    %4693 = vmatpush.msra.mxu0 %v3636
    %4694 = vmatpush.msra.mxu0 %v3632
    %4695 = vmatpush.msra.mxu0 %v3628
    %4696 = vmatpush.msra.mxu0 %v3624
    %4697 = vmatpush.msra.mxu0 %v3620
    %4698 = vmatpush.msra.mxu0 %v3616
    %4699 = vmatpush.msra.mxu0 %v3612
    %4700 = vmatpush.msra.mxu0 %v3608
    %4701 = vmatpush.msra.mxu0 %v3604
    %4702 = vmatpush.msra.mxu0 %v3600
    %4703 = vmatpush.msra.mxu0 %v3596
    %4704 = vmatpush.msra.mxu0 %v3592
    %4705 = vmatpush.msra.mxu0 %v3588
    %4706 = vmatpush.msra.mxu0 %v3584
    %4707 = vmatpush.msra.mxu0 %v3580
    %4708 = vmatpush.msra.mxu0 %v3576
    %4709 = vmatmul.f32.gmra.mxu0 %v4578
    %v4710 = vpop.f32.mrf.mxu0
    %v4711 = vadd.f32 %v4691, %v4710
    %4712 = vdwg.mxu0
    %4713 = vmatpush.msra.mxu0 %v3700
    %4714 = vmatpush.msra.mxu0 %v3696
    %4715 = vmatpush.msra.mxu0 %v3692
    %4716 = vmatpush.msra.mxu0 %v3688
    %4717 = vmatpush.msra.mxu0 %v3684
    %4718 = vmatpush.msra.mxu0 %v3680
    %4719 = vmatpush.msra.mxu0 %v3676
    %4720 = vmatpush.msra.mxu0 %v3672
    %4721 = vmatpush.msra.mxu0 %v3668
    %4722 = vmatpush.msra.mxu0 %v3664
    %4723 = vmatpush.msra.mxu0 %v3660
    %4724 = vmatpush.msra.mxu0 %v3656
    %4725 = vmatpush.msra.mxu0 %v3652
    %4726 = vmatpush.msra.mxu0 %v3648
    %4727 = vmatpush.msra.mxu0 %v3644
    %4728 = vmatpush.msra.mxu0 %v3640
    %4729 = vmatmul.f32.gmra.mxu0 %v4585
    %v4730 = vpop.f32.mrf.mxu0
    %v4731 = vadd.f32 %v4711, %v4730
    %4732 = vdwg.mxu0
    %4733 = vmatpush.msra.mxu0 %v3764
    %4734 = vmatpush.msra.mxu0 %v3760
    %4735 = vmatpush.msra.mxu0 %v3756
    %4736 = vmatpush.msra.mxu0 %v3752
    %4737 = vmatpush.msra.mxu0 %v3748
    %4738 = vmatpush.msra.mxu0 %v3744
    %4739 = vmatpush.msra.mxu0 %v3740
    %4740 = vmatpush.msra.mxu0 %v3736
    %4741 = vmatpush.msra.mxu0 %v3732
    %4742 = vmatpush.msra.mxu0 %v3728
    %4743 = vmatpush.msra.mxu0 %v3724
    %4744 = vmatpush.msra.mxu0 %v3720
    %4745 = vmatpush.msra.mxu0 %v3716
    %4746 = vmatpush.msra.mxu0 %v3712
    %4747 = vmatpush.msra.mxu0 %v3708
    %4748 = vmatpush.msra.mxu0 %v3704
    %4749 = vmatmul.f32.gmra.mxu0 %v4592
    %v4750 = vpop.f32.mrf.mxu0
    %v4751 = vadd.f32 %v4731, %v4750
    %4752 = vdwg.mxu0
    %4753 = vmatpush.msra.mxu0 %v3573
    %4754 = vmatpush.msra.mxu0 %v3569
    %4755 = vmatpush.msra.mxu0 %v3565
    %4756 = vmatpush.msra.mxu0 %v3561
    %4757 = vmatpush.msra.mxu0 %v3557
    %4758 = vmatpush.msra.mxu0 %v3553
    %4759 = vmatpush.msra.mxu0 %v3549
    %4760 = vmatpush.msra.mxu0 %v3545
    %4761 = vmatpush.msra.mxu0 %v3541
    %4762 = vmatpush.msra.mxu0 %v3537
    %4763 = vmatpush.msra.mxu0 %v3533
    %4764 = vmatpush.msra.mxu0 %v3529
    %4765 = vmatpush.msra.mxu0 %v3525
    %4766 = vmatpush.msra.mxu0 %v3521
    %4767 = vmatpush.msra.mxu0 %v3517
    %4768 = vmatpush.msra.mxu0 %v3513
    %4769 = vmatmul.f32.gmra.mxu0 %v4571
    %v4770 = vpop.f32.mrf.mxu0
    %v4771 = vadd.f32 0.0, %v4770
    %4772 = vdwg.mxu0
    %4773 = vmatpush.msra.mxu0 %v3637
    %4774 = vmatpush.msra.mxu0 %v3633
    %4775 = vmatpush.msra.mxu0 %v3629
    %4776 = vmatpush.msra.mxu0 %v3625
    %4777 = vmatpush.msra.mxu0 %v3621
    %4778 = vmatpush.msra.mxu0 %v3617
    %4779 = vmatpush.msra.mxu0 %v3613
    %4780 = vmatpush.msra.mxu0 %v3609
    %4781 = vmatpush.msra.mxu0 %v3605
    %4782 = vmatpush.msra.mxu0 %v3601
    %4783 = vmatpush.msra.mxu0 %v3597
    %4784 = vmatpush.msra.mxu0 %v3593
    %4785 = vmatpush.msra.mxu0 %v3589
    %4786 = vmatpush.msra.mxu0 %v3585
    %4787 = vmatpush.msra.mxu0 %v3581
    %4788 = vmatpush.msra.mxu0 %v3577
    %4789 = vmatmul.f32.gmra.mxu0 %v4578
    %v4790 = vpop.f32.mrf.mxu0
    %v4791 = vadd.f32 %v4771, %v4790
    %4792 = vdwg.mxu0
    %4793 = vmatpush.msra.mxu0 %v3701
    %4794 = vmatpush.msra.mxu0 %v3697
    %4795 = vmatpush.msra.mxu0 %v3693
    %4796 = vmatpush.msra.mxu0 %v3689
    %4797 = vmatpush.msra.mxu0 %v3685
    %4798 = vmatpush.msra.mxu0 %v3681
    %4799 = vmatpush.msra.mxu0 %v3677
    %4800 = vmatpush.msra.mxu0 %v3673
    %4801 = vmatpush.msra.mxu0 %v3669
    %4802 = vmatpush.msra.mxu0 %v3665
    %4803 = vmatpush.msra.mxu0 %v3661
    %4804 = vmatpush.msra.mxu0 %v3657
    %4805 = vmatpush.msra.mxu0 %v3653
    %4806 = vmatpush.msra.mxu0 %v3649
    %4807 = vmatpush.msra.mxu0 %v3645
    %4808 = vmatpush.msra.mxu0 %v3641
    %4809 = vmatmul.f32.gmra.mxu0 %v4585
    %v4810 = vpop.f32.mrf.mxu0
    %v4811 = vadd.f32 %v4791, %v4810
    %4812 = vdwg.mxu0
    %4813 = vmatpush.msra.mxu0 %v3765
    %4814 = vmatpush.msra.mxu0 %v3761
    %4815 = vmatpush.msra.mxu0 %v3757
    %4816 = vmatpush.msra.mxu0 %v3753
    %4817 = vmatpush.msra.mxu0 %v3749
    %4818 = vmatpush.msra.mxu0 %v3745
    %4819 = vmatpush.msra.mxu0 %v3741
    %4820 = vmatpush.msra.mxu0 %v3737
    %4821 = vmatpush.msra.mxu0 %v3733
    %4822 = vmatpush.msra.mxu0 %v3729
    %4823 = vmatpush.msra.mxu0 %v3725
    %4824 = vmatpush.msra.mxu0 %v3721
    %4825 = vmatpush.msra.mxu0 %v3717
    %4826 = vmatpush.msra.mxu0 %v3713
    %4827 = vmatpush.msra.mxu0 %v3709
    %4828 = vmatpush.msra.mxu0 %v3705
    %4829 = vmatmul.f32.gmra.mxu0 %v4592
    %v4830 = vpop.f32.mrf.mxu0
    %v4831 = vadd.f32 %v4811, %v4830
    %4832 = vdwg.mxu0
    %4833 = vmatpush.msra.mxu0 %v3574
    %4834 = vmatpush.msra.mxu0 %v3570
    %4835 = vmatpush.msra.mxu0 %v3566
    %4836 = vmatpush.msra.mxu0 %v3562
    %4837 = vmatpush.msra.mxu0 %v3558
    %4838 = vmatpush.msra.mxu0 %v3554
    %4839 = vmatpush.msra.mxu0 %v3550
    %4840 = vmatpush.msra.mxu0 %v3546
    %4841 = vmatpush.msra.mxu0 %v3542
    %4842 = vmatpush.msra.mxu0 %v3538
    %4843 = vmatpush.msra.mxu0 %v3534
    %4844 = vmatpush.msra.mxu0 %v3530
    %4845 = vmatpush.msra.mxu0 %v3526
    %4846 = vmatpush.msra.mxu0 %v3522
    %4847 = vmatpush.msra.mxu0 %v3518
    %4848 = vmatpush.msra.mxu0 %v3514
    %4849 = vmatmul.f32.gmra.mxu0 %v4571
    %v4850 = vpop.f32.mrf.mxu0
    %v4851 = vadd.f32 0.0, %v4850
    %4852 = vdwg.mxu0
    %4853 = vmatpush.msra.mxu0 %v3638
    %4854 = vmatpush.msra.mxu0 %v3634
    %4855 = vmatpush.msra.mxu0 %v3630
    %4856 = vmatpush.msra.mxu0 %v3626
    %4857 = vmatpush.msra.mxu0 %v3622
    %4858 = vmatpush.msra.mxu0 %v3618
    %4859 = vmatpush.msra.mxu0 %v3614
    %4860 = vmatpush.msra.mxu0 %v3610
    %4861 = vmatpush.msra.mxu0 %v3606
    %4862 = vmatpush.msra.mxu0 %v3602
    %4863 = vmatpush.msra.mxu0 %v3598
    %4864 = vmatpush.msra.mxu0 %v3594
    %4865 = vmatpush.msra.mxu0 %v3590
    %4866 = vmatpush.msra.mxu0 %v3586
    %4867 = vmatpush.msra.mxu0 %v3582
    %4868 = vmatpush.msra.mxu0 %v3578
    %4869 = vmatmul.f32.gmra.mxu0 %v4578
    %v4870 = vpop.f32.mrf.mxu0
    %v4871 = vadd.f32 %v4851, %v4870
    %4872 = vdwg.mxu0
    %4873 = vmatpush.msra.mxu0 %v3702
    %4874 = vmatpush.msra.mxu0 %v3698
    %4875 = vmatpush.msra.mxu0 %v3694
    %4876 = vmatpush.msra.mxu0 %v3690
    %4877 = vmatpush.msra.mxu0 %v3686
    %4878 = vmatpush.msra.mxu0 %v3682
    %4879 = vmatpush.msra.mxu0 %v3678
    %4880 = vmatpush.msra.mxu0 %v3674
    %4881 = vmatpush.msra.mxu0 %v3670
    %4882 = vmatpush.msra.mxu0 %v3666
    %4883 = vmatpush.msra.mxu0 %v3662
    %4884 = vmatpush.msra.mxu0 %v3658
    %4885 = vmatpush.msra.mxu0 %v3654
    %4886 = vmatpush.msra.mxu0 %v3650
    %4887 = vmatpush.msra.mxu0 %v3646
    %4888 = vmatpush.msra.mxu0 %v3642
    %4889 = vmatmul.f32.gmra.mxu0 %v4585
    %v4890 = vpop.f32.mrf.mxu0
    %v4891 = vadd.f32 %v4871, %v4890
    %4892 = vdwg.mxu0
    %4893 = vmatpush.msra.mxu0 %v3766
    %4894 = vmatpush.msra.mxu0 %v3762
    %4895 = vmatpush.msra.mxu0 %v3758
    %4896 = vmatpush.msra.mxu0 %v3754
    %4897 = vmatpush.msra.mxu0 %v3750
    %4898 = vmatpush.msra.mxu0 %v3746
    %4899 = vmatpush.msra.mxu0 %v3742
    %4900 = vmatpush.msra.mxu0 %v3738
    %4901 = vmatpush.msra.mxu0 %v3734
    %4902 = vmatpush.msra.mxu0 %v3730
    %4903 = vmatpush.msra.mxu0 %v3726
    %4904 = vmatpush.msra.mxu0 %v3722
    %4905 = vmatpush.msra.mxu0 %v3718
    %4906 = vmatpush.msra.mxu0 %v3714
    %4907 = vmatpush.msra.mxu0 %v3710
    %4908 = vmatpush.msra.mxu0 %v3706
    %4909 = vmatmul.f32.gmra.mxu0 %v4592
    %v4910 = vpop.f32.mrf.mxu0
    %v4911 = vadd.f32 %v4891, %v4910
    %4912 = vdwg.mxu0
    %v4913 = vperm.slane %v4671, 0
    %v4914 = vperm.slane %v4751, 0
    %v4915 = vperm.slane %v4831, 0
    %v4916 = vperm.slane %v4911, 0
    %v4917 = vsub.f32 %v2850, %v4913
    %v4918 = vsub.f32 %v3059, %v4914
    %v4919 = vsub.f32 %v3268, %v4915
    %v4920 = vsub.f32 %v3477, %v4916
    %v4921 = vsub.f32 %v2852, %v4913
    %v4922 = vsub.f32 %v3061, %v4914
    %v4923 = vsub.f32 %v3270, %v4915
    %v4924 = vsub.f32 %v3479, %v4916
    %v4925 = vmul.f32 %v4917, %v4917
    %v4926 = vmul.f32 %v4918, %v4918
    %v4927 = vmul.f32 %v4919, %v4919
    %v4928 = vmul.f32 %v4920, %v4920
    %v4929 = vmul.f32 %v4921, %v4921
    %v4930 = vmul.f32 %v4922, %v4922
    %v4931 = vmul.f32 %v4923, %v4923
    %v4932 = vmul.f32 %v4924, %v4924
    %v4933 = vadd.f32 %v4925, %v4929
    %v4934 = vrot.slane %v4933, 4
    %v4935 = vadd.f32 %v4933, %v4934
    %v4936 = vrot.slane %v4935, 2
    %v4937 = vadd.f32 %v4935, %v4936
    %v4938 = vrot.slane %v4937, 1
    %v4939 = vadd.f32 %v4937, %v4938
    %v4940 = vadd.f32 %v4926, %v4930
    %v4941 = vrot.slane %v4940, 4
    %v4942 = vadd.f32 %v4940, %v4941
    %v4943 = vrot.slane %v4942, 2
    %v4944 = vadd.f32 %v4942, %v4943
    %v4945 = vrot.slane %v4944, 1
    %v4946 = vadd.f32 %v4944, %v4945
    %v4947 = vadd.f32 %v4927, %v4931
    %v4948 = vrot.slane %v4947, 4
    %v4949 = vadd.f32 %v4947, %v4948
    %v4950 = vrot.slane %v4949, 2
    %v4951 = vadd.f32 %v4949, %v4950
    %v4952 = vrot.slane %v4951, 1
    %v4953 = vadd.f32 %v4951, %v4952
    %v4954 = vadd.f32 %v4928, %v4932
    %v4955 = vrot.slane %v4954, 4
    %v4956 = vadd.f32 %v4954, %v4955
    %v4957 = vrot.slane %v4956, 2
    %v4958 = vadd.f32 %v4956, %v4957
    %v4959 = vrot.slane %v4958, 1
    %v4960 = vadd.f32 %v4958, %v4959
    %4961 = vmatpush.msra.mxu0 %v3571
    %4962 = vmatpush.msra.mxu0 %v3567
    %4963 = vmatpush.msra.mxu0 %v3563
    %4964 = vmatpush.msra.mxu0 %v3559
    %4965 = vmatpush.msra.mxu0 %v3555
    %4966 = vmatpush.msra.mxu0 %v3551
    %4967 = vmatpush.msra.mxu0 %v3547
    %4968 = vmatpush.msra.mxu0 %v3543
    %4969 = vmatpush.msra.mxu0 %v3539
    %4970 = vmatpush.msra.mxu0 %v3535
    %4971 = vmatpush.msra.mxu0 %v3531
    %4972 = vmatpush.msra.mxu0 %v3527
    %4973 = vmatpush.msra.mxu0 %v3523
    %4974 = vmatpush.msra.mxu0 %v3519
    %4975 = vmatpush.msra.mxu0 %v3515
    %4976 = vmatpush.msra.mxu0 %v3511
    %4977 = vmatmul.f32.gmra.mxu0 %v4939
    %v4978 = vpop.f32.mrf.mxu0
    %v4979 = vadd.f32 1e-05, %v4978
    %4980 = vdwg.mxu0
    %4981 = vmatpush.msra.mxu0 %v3635
    %4982 = vmatpush.msra.mxu0 %v3631
    %4983 = vmatpush.msra.mxu0 %v3627
    %4984 = vmatpush.msra.mxu0 %v3623
    %4985 = vmatpush.msra.mxu0 %v3619
    %4986 = vmatpush.msra.mxu0 %v3615
    %4987 = vmatpush.msra.mxu0 %v3611
    %4988 = vmatpush.msra.mxu0 %v3607
    %4989 = vmatpush.msra.mxu0 %v3603
    %4990 = vmatpush.msra.mxu0 %v3599
    %4991 = vmatpush.msra.mxu0 %v3595
    %4992 = vmatpush.msra.mxu0 %v3591
    %4993 = vmatpush.msra.mxu0 %v3587
    %4994 = vmatpush.msra.mxu0 %v3583
    %4995 = vmatpush.msra.mxu0 %v3579
    %4996 = vmatpush.msra.mxu0 %v3575
    %4997 = vmatmul.f32.gmra.mxu0 %v4946
    %v4998 = vpop.f32.mrf.mxu0
    %v4999 = vadd.f32 %v4979, %v4998
    %5000 = vdwg.mxu0
    %5001 = vmatpush.msra.mxu0 %v3699
    %5002 = vmatpush.msra.mxu0 %v3695
    %5003 = vmatpush.msra.mxu0 %v3691
    %5004 = vmatpush.msra.mxu0 %v3687
    %5005 = vmatpush.msra.mxu0 %v3683
    %5006 = vmatpush.msra.mxu0 %v3679
    %5007 = vmatpush.msra.mxu0 %v3675
    %5008 = vmatpush.msra.mxu0 %v3671
    %5009 = vmatpush.msra.mxu0 %v3667
    %5010 = vmatpush.msra.mxu0 %v3663
    %5011 = vmatpush.msra.mxu0 %v3659
    %5012 = vmatpush.msra.mxu0 %v3655
    %5013 = vmatpush.msra.mxu0 %v3651
    %5014 = vmatpush.msra.mxu0 %v3647
    %5015 = vmatpush.msra.mxu0 %v3643
    %5016 = vmatpush.msra.mxu0 %v3639
    %5017 = vmatmul.f32.gmra.mxu0 %v4953
    %v5018 = vpop.f32.mrf.mxu0
    %v5019 = vadd.f32 %v4999, %v5018
    %5020 = vdwg.mxu0
    %5021 = vmatpush.msra.mxu0 %v3763
    %5022 = vmatpush.msra.mxu0 %v3759
    %5023 = vmatpush.msra.mxu0 %v3755
    %5024 = vmatpush.msra.mxu0 %v3751
    %5025 = vmatpush.msra.mxu0 %v3747
    %5026 = vmatpush.msra.mxu0 %v3743
    %5027 = vmatpush.msra.mxu0 %v3739
    %5028 = vmatpush.msra.mxu0 %v3735
    %5029 = vmatpush.msra.mxu0 %v3731
    %5030 = vmatpush.msra.mxu0 %v3727
    %5031 = vmatpush.msra.mxu0 %v3723
    %5032 = vmatpush.msra.mxu0 %v3719
    %5033 = vmatpush.msra.mxu0 %v3715
    %5034 = vmatpush.msra.mxu0 %v3711
    %5035 = vmatpush.msra.mxu0 %v3707
    %5036 = vmatpush.msra.mxu0 %v3703
    %5037 = vmatmul.f32.gmra.mxu0 %v4960
    %v5038 = vpop.f32.mrf.mxu0
    %v5039 = vadd.f32 %v5019, %v5038
    %5040 = vdwg.mxu0
    %5041 = vmatpush.msra.mxu0 %v3572
    %5042 = vmatpush.msra.mxu0 %v3568
    %5043 = vmatpush.msra.mxu0 %v3564
    %5044 = vmatpush.msra.mxu0 %v3560
    %5045 = vmatpush.msra.mxu0 %v3556
    %5046 = vmatpush.msra.mxu0 %v3552
    %5047 = vmatpush.msra.mxu0 %v3548
    %5048 = vmatpush.msra.mxu0 %v3544
    %5049 = vmatpush.msra.mxu0 %v3540
    %5050 = vmatpush.msra.mxu0 %v3536
    %5051 = vmatpush.msra.mxu0 %v3532
    %5052 = vmatpush.msra.mxu0 %v3528
    %5053 = vmatpush.msra.mxu0 %v3524
    %5054 = vmatpush.msra.mxu0 %v3520
    %5055 = vmatpush.msra.mxu0 %v3516
    %5056 = vmatpush.msra.mxu0 %v3512
    %5057 = vmatmul.f32.gmra.mxu0 %v4939
    %v5058 = vpop.f32.mrf.mxu0
    %v5059 = vadd.f32 1e-05, %v5058
    %5060 = vdwg.mxu0
    %5061 = vmatpush.msra.mxu0 %v3636
    %5062 = vmatpush.msra.mxu0 %v3632
    %5063 = vmatpush.msra.mxu0 %v3628
    %5064 = vmatpush.msra.mxu0 %v3624
    %5065 = vmatpush.msra.mxu0 %v3620
    %5066 = vmatpush.msra.mxu0 %v3616
    %5067 = vmatpush.msra.mxu0 %v3612
    %5068 = vmatpush.msra.mxu0 %v3608
    %5069 = vmatpush.msra.mxu0 %v3604
    %5070 = vmatpush.msra.mxu0 %v3600
    %5071 = vmatpush.msra.mxu0 %v3596
    %5072 = vmatpush.msra.mxu0 %v3592
    %5073 = vmatpush.msra.mxu0 %v3588
    %5074 = vmatpush.msra.mxu0 %v3584
    %5075 = vmatpush.msra.mxu0 %v3580
    %5076 = vmatpush.msra.mxu0 %v3576
    %5077 = vmatmul.f32.gmra.mxu0 %v4946
    %v5078 = vpop.f32.mrf.mxu0
    %v5079 = vadd.f32 %v5059, %v5078
    %5080 = vdwg.mxu0
    %5081 = vmatpush.msra.mxu0 %v3700
    %5082 = vmatpush.msra.mxu0 %v3696
    %5083 = vmatpush.msra.mxu0 %v3692
    %5084 = vmatpush.msra.mxu0 %v3688
    %5085 = vmatpush.msra.mxu0 %v3684
    %5086 = vmatpush.msra.mxu0 %v3680
    %5087 = vmatpush.msra.mxu0 %v3676
    %5088 = vmatpush.msra.mxu0 %v3672
    %5089 = vmatpush.msra.mxu0 %v3668
    %5090 = vmatpush.msra.mxu0 %v3664
    %5091 = vmatpush.msra.mxu0 %v3660
    %5092 = vmatpush.msra.mxu0 %v3656
    %5093 = vmatpush.msra.mxu0 %v3652
    %5094 = vmatpush.msra.mxu0 %v3648
    %5095 = vmatpush.msra.mxu0 %v3644
    %5096 = vmatpush.msra.mxu0 %v3640
    %5097 = vmatmul.f32.gmra.mxu0 %v4953
    %v5098 = vpop.f32.mrf.mxu0
    %v5099 = vadd.f32 %v5079, %v5098
    %5100 = vdwg.mxu0
    %5101 = vmatpush.msra.mxu0 %v3764
    %5102 = vmatpush.msra.mxu0 %v3760
    %5103 = vmatpush.msra.mxu0 %v3756
    %5104 = vmatpush.msra.mxu0 %v3752
    %5105 = vmatpush.msra.mxu0 %v3748
    %5106 = vmatpush.msra.mxu0 %v3744
    %5107 = vmatpush.msra.mxu0 %v3740
    %5108 = vmatpush.msra.mxu0 %v3736
    %5109 = vmatpush.msra.mxu0 %v3732
    %5110 = vmatpush.msra.mxu0 %v3728
    %5111 = vmatpush.msra.mxu0 %v3724
    %5112 = vmatpush.msra.mxu0 %v3720
    %5113 = vmatpush.msra.mxu0 %v3716
    %5114 = vmatpush.msra.mxu0 %v3712
    %5115 = vmatpush.msra.mxu0 %v3708
    %5116 = vmatpush.msra.mxu0 %v3704
    %5117 = vmatmul.f32.gmra.mxu0 %v4960
    %v5118 = vpop.f32.mrf.mxu0
    %v5119 = vadd.f32 %v5099, %v5118
    %5120 = vdwg.mxu0
    %5121 = vmatpush.msra.mxu0 %v3573
    %5122 = vmatpush.msra.mxu0 %v3569
    %5123 = vmatpush.msra.mxu0 %v3565
    %5124 = vmatpush.msra.mxu0 %v3561
    %5125 = vmatpush.msra.mxu0 %v3557
    %5126 = vmatpush.msra.mxu0 %v3553
    %5127 = vmatpush.msra.mxu0 %v3549
    %5128 = vmatpush.msra.mxu0 %v3545
    %5129 = vmatpush.msra.mxu0 %v3541
    %5130 = vmatpush.msra.mxu0 %v3537
    %5131 = vmatpush.msra.mxu0 %v3533
    %5132 = vmatpush.msra.mxu0 %v3529
    %5133 = vmatpush.msra.mxu0 %v3525
    %5134 = vmatpush.msra.mxu0 %v3521
    %5135 = vmatpush.msra.mxu0 %v3517
    %5136 = vmatpush.msra.mxu0 %v3513
    %5137 = vmatmul.f32.gmra.mxu0 %v4939
    %v5138 = vpop.f32.mrf.mxu0
    %v5139 = vadd.f32 1e-05, %v5138
    %5140 = vdwg.mxu0
    %5141 = vmatpush.msra.mxu0 %v3637
    %5142 = vmatpush.msra.mxu0 %v3633
    %5143 = vmatpush.msra.mxu0 %v3629
    %5144 = vmatpush.msra.mxu0 %v3625
    %5145 = vmatpush.msra.mxu0 %v3621
    %5146 = vmatpush.msra.mxu0 %v3617
    %5147 = vmatpush.msra.mxu0 %v3613
    %5148 = vmatpush.msra.mxu0 %v3609
    %5149 = vmatpush.msra.mxu0 %v3605
    %5150 = vmatpush.msra.mxu0 %v3601
    %5151 = vmatpush.msra.mxu0 %v3597
    %5152 = vmatpush.msra.mxu0 %v3593
    %5153 = vmatpush.msra.mxu0 %v3589
    %5154 = vmatpush.msra.mxu0 %v3585
    %5155 = vmatpush.msra.mxu0 %v3581
    %5156 = vmatpush.msra.mxu0 %v3577
    %5157 = vmatmul.f32.gmra.mxu0 %v4946
    %v5158 = vpop.f32.mrf.mxu0
    %v5159 = vadd.f32 %v5139, %v5158
    %5160 = vdwg.mxu0
    %5161 = vmatpush.msra.mxu0 %v3701
    %5162 = vmatpush.msra.mxu0 %v3697
    %5163 = vmatpush.msra.mxu0 %v3693
    %5164 = vmatpush.msra.mxu0 %v3689
    %5165 = vmatpush.msra.mxu0 %v3685
    %5166 = vmatpush.msra.mxu0 %v3681
    %5167 = vmatpush.msra.mxu0 %v3677
    %5168 = vmatpush.msra.mxu0 %v3673
    %5169 = vmatpush.msra.mxu0 %v3669
    %5170 = vmatpush.msra.mxu0 %v3665
    %5171 = vmatpush.msra.mxu0 %v3661
    %5172 = vmatpush.msra.mxu0 %v3657
    %5173 = vmatpush.msra.mxu0 %v3653
    %5174 = vmatpush.msra.mxu0 %v3649
    %5175 = vmatpush.msra.mxu0 %v3645
    %5176 = vmatpush.msra.mxu0 %v3641
    %5177 = vmatmul.f32.gmra.mxu0 %v4953
    %v5178 = vpop.f32.mrf.mxu0
    %v5179 = vadd.f32 %v5159, %v5178
    %5180 = vdwg.mxu0
    %5181 = vmatpush.msra.mxu0 %v3765
    %5182 = vmatpush.msra.mxu0 %v3761
    %5183 = vmatpush.msra.mxu0 %v3757
    %5184 = vmatpush.msra.mxu0 %v3753
    %5185 = vmatpush.msra.mxu0 %v3749
    %5186 = vmatpush.msra.mxu0 %v3745
    %5187 = vmatpush.msra.mxu0 %v3741
    %5188 = vmatpush.msra.mxu0 %v3737
    %5189 = vmatpush.msra.mxu0 %v3733
    %5190 = vmatpush.msra.mxu0 %v3729
    %5191 = vmatpush.msra.mxu0 %v3725
    %5192 = vmatpush.msra.mxu0 %v3721
    %5193 = vmatpush.msra.mxu0 %v3717
    %5194 = vmatpush.msra.mxu0 %v3713
    %5195 = vmatpush.msra.mxu0 %v3709
    %5196 = vmatpush.msra.mxu0 %v3705
    %5197 = vmatmul.f32.gmra.mxu0 %v4960
    %v5198 = vpop.f32.mrf.mxu0
    %v5199 = vadd.f32 %v5179, %v5198
    %5200 = vdwg.mxu0
    %5201 = vmatpush.msra.mxu0 %v3574
    %5202 = vmatpush.msra.mxu0 %v3570
    %5203 = vmatpush.msra.mxu0 %v3566
    %5204 = vmatpush.msra.mxu0 %v3562
    %5205 = vmatpush.msra.mxu0 %v3558
    %5206 = vmatpush.msra.mxu0 %v3554
    %5207 = vmatpush.msra.mxu0 %v3550
    %5208 = vmatpush.msra.mxu0 %v3546
    %5209 = vmatpush.msra.mxu0 %v3542
    %5210 = vmatpush.msra.mxu0 %v3538
    %5211 = vmatpush.msra.mxu0 %v3534
    %5212 = vmatpush.msra.mxu0 %v3530
    %5213 = vmatpush.msra.mxu0 %v3526
    %5214 = vmatpush.msra.mxu0 %v3522
    %5215 = vmatpush.msra.mxu0 %v3518
    %5216 = vmatpush.msra.mxu0 %v3514
    %5217 = vmatmul.f32.gmra.mxu0 %v4939
    %v5218 = vpop.f32.mrf.mxu0
    %v5219 = vadd.f32 1e-05, %v5218
    %5220 = vdwg.mxu0
    %5221 = vmatpush.msra.mxu0 %v3638
    %5222 = vmatpush.msra.mxu0 %v3634
    %5223 = vmatpush.msra.mxu0 %v3630
    %5224 = vmatpush.msra.mxu0 %v3626
    %5225 = vmatpush.msra.mxu0 %v3622
    %5226 = vmatpush.msra.mxu0 %v3618
    %5227 = vmatpush.msra.mxu0 %v3614
    %5228 = vmatpush.msra.mxu0 %v3610
    %5229 = vmatpush.msra.mxu0 %v3606
    %5230 = vmatpush.msra.mxu0 %v3602
    %5231 = vmatpush.msra.mxu0 %v3598
    %5232 = vmatpush.msra.mxu0 %v3594
    %5233 = vmatpush.msra.mxu0 %v3590
    %5234 = vmatpush.msra.mxu0 %v3586
    %5235 = vmatpush.msra.mxu0 %v3582
    %5236 = vmatpush.msra.mxu0 %v3578
    %5237 = vmatmul.f32.gmra.mxu0 %v4946
    %v5238 = vpop.f32.mrf.mxu0
    %v5239 = vadd.f32 %v5219, %v5238
    %5240 = vdwg.mxu0
    %5241 = vmatpush.msra.mxu0 %v3702
    %5242 = vmatpush.msra.mxu0 %v3698
    %5243 = vmatpush.msra.mxu0 %v3694
    %5244 = vmatpush.msra.mxu0 %v3690
    %5245 = vmatpush.msra.mxu0 %v3686
    %5246 = vmatpush.msra.mxu0 %v3682
    %5247 = vmatpush.msra.mxu0 %v3678
    %5248 = vmatpush.msra.mxu0 %v3674
    %5249 = vmatpush.msra.mxu0 %v3670
    %5250 = vmatpush.msra.mxu0 %v3666
    %5251 = vmatpush.msra.mxu0 %v3662
    %5252 = vmatpush.msra.mxu0 %v3658
    %5253 = vmatpush.msra.mxu0 %v3654
    %5254 = vmatpush.msra.mxu0 %v3650
    %5255 = vmatpush.msra.mxu0 %v3646
    %5256 = vmatpush.msra.mxu0 %v3642
    %5257 = vmatmul.f32.gmra.mxu0 %v4953
    %v5258 = vpop.f32.mrf.mxu0
    %v5259 = vadd.f32 %v5239, %v5258
    %5260 = vdwg.mxu0
    %5261 = vmatpush.msra.mxu0 %v3766
    %5262 = vmatpush.msra.mxu0 %v3762
    %5263 = vmatpush.msra.mxu0 %v3758
    %5264 = vmatpush.msra.mxu0 %v3754
    %5265 = vmatpush.msra.mxu0 %v3750
    %5266 = vmatpush.msra.mxu0 %v3746
    %5267 = vmatpush.msra.mxu0 %v3742
    %5268 = vmatpush.msra.mxu0 %v3738
    %5269 = vmatpush.msra.mxu0 %v3734
    %5270 = vmatpush.msra.mxu0 %v3730
    %5271 = vmatpush.msra.mxu0 %v3726
    %5272 = vmatpush.msra.mxu0 %v3722
    %5273 = vmatpush.msra.mxu0 %v3718
    %5274 = vmatpush.msra.mxu0 %v3714
    %5275 = vmatpush.msra.mxu0 %v3710
    %5276 = vmatpush.msra.mxu0 %v3706
    %5277 = vmatmul.f32.gmra.mxu0 %v4960
    %v5278 = vpop.f32.mrf.mxu0
    %v5279 = vadd.f32 %v5259, %v5278
    %5280 = vdwg.mxu0
    %v5281 = vrsqrt.pop %v5039
    %v5282 = vmul.f32 %v5281, %v5039
    %v5283 = vmul.f32 %v5282, %v5281
    %v5284 = vmul.f32 0.5, %v5283
    %v5285 = vsub.f32 1.5, %v5284
    %v5286 = vmul.f32 %v5281, %v5285
    %vm5287 = vweird.f32 %v5039
    %vm5288 = vweird.f32 %v5281
    %vm5289 = vmor %vm5287, %vm5288
    %v5290 = vsel %vm5289, %v5281, %v5286
    %v5291 = vrsqrt.pop %v5119
    %v5292 = vmul.f32 %v5291, %v5119
    %v5293 = vmul.f32 %v5292, %v5291
    %v5294 = vmul.f32 0.5, %v5293
    %v5295 = vsub.f32 1.5, %v5294
    %v5296 = vmul.f32 %v5291, %v5295
    %vm5297 = vweird.f32 %v5119
    %vm5298 = vweird.f32 %v5291
    %vm5299 = vmor %vm5297, %vm5298
    %v5300 = vsel %vm5299, %v5291, %v5296
    %v5301 = vrsqrt.pop %v5199
    %v5302 = vmul.f32 %v5301, %v5199
    %v5303 = vmul.f32 %v5302, %v5301
    %v5304 = vmul.f32 0.5, %v5303
    %v5305 = vsub.f32 1.5, %v5304
    %v5306 = vmul.f32 %v5301, %v5305
    %vm5307 = vweird.f32 %v5199
    %vm5308 = vweird.f32 %v5301
    %vm5309 = vmor %vm5307, %vm5308
    %v5310 = vsel %vm5309, %v5301, %v5306
    %v5311 = vrsqrt.pop %v5279
    %v5312 = vmul.f32 %v5311, %v5279
    %v5313 = vmul.f32 %v5312, %v5311
    %v5314 = vmul.f32 0.5, %v5313
    %v5315 = vsub.f32 1.5, %v5314
    %v5316 = vmul.f32 %v5311, %v5315
    %vm5317 = vweird.f32 %v5279
    %vm5318 = vweird.f32 %v5311
    %vm5319 = vmor %vm5317, %vm5318
    %v5320 = vsel %vm5319, %v5311, %v5316
    %v5321 = vperm.slane %v5290, 0
    %v5322 = vperm.slane %v5300, 0
    %v5323 = vperm.slane %v5310, 0
    %v5324 = vperm.slane %v5320, 0
    %v5325 = vmul.f32 %v4917, %v5321
    %v5326 = vmul.f32 %v4918, %v5322
    %v5327 = vmul.f32 %v4919, %v5323
    %v5328 = vmul.f32 %v4920, %v5324
    %v5329 = vmul.f32 %v4921, %v5321
    %v5330 = vmul.f32 %v4922, %v5322
    %v5331 = vmul.f32 %v4923, %v5323
    %v5332 = vmul.f32 %v4924, %v5324
    %v5333 = vmul.f32 %v5325, %v4508
    %v5334 = vmul.f32 %v5326, %v4509
    %v5335 = vmul.f32 %v5327, %v4510
    %v5336 = vmul.f32 %v5328, %v4511
    %v5337 = vmul.f32 %v5329, %v4508
    %v5338 = vmul.f32 %v5330, %v4509
    %v5339 = vmul.f32 %v5331, %v4510
    %v5340 = vmul.f32 %v5332, %v4511
    %v5341 = vadd.f32 %v5333, %v4525
    %v5342 = vadd.f32 %v5334, %v4526
    %v5343 = vadd.f32 %v5335, %v4527
    %v5344 = vadd.f32 %v5336, %v4528
    %v5345 = vadd.f32 %v5337, %v4525
    %v5346 = vadd.f32 %v5338, %v4526
    %v5347 = vadd.f32 %v5339, %v4527
    %v5348 = vadd.f32 %v5340, %v4528
    %vm5349 = vcmp.ge.f32.partialorder %v5341, 0.0
    %vm5350 = vcmp.ge.f32.partialorder %v5342, 0.0
    %vm5351 = vcmp.ge.f32.partialorder %v5343, 0.0
    %vm5352 = vcmp.ge.f32.partialorder %v5344, 0.0
    %vm5353 = vcmp.ge.f32.partialorder %v5345, 0.0
    %vm5354 = vcmp.ge.f32.partialorder %v5346, 0.0
    %vm5355 = vcmp.ge.f32.partialorder %v5347, 0.0
    %vm5356 = vcmp.ge.f32.partialorder %v5348, 0.0
    %v5357 = vmul.f32 %v5341, 0.2
    %v5358 = vmul.f32 %v5342, 0.2
    %v5359 = vmul.f32 %v5343, 0.2
    %v5360 = vmul.f32 %v5344, 0.2
    %v5361 = vmul.f32 %v5345, 0.2
    %v5362 = vmul.f32 %v5346, 0.2
    %v5363 = vmul.f32 %v5347, 0.2
    %v5364 = vmul.f32 %v5348, 0.2
    %v5365 = vsel %vm5349, %v5341, %v5357
    %v5366 = vsel %vm5350, %v5342, %v5358
    %v5367 = vsel %vm5351, %v5343, %v5359
    %v5368 = vsel %vm5352, %v5344, %v5360
    %v5369 = vsel %vm5353, %v5345, %v5361
    %v5370 = vsel %vm5354, %v5346, %v5362
    %v5371 = vsel %vm5355, %v5347, %v5363
    %v5372 = vsel %vm5356, %v5348, %v5364
    %v5373 = vld [vmem:[#allocation17] sm:$0xff]
    %v5374 = vld [vmem:[#allocation17 + $0x8] sm:$0xff]
    %v5375 = vld [vmem:[#allocation17 + $0x10] sm:$0xff]
    %v5376 = vld [vmem:[#allocation17 + $0x18] sm:$0xff]
    %v5377 = vld [vmem:[#allocation17 + $0x20] sm:$0xff]
    %v5378 = vld [vmem:[#allocation17 + $0x28] sm:$0xff]
    %v5379 = vld [vmem:[#allocation17 + $0x30] sm:$0xff]
    %v5380 = vld [vmem:[#allocation17 + $0x38] sm:$0xff]
    %v5381 = vld [vmem:[#allocation17 + $0x40] sm:$0xff]
    %v5382 = vld [vmem:[#allocation17 + $0x48] sm:$0xff]
    %v5383 = vld [vmem:[#allocation17 + $0x50] sm:$0xff]
    %v5384 = vld [vmem:[#allocation17 + $0x58] sm:$0xff]
    %v5385 = vld [vmem:[#allocation17 + $0x60] sm:$0xff]
    %v5386 = vld [vmem:[#allocation17 + $0x68] sm:$0xff]
    %v5387 = vld [vmem:[#allocation17 + $0x70] sm:$0xff]
    %v5388 = vld [vmem:[#allocation17 + $0x78] sm:$0xff]
    %v5389 = vld [vmem:[#allocation17 + $0x80] sm:$0xff]
    %v5390 = vld [vmem:[#allocation17 + $0x88] sm:$0xff]
    %v5391 = vld [vmem:[#allocation17 + $0x90] sm:$0xff]
    %v5392 = vld [vmem:[#allocation17 + $0x98] sm:$0xff]
    %v5393 = vld [vmem:[#allocation17 + $0xa0] sm:$0xff]
    %v5394 = vld [vmem:[#allocation17 + $0xa8] sm:$0xff]
    %v5395 = vld [vmem:[#allocation17 + $0xb0] sm:$0xff]
    %v5396 = vld [vmem:[#allocation17 + $0xb8] sm:$0xff]
    %v5397 = vld [vmem:[#allocation17 + $0xc0] sm:$0xff]
    %v5398 = vld [vmem:[#allocation17 + $0xc8] sm:$0xff]
    %v5399 = vld [vmem:[#allocation17 + $0xd0] sm:$0xff]
    %v5400 = vld [vmem:[#allocation17 + $0xd8] sm:$0xff]
    %v5401 = vld [vmem:[#allocation17 + $0xe0] sm:$0xff]
    %v5402 = vld [vmem:[#allocation17 + $0xe8] sm:$0xff]
    %v5403 = vld [vmem:[#allocation17 + $0xf0] sm:$0xff]
    %v5404 = vld [vmem:[#allocation17 + $0xf8] sm:$0xff]
    %v5405 = vld [vmem:[#allocation17 + $0x100] sm:$0xff]
    %v5406 = vld [vmem:[#allocation17 + $0x108] sm:$0xff]
    %v5407 = vld [vmem:[#allocation17 + $0x110] sm:$0xff]
    %v5408 = vld [vmem:[#allocation17 + $0x118] sm:$0xff]
    %v5409 = vld [vmem:[#allocation17 + $0x120] sm:$0xff]
    %v5410 = vld [vmem:[#allocation17 + $0x128] sm:$0xff]
    %v5411 = vld [vmem:[#allocation17 + $0x130] sm:$0xff]
    %v5412 = vld [vmem:[#allocation17 + $0x138] sm:$0xff]
    %v5413 = vld [vmem:[#allocation17 + $0x140] sm:$0xff]
    %v5414 = vld [vmem:[#allocation17 + $0x148] sm:$0xff]
    %v5415 = vld [vmem:[#allocation17 + $0x150] sm:$0xff]
    %v5416 = vld [vmem:[#allocation17 + $0x158] sm:$0xff]
    %v5417 = vld [vmem:[#allocation17 + $0x160] sm:$0xff]
    %v5418 = vld [vmem:[#allocation17 + $0x168] sm:$0xff]
    %v5419 = vld [vmem:[#allocation17 + $0x170] sm:$0xff]
    %v5420 = vld [vmem:[#allocation17 + $0x178] sm:$0xff]
    %v5421 = vld [vmem:[#allocation17 + $0x180] sm:$0xff]
    %v5422 = vld [vmem:[#allocation17 + $0x188] sm:$0xff]
    %v5423 = vld [vmem:[#allocation17 + $0x190] sm:$0xff]
    %v5424 = vld [vmem:[#allocation17 + $0x198] sm:$0xff]
    %v5425 = vld [vmem:[#allocation17 + $0x1a0] sm:$0xff]
    %v5426 = vld [vmem:[#allocation17 + $0x1a8] sm:$0xff]
    %v5427 = vld [vmem:[#allocation17 + $0x1b0] sm:$0xff]
    %v5428 = vld [vmem:[#allocation17 + $0x1b8] sm:$0xff]
    %v5429 = vld [vmem:[#allocation17 + $0x1c0] sm:$0xff]
    %v5430 = vld [vmem:[#allocation17 + $0x1c8] sm:$0xff]
    %v5431 = vld [vmem:[#allocation17 + $0x1d0] sm:$0xff]
    %v5432 = vld [vmem:[#allocation17 + $0x1d8] sm:$0xff]
    %v5433 = vld [vmem:[#allocation17 + $0x1e0] sm:$0xff]
    %v5434 = vld [vmem:[#allocation17 + $0x1e8] sm:$0xff]
    %v5435 = vld [vmem:[#allocation17 + $0x1f0] sm:$0xff]
    %v5436 = vld [vmem:[#allocation17 + $0x1f8] sm:$0xff]
    %5437 = vmatpush.msra.mxu0 %v5388
    %5438 = vmatpush.msra.mxu0 %v5387
    %5439 = vmatpush.msra.mxu0 %v5386
    %5440 = vmatpush.msra.mxu0 %v5385
    %5441 = vmatpush.msra.mxu0 %v5384
    %5442 = vmatpush.msra.mxu0 %v5383
    %5443 = vmatpush.msra.mxu0 %v5382
    %5444 = vmatpush.msra.mxu0 %v5381
    %5445 = vmatpush.msra.mxu0 %v5380
    %5446 = vmatpush.msra.mxu0 %v5379
    %5447 = vmatpush.msra.mxu0 %v5378
    %5448 = vmatpush.msra.mxu0 %v5377
    %5449 = vmatpush.msra.mxu0 %v5376
    %5450 = vmatpush.msra.mxu0 %v5375
    %5451 = vmatpush.msra.mxu0 %v5374
    %5452 = vmatpush.msra.mxu0 %v5373
    %5453 = vmatmul.f32.gmra.mxu0 %v4557
    %v5454 = vpop.f32.mrf.mxu0
    %v5455 = vadd.f32 0.0, %v5454
    %5456 = vmatmul.f32.gmra.mxu0 %v4561
    %v5457 = vpop.f32.mrf.mxu0
    %v5458 = vadd.f32 0.0, %v5457
    %5459 = vmatmul.f32.gmra.mxu0 %v5365
    %v5460 = vpop.f32.mrf.mxu0
    %v5461 = vadd.f32 0.0, %v5460
    %5462 = vmatmul.f32.gmra.mxu0 %v5369
    %v5463 = vpop.f32.mrf.mxu0
    %v5464 = vadd.f32 0.0, %v5463
    %5465 = vdwg.mxu0
    %5466 = vmatpush.msra.mxu0 %v5404
    %5467 = vmatpush.msra.mxu0 %v5403
    %5468 = vmatpush.msra.mxu0 %v5402
    %5469 = vmatpush.msra.mxu0 %v5401
    %5470 = vmatpush.msra.mxu0 %v5400
    %5471 = vmatpush.msra.mxu0 %v5399
    %5472 = vmatpush.msra.mxu0 %v5398
    %5473 = vmatpush.msra.mxu0 %v5397
    %5474 = vmatpush.msra.mxu0 %v5396
    %5475 = vmatpush.msra.mxu0 %v5395
    %5476 = vmatpush.msra.mxu0 %v5394
    %5477 = vmatpush.msra.mxu0 %v5393
    %5478 = vmatpush.msra.mxu0 %v5392
    %5479 = vmatpush.msra.mxu0 %v5391
    %5480 = vmatpush.msra.mxu0 %v5390
    %5481 = vmatpush.msra.mxu0 %v5389
    %5482 = vmatmul.f32.gmra.mxu0 %v4558
    %v5483 = vpop.f32.mrf.mxu0
    %v5484 = vadd.f32 %v5455, %v5483
    %5485 = vmatmul.f32.gmra.mxu0 %v4562
    %v5486 = vpop.f32.mrf.mxu0
    %v5487 = vadd.f32 %v5458, %v5486
    %5488 = vmatmul.f32.gmra.mxu0 %v5366
    %v5489 = vpop.f32.mrf.mxu0
    %v5490 = vadd.f32 %v5461, %v5489
    %5491 = vmatmul.f32.gmra.mxu0 %v5370
    %v5492 = vpop.f32.mrf.mxu0
    %v5493 = vadd.f32 %v5464, %v5492
    %5494 = vdwg.mxu0
    %5495 = vmatpush.msra.mxu0 %v5420
    %5496 = vmatpush.msra.mxu0 %v5419
    %5497 = vmatpush.msra.mxu0 %v5418
    %5498 = vmatpush.msra.mxu0 %v5417
    %5499 = vmatpush.msra.mxu0 %v5416
    %5500 = vmatpush.msra.mxu0 %v5415
    %5501 = vmatpush.msra.mxu0 %v5414
    %5502 = vmatpush.msra.mxu0 %v5413
    %5503 = vmatpush.msra.mxu0 %v5412
    %5504 = vmatpush.msra.mxu0 %v5411
    %5505 = vmatpush.msra.mxu0 %v5410
    %5506 = vmatpush.msra.mxu0 %v5409
    %5507 = vmatpush.msra.mxu0 %v5408
    %5508 = vmatpush.msra.mxu0 %v5407
    %5509 = vmatpush.msra.mxu0 %v5406
    %5510 = vmatpush.msra.mxu0 %v5405
    %5511 = vmatmul.f32.gmra.mxu0 %v4559
    %v5512 = vpop.f32.mrf.mxu0
    %v5513 = vadd.f32 %v5484, %v5512
    %5514 = vmatmul.f32.gmra.mxu0 %v4563
    %v5515 = vpop.f32.mrf.mxu0
    %v5516 = vadd.f32 %v5487, %v5515
    %5517 = vmatmul.f32.gmra.mxu0 %v5367
    %v5518 = vpop.f32.mrf.mxu0
    %v5519 = vadd.f32 %v5490, %v5518
    %5520 = vmatmul.f32.gmra.mxu0 %v5371
    %v5521 = vpop.f32.mrf.mxu0
    %v5522 = vadd.f32 %v5493, %v5521
    %5523 = vdwg.mxu0
    %5524 = vmatpush.msra.mxu0 %v5436
    %5525 = vmatpush.msra.mxu0 %v5435
    %5526 = vmatpush.msra.mxu0 %v5434
    %5527 = vmatpush.msra.mxu0 %v5433
    %5528 = vmatpush.msra.mxu0 %v5432
    %5529 = vmatpush.msra.mxu0 %v5431
    %5530 = vmatpush.msra.mxu0 %v5430
    %5531 = vmatpush.msra.mxu0 %v5429
    %5532 = vmatpush.msra.mxu0 %v5428
    %5533 = vmatpush.msra.mxu0 %v5427
    %5534 = vmatpush.msra.mxu0 %v5426
    %5535 = vmatpush.msra.mxu0 %v5425
    %5536 = vmatpush.msra.mxu0 %v5424
    %5537 = vmatpush.msra.mxu0 %v5423
    %5538 = vmatpush.msra.mxu0 %v5422
    %5539 = vmatpush.msra.mxu0 %v5421
    %5540 = vmatmul.f32.gmra.mxu0 %v4560
    %v5541 = vpop.f32.mrf.mxu0
    %v5542 = vadd.f32 %v5513, %v5541
    %5543 = vmatmul.f32.gmra.mxu0 %v4564
    %v5544 = vpop.f32.mrf.mxu0
    %v5545 = vadd.f32 %v5516, %v5544
    %5546 = vmatmul.f32.gmra.mxu0 %v5368
    %v5547 = vpop.f32.mrf.mxu0
    %v5548 = vadd.f32 %v5519, %v5547
    %5549 = vmatmul.f32.gmra.mxu0 %v5372
    %v5550 = vpop.f32.mrf.mxu0
    %v5551 = vadd.f32 %v5522, %v5550
    %5552 = vdwg.mxu0
    %5553 = vst [vmem:[#allocation18] sm:$0xff] %v5542
    %5554 = vst [vmem:[#allocation18 + $0x8] sm:$0xff] %v5545
    %5555 = vst [vmem:[#allocation18 + $0x10] sm:$0xff] %v5548
    %5556 = vst [vmem:[#allocation18 + $0x18] sm:$0xff] %v5551
    // Predicated region
    $region74: #{tpu_custom_call.1} parent=1 // pred_check
      _
    $region75: #{tpu_custom_call.1} parent=1 // pred_check_branch
      %5558 = sbr.rel (0) target = $region77
    $region76: #{tpu_custom_call.1} parent=1 // pred_region
      %5560 = vsyncadd [#allocation5], 0
      %s5561 = sshll.u32 [#allocation18], 4
      %s5562 = int_to_ptr.vmem [resolvable:$true] %s5561
      %s5563 = sshll.u32 %s9, 4
      %s5564 = int_to_ptr.hbm [resolvable:$true] %s5563
      %5569 = dma.vmem_to_hbm [thread:$0]  %s5562, 512, %s5564, [#allocation5], 128, 128, 8
    $region77: #{tpu_custom_call.1} parent=1 // pred_fallthru
      _
    // Predicated region
    $region78: #{tpu_custom_call.1} parent=1 // pred_check
      _
    $region79: #{tpu_custom_call.1} parent=1 // pred_check_branch
      %5571 = sbr.rel (0) target = $region81
    $region80: #{tpu_custom_call.1} parent=1 // pred_region
      %5573 = dma.done [#allocation5], 512
    $region81: #{tpu_custom_call.1} parent=1 // pred_fallthru
      _
    %5574 = vsyncpa [#allocation4], 1
    %5575 = vsyncpa [#allocation7], 1
    %5576 = vsyncpa [#allocation10], 1
    %5577 = vsyncpa [#allocation13], 1
    %5578 = vsyncpa [#allocation16], 1
    %5579 = vsyncpa [#allocation5], 1

</llo_original>
